<compile_context>
chip_gen: v7x
topology: tpu7x:2x2x1
jax: 0.10.0
libtpu: 0.0.40
codegen_flags: <defaults>
</compile_context>

<pallas_src>
import math
import functools

import jax
import jax.numpy as jnp
from jax.experimental import pallas as pl
from jax.experimental.pallas import tpu as pltpu


NEG_INF = -1e9


# ----------------------------- in-kernel helpers -----------------------------

def _layer_norm(x, gamma, beta, eps=1e-5):
    # PyTorch nn.LayerNorm: biased variance over the last dim, f32 math.
    mean = jnp.mean(x, axis=-1, keepdims=True)
    var = jnp.mean(jnp.square(x - mean), axis=-1, keepdims=True)
    return (x - mean) * jax.lax.rsqrt(var + eps) * gamma + beta


def _split_heads(t, n_head, dh):
    # (N, H*dh) -> (H, N, dh).  Pure lane-slice relayout: the Python loop only
    # emits H static slices at trace time (no extra matmul FLOPs, no H-fold
    # broadcast of the activations).
    return jnp.stack([t[:, h * dh:(h + 1) * dh] for h in range(n_head)], axis=0)


def _mha(q_in, k_in, v_in, wq, bq, wk, bk, wv, bv, wo, bo, bias, n_head):
    """Multi-head attention on one batch element's 2-D slabs.

    q_in: (Nq, D) f32; k_in / v_in: (Nk, D) f32.
    wq/wk/wv/wo: (D, D) bf16 (1/sqrt(dh) already folded into wq/bq).
    bq/bk/bv/bo: (1, D) f32.
    bias: (Nq, Nk) additive f32 (0 = keep, -1e9 = masked) or None.
    """
    d = q_in.shape[1]
    dh = d // n_head

    # Full-width 2-D projections: one (N, D) @ (D, D) MXU pass each;
    # activations cast to bf16 once, accumulate in f32.
    q = jnp.dot(q_in.astype(jnp.bfloat16), wq, preferred_element_type=jnp.float32) + bq
    k = jnp.dot(k_in.astype(jnp.bfloat16), wk, preferred_element_type=jnp.float32) + bk
    v = jnp.dot(v_in.astype(jnp.bfloat16), wv, preferred_element_type=jnp.float32) + bv

    qh = _split_heads(q.astype(jnp.bfloat16), n_head, dh)   # (H, Nq, dh)
    kh = _split_heads(k.astype(jnp.bfloat16), n_head, dh)   # (H, Nk, dh)
    vh = _split_heads(v.astype(jnp.bfloat16), n_head, dh)   # (H, Nk, dh)

    # Scores: batched over heads with a leading batch dim (flash-kernel form).
    s = jnp.einsum('hqe,hke->hqk', qh, kh, preferred_element_type=jnp.float32)
    if bias is not None:
        s = s + bias[None]                  # one add, shared by all heads
    s = s - jnp.max(s, axis=-1, keepdims=True)
    p = jnp.exp(s)
    # NOTE: use approx=False if matching an f32 PyTorch reference bit-tightly.
    inv = pl.reciprocal(jnp.sum(p, axis=-1, keepdims=True), approx=True)
    p = p * inv

    # P @ V, batched over heads.
    o = jnp.einsum('hqk,hke->hqe', p.astype(jnp.bfloat16), vh,
                   preferred_element_type=jnp.float32)       # (H, Nq, dh)

    # Concat heads back to (Nq, D) (lane concat, pure relayout) and issue ONE
    # output matmul with contraction K = D.
    o_cat = jnp.concatenate([o[h] for h in range(n_head)], axis=-1)
    return jnp.dot(o_cat.astype(jnp.bfloat16), wo,
                   preferred_element_type=jnp.float32) + bo


# --------------------------------- kernel ------------------------------------

def decoder_layer_kernel(
    x_ref, key_ref, value_ref, mask_ref,
    # masked self-attention + LN
    wq1, bq1, wk1, bk1, wv1, bv1, wo1, bo1, g1, be1,
    # cross attention + LN
    wq2, bq2, wk2, bk2, wv2, bv2, wo2, bo2, g2, be2,
    # feed-forward + LN
    wf1, bf1, wf2, bf2, g3, be3,
    out_ref, *, n_head,
):
    x = x_ref[...]          # (S, D) f32 -- one batch element
    k_in = key_ref[...]     # (Skv, D) f32
    v_in = value_ref[...]   # (Skv, D) f32

    # Additive bias from the user mask ({0,1}; nonzero = keep).  Built in-kernel
    # with a single compare+select -- no dense bias array shipped from HBM.
    self_bias = jnp.where(mask_ref[...] != 0.0, 0.0, NEG_INF).astype(jnp.float32)

    # masked_output = mask_attention(x, x, x, mask)
    attn1 = _mha(x, x, x,
                 wq1[...], bq1[...], wk1[...], bk1[...],
                 wv1[...], bv1[...], wo1[...], bo1[...],
                 self_bias, n_head)
    h1 = _layer_norm(x + attn1, g1[...], be1[...])

    # transformer block: cross attention (no mask within a batch element)
    attn2 = _mha(h1, k_in, v_in,
                 wq2[...], bq2[...], wk2[...], bk2[...],
                 wv2[...], bv2[...], wo2[...], bo2[...],
                 None, n_head)
    h2 = _layer_norm(h1 + attn2, g2[...], be2[...])

    # feed-forward (Linear -> ReLU -> Linear) + residual + LN
    ff = jnp.dot(h2.astype(jnp.bfloat16), wf1[...],
                 preferred_element_type=jnp.float32) + bf1[...]
    ff = jnp.maximum(ff, 0.0)
    ff = jnp.dot(ff.astype(jnp.bfloat16), wf2[...],
                 preferred_element_type=jnp.float32) + bf2[...]
    out_ref[...] = _layer_norm(h2 + ff, g3[...], be3[...])


# ------------------------- weight-load-time param prep ------------------------

def prepare_params(params, n_head, n_dim):
    """Cast MXU weights to bf16, reshape biases/LN params to (1, D), and fold
    1/sqrt(dh) into wq/bq.  Called ONCE at weight-load time (outside the
    per-call jit) so no per-call reformat traffic."""
    dh = n_dim // n_head
    scale = 1.0 / math.sqrt(dh)

    def attn(p):
        return [
            (p["wq"] * scale).astype(jnp.bfloat16),
            (p["bq"] * scale).reshape(1, n_dim).astype(jnp.float32),
            p["wk"].astype(jnp.bfloat16),
            p["bk"].reshape(1, n_dim).astype(jnp.float32),
            p["wv"].astype(jnp.bfloat16),
            p["bv"].reshape(1, n_dim).astype(jnp.float32),
            p["wo"].astype(jnp.bfloat16),
            p["bo"].reshape(1, n_dim).astype(jnp.float32),
        ]

    def ln(p):
        return [p["g"].reshape(1, -1).astype(jnp.float32),
                p["b"].reshape(1, -1).astype(jnp.float32)]

    ffn = params["ffn"]
    return (attn(params["self_attn"]) + ln(params["ln1"])
            + attn(params["cross_attn"]) + ln(params["ln2"])
            + [ffn["w1"].astype(jnp.bfloat16),
               ffn["b1"].reshape(1, -1).astype(jnp.float32),
               ffn["w2"].astype(jnp.bfloat16),
               ffn["b2"].reshape(1, -1).astype(jnp.float32)]
            + ln(params["ln3"]))


# -------------------------------- wrapper ------------------------------------

@functools.partial(jax.jit, static_argnames=("n_head",))
def decoder_layer(x, key_t, value_t, mask, kparams, *, n_head):
    B, S, D = x.shape
    Skv = key_t.shape[1]

    # Grid over batch; each step sees squeezed 2-D slabs.  Activations / mask
    # get per-batch BlockSpecs (pipelined DMA); weights use constant index
    # maps so they are fetched once and stay VMEM-resident across steps.
    act_specs = [
        pl.BlockSpec((None, S, D), lambda b: (b, 0, 0)),     # x
        pl.BlockSpec((None, Skv, D), lambda b: (b, 0, 0)),   # key
        pl.BlockSpec((None, Skv, D), lambda b: (b, 0, 0)),   # value
        pl.BlockSpec((None, S, S), lambda b: (b, 0, 0)),     # mask
    ]
    w_specs = [pl.BlockSpec(tuple(w.shape), lambda b, n=w.ndim: (0,) * n)
               for w in kparams]
    out_spec = pl.BlockSpec((None, S, D), lambda b: (b, 0, 0))

    kernel = functools.partial(decoder_layer_kernel, n_head=n_head)
    # TODO(synk): for large S/Skv add q-row / kv-column grid axes with a
    # flash-style online softmax and set vmem_limit_bytes per TPU generation.
    return pl.pallas_call(
        kernel,
        out_shape=jax.ShapeDtypeStruct((B, S, D), jnp.float32),
        grid=(B,),
        in_specs=act_specs + w_specs,
        out_specs=out_spec,
        compiler_params=pltpu.CompilerParams(
            dimension_semantics=("parallel",)),   # shards batches across TCs (v7x)
    )(x, key_t, value_t, mask, *kparams)


# ----------------------------- parameter init --------------------------------

def init_params(rng, n_dim, n_expansion):
    d_ff = n_dim * n_expansion

    def linear(k, din, dout):
        kw, kb = jax.random.split(k)
        w = jax.random.normal(kw, (din, dout), jnp.float32) * 0.02
        b = jax.random.normal(kb, (dout,), jnp.float32) * 0.02
        return w, b

    def attn_params(ks):
        p = {}
        for name, k in zip(("q", "k", "v", "o"), ks):
            w, b = linear(k, n_dim, n_dim)
            p[f"w{name}"] = w
            p[f"b{name}"] = b
        return p

    def ln_params():
        return {"g": jnp.ones((n_dim,), jnp.float32),
                "b": jnp.zeros((n_dim,), jnp.float32)}

    keys = jax.random.split(rng, 10)
    w1, b1 = linear(keys[8], n_dim, d_ff)
    w2, b2 = linear(keys[9], d_ff, n_dim)
    return {
        "self_attn": attn_params(keys[0:4]),
        "ln1": ln_params(),
        "cross_attn": attn_params(keys[4:8]),
        "ln2": ln_params(),
        "ffn": {"w1": w1, "b1": b1, "w2": w2, "b2": b2},
        "ln3": ln_params(),
    }


# ---------------------------------- main -------------------------------------

if __name__ == "__main__":
    # n_head=2, n_dim=32, seq_length=8, vocab_size unused in forward, n_expansion=4
    B, H, D, S, E = 2, 2, 32, 8, 4

    kx, kk, kv, kp = jax.random.split(jax.random.PRNGKey(0), 4)
    x = jax.random.normal(kx, (B, S, D), jnp.float32)
    key_t = jax.random.normal(kk, (B, S, D), jnp.float32)     # encoder "key"
    value_t = jax.random.normal(kv, (B, S, D), jnp.float32)   # encoder "value"
    # causal mask, 1 = attend, 0 = masked
    mask = jnp.tile(jnp.tril(jnp.ones((S, S), jnp.float32))[None], (B, 1, 1))

    params = init_params(kp, D, E)
    kparams = prepare_params(params, H, D)   # once, at weight-load time

    out = decoder_layer(x, key_t, value_t, mask, kparams, n_head=H)
    out = jax.block_until_ready(out)

    assert out.shape == (B, S, D)
    assert bool(jnp.all(jnp.isfinite(out)))
    print("KERNEL_OK")
</pallas_src>

<mosaic_0001>
module attributes {stable_mosaic.version = 11 : i64} {
  func.func @decoder_layer_kernel(%arg0: i32, %arg1: memref<1x8x32xf32, #tpu.memory_space<vmem>>, %arg2: memref<1x8x32xf32, #tpu.memory_space<vmem>>, %arg3: memref<1x8x32xf32, #tpu.memory_space<vmem>>, %arg4: memref<1x8x8xf32, #tpu.memory_space<vmem>>, %arg5: memref<32x32xbf16, #tpu.memory_space<vmem>>, %arg6: memref<1x32xf32, #tpu.memory_space<vmem>>, %arg7: memref<32x32xbf16, #tpu.memory_space<vmem>>, %arg8: memref<1x32xf32, #tpu.memory_space<vmem>>, %arg9: memref<32x32xbf16, #tpu.memory_space<vmem>>, %arg10: memref<1x32xf32, #tpu.memory_space<vmem>>, %arg11: memref<32x32xbf16, #tpu.memory_space<vmem>>, %arg12: memref<1x32xf32, #tpu.memory_space<vmem>>, %arg13: memref<1x32xf32, #tpu.memory_space<vmem>>, %arg14: memref<1x32xf32, #tpu.memory_space<vmem>>, %arg15: memref<32x32xbf16, #tpu.memory_space<vmem>>, %arg16: memref<1x32xf32, #tpu.memory_space<vmem>>, %arg17: memref<32x32xbf16, #tpu.memory_space<vmem>>, %arg18: memref<1x32xf32, #tpu.memory_space<vmem>>, %arg19: memref<32x32xbf16, #tpu.memory_space<vmem>>, %arg20: memref<1x32xf32, #tpu.memory_space<vmem>>, %arg21: memref<32x32xbf16, #tpu.memory_space<vmem>>, %arg22: memref<1x32xf32, #tpu.memory_space<vmem>>, %arg23: memref<1x32xf32, #tpu.memory_space<vmem>>, %arg24: memref<1x32xf32, #tpu.memory_space<vmem>>, %arg25: memref<32x128xbf16, #tpu.memory_space<vmem>>, %arg26: memref<1x128xf32, #tpu.memory_space<vmem>>, %arg27: memref<128x32xbf16, #tpu.memory_space<vmem>>, %arg28: memref<1x32xf32, #tpu.memory_space<vmem>>, %arg29: memref<1x32xf32, #tpu.memory_space<vmem>>, %arg30: memref<1x32xf32, #tpu.memory_space<vmem>>, %arg31: memref<1x8x32xf32, #tpu.memory_space<vmem>>) attributes {dimension_semantics = [#tpu.dimension_semantics<parallel>], iteration_bounds = array<i64: 2>, scalar_prefetch = 0 : i64, scratch_operands = 0 : i64, tpu.core_type = #tpu.core_type<tc>, window_params = [{transform_indices = @transform_0, window_bounds = array<i64: 1, 8, 32>}, {transform_indices = @transform_1, window_bounds = array<i64: 1, 8, 32>}, {transform_indices = @transform_2, window_bounds = array<i64: 1, 8, 32>}, {transform_indices = @transform_3, window_bounds = array<i64: 1, 8, 8>}, {pipeline_mode = #tpu.pipeline_mode<synchronous>, transform_indices = @transform_4, window_bounds = array<i64: 32, 32>}, {pipeline_mode = #tpu.pipeline_mode<synchronous>, transform_indices = @transform_5, window_bounds = array<i64: 1, 32>}, {pipeline_mode = #tpu.pipeline_mode<synchronous>, transform_indices = @transform_6, window_bounds = array<i64: 32, 32>}, {pipeline_mode = #tpu.pipeline_mode<synchronous>, transform_indices = @transform_7, window_bounds = array<i64: 1, 32>}, {pipeline_mode = #tpu.pipeline_mode<synchronous>, transform_indices = @transform_8, window_bounds = array<i64: 32, 32>}, {pipeline_mode = #tpu.pipeline_mode<synchronous>, transform_indices = @transform_9, window_bounds = array<i64: 1, 32>}, {pipeline_mode = #tpu.pipeline_mode<synchronous>, transform_indices = @transform_10, window_bounds = array<i64: 32, 32>}, {pipeline_mode = #tpu.pipeline_mode<synchronous>, transform_indices = @transform_11, window_bounds = array<i64: 1, 32>}, {pipeline_mode = #tpu.pipeline_mode<synchronous>, transform_indices = @transform_12, window_bounds = array<i64: 1, 32>}, {pipeline_mode = #tpu.pipeline_mode<synchronous>, transform_indices = @transform_13, window_bounds = array<i64: 1, 32>}, {pipeline_mode = #tpu.pipeline_mode<synchronous>, transform_indices = @transform_14, window_bounds = array<i64: 32, 32>}, {pipeline_mode = #tpu.pipeline_mode<synchronous>, transform_indices = @transform_15, window_bounds = array<i64: 1, 32>}, {pipeline_mode = #tpu.pipeline_mode<synchronous>, transform_indices = @transform_16, window_bounds = array<i64: 32, 32>}, {pipeline_mode = #tpu.pipeline_mode<synchronous>, transform_indices = @transform_17, window_bounds = array<i64: 1, 32>}, {pipeline_mode = #tpu.pipeline_mode<synchronous>, transform_indices = @transform_18, window_bounds = array<i64: 32, 32>}, {pipeline_mode = #tpu.pipeline_mode<synchronous>, transform_indices = @transform_19, window_bounds = array<i64: 1, 32>}, {pipeline_mode = #tpu.pipeline_mode<synchronous>, transform_indices = @transform_20, window_bounds = array<i64: 32, 32>}, {pipeline_mode = #tpu.pipeline_mode<synchronous>, transform_indices = @transform_21, window_bounds = array<i64: 1, 32>}, {pipeline_mode = #tpu.pipeline_mode<synchronous>, transform_indices = @transform_22, window_bounds = array<i64: 1, 32>}, {pipeline_mode = #tpu.pipeline_mode<synchronous>, transform_indices = @transform_23, window_bounds = array<i64: 1, 32>}, {pipeline_mode = #tpu.pipeline_mode<synchronous>, transform_indices = @transform_24, window_bounds = array<i64: 32, 128>}, {pipeline_mode = #tpu.pipeline_mode<synchronous>, transform_indices = @transform_25, window_bounds = array<i64: 1, 128>}, {pipeline_mode = #tpu.pipeline_mode<synchronous>, transform_indices = @transform_26, window_bounds = array<i64: 128, 32>}, {pipeline_mode = #tpu.pipeline_mode<synchronous>, transform_indices = @transform_27, window_bounds = array<i64: 1, 32>}, {pipeline_mode = #tpu.pipeline_mode<synchronous>, transform_indices = @transform_28, window_bounds = array<i64: 1, 32>}, {pipeline_mode = #tpu.pipeline_mode<synchronous>, transform_indices = @transform_29, window_bounds = array<i64: 1, 32>}, {transform_indices = @transform_30, window_bounds = array<i64: 1, 8, 32>}]} {
    %c0 = arith.constant 0 : index
    %c0_0 = arith.constant 0 : index
    %c0_1 = arith.constant 0 : index
    %0 = vector.load %arg1[%c0, %c0_0, %c0_1] : memref<1x8x32xf32, #tpu.memory_space<vmem>>, vector<1x8x32xf32>
    %1 = vector.shape_cast %0 : vector<1x8x32xf32> to vector<8x32xf32>
    %c0_2 = arith.constant 0 : index
    %c0_3 = arith.constant 0 : index
    %c0_4 = arith.constant 0 : index
    %2 = vector.load %arg2[%c0_2, %c0_3, %c0_4] : memref<1x8x32xf32, #tpu.memory_space<vmem>>, vector<1x8x32xf32>
    %3 = vector.shape_cast %2 : vector<1x8x32xf32> to vector<8x32xf32>
    %c0_5 = arith.constant 0 : index
    %c0_6 = arith.constant 0 : index
    %c0_7 = arith.constant 0 : index
    %4 = vector.load %arg3[%c0_5, %c0_6, %c0_7] : memref<1x8x32xf32, #tpu.memory_space<vmem>>, vector<1x8x32xf32>
    %5 = vector.shape_cast %4 : vector<1x8x32xf32> to vector<8x32xf32>
    %c0_8 = arith.constant 0 : index
    %c0_9 = arith.constant 0 : index
    %c0_10 = arith.constant 0 : index
    %6 = vector.load %arg4[%c0_8, %c0_9, %c0_10] : memref<1x8x8xf32, #tpu.memory_space<vmem>>, vector<1x8x8xf32>
    %7 = vector.shape_cast %6 : vector<1x8x8xf32> to vector<8x8xf32>
    %cst = arith.constant 0.000000e+00 : f32
    %8 = vector.broadcast %cst : f32 to vector<8x8xf32>
    %9 = arith.cmpf one, %7, %8 : vector<8x8xf32>
    %cst_11 = arith.constant 0.000000e+00 : f32
    %cst_12 = arith.constant -1.000000e+09 : f32
    %10 = vector.broadcast %cst_11 : f32 to vector<8x8xf32>
    %11 = vector.broadcast %cst_12 : f32 to vector<8x8xf32>
    %12 = arith.select %9, %10, %11 : vector<8x8xi1>, vector<8x8xf32>
    %c0_13 = arith.constant 0 : index
    %c0_14 = arith.constant 0 : index
    %13 = vector.load %arg5[%c0_13, %c0_14] : memref<32x32xbf16, #tpu.memory_space<vmem>>, vector<32x32xbf16>
    %c0_15 = arith.constant 0 : index
    %c0_16 = arith.constant 0 : index
    %14 = vector.load %arg6[%c0_15, %c0_16] : memref<1x32xf32, #tpu.memory_space<vmem>>, vector<1x32xf32>
    %c0_17 = arith.constant 0 : index
    %c0_18 = arith.constant 0 : index
    %15 = vector.load %arg7[%c0_17, %c0_18] : memref<32x32xbf16, #tpu.memory_space<vmem>>, vector<32x32xbf16>
    %c0_19 = arith.constant 0 : index
    %c0_20 = arith.constant 0 : index
    %16 = vector.load %arg8[%c0_19, %c0_20] : memref<1x32xf32, #tpu.memory_space<vmem>>, vector<1x32xf32>
    %c0_21 = arith.constant 0 : index
    %c0_22 = arith.constant 0 : index
    %17 = vector.load %arg9[%c0_21, %c0_22] : memref<32x32xbf16, #tpu.memory_space<vmem>>, vector<32x32xbf16>
    %c0_23 = arith.constant 0 : index
    %c0_24 = arith.constant 0 : index
    %18 = vector.load %arg10[%c0_23, %c0_24] : memref<1x32xf32, #tpu.memory_space<vmem>>, vector<1x32xf32>
    %c0_25 = arith.constant 0 : index
    %c0_26 = arith.constant 0 : index
    %19 = vector.load %arg11[%c0_25, %c0_26] : memref<32x32xbf16, #tpu.memory_space<vmem>>, vector<32x32xbf16>
    %c0_27 = arith.constant 0 : index
    %c0_28 = arith.constant 0 : index
    %20 = vector.load %arg12[%c0_27, %c0_28] : memref<1x32xf32, #tpu.memory_space<vmem>>, vector<1x32xf32>
    %21 = arith.truncf %1 : vector<8x32xf32> to vector<8x32xbf16>
    %cst_29 = arith.constant dense<0.000000e+00> : vector<8x32xf32>
    %22 = tpu.matmul %21, %13, %cst_29 {dimension_numbers = #tpu.dot_dimension_numbers<[1], [0], [0], [1], [0, 0, 1, 1], [], []>} : vector<8x32xbf16>, vector<32x32xbf16>, vector<8x32xf32> -> vector<8x32xf32>
    %23 = vector.broadcast %14 : vector<1x32xf32> to vector<8x32xf32>
    %24 = arith.addf %22, %23 : vector<8x32xf32>
    %25 = arith.truncf %1 : vector<8x32xf32> to vector<8x32xbf16>
    %cst_30 = arith.constant dense<0.000000e+00> : vector<8x32xf32>
    %26 = tpu.matmul %25, %15, %cst_30 {dimension_numbers = #tpu.dot_dimension_numbers<[1], [0], [0], [1], [0, 0, 1, 1], [], []>} : vector<8x32xbf16>, vector<32x32xbf16>, vector<8x32xf32> -> vector<8x32xf32>
    %27 = vector.broadcast %16 : vector<1x32xf32> to vector<8x32xf32>
    %28 = arith.addf %26, %27 : vector<8x32xf32>
    %29 = arith.truncf %1 : vector<8x32xf32> to vector<8x32xbf16>
    %cst_31 = arith.constant dense<0.000000e+00> : vector<8x32xf32>
    %30 = tpu.matmul %29, %17, %cst_31 {dimension_numbers = #tpu.dot_dimension_numbers<[1], [0], [0], [1], [0, 0, 1, 1], [], []>} : vector<8x32xbf16>, vector<32x32xbf16>, vector<8x32xf32> -> vector<8x32xf32>
    %31 = vector.broadcast %18 : vector<1x32xf32> to vector<8x32xf32>
    %32 = arith.addf %30, %31 : vector<8x32xf32>
    %33 = arith.truncf %24 : vector<8x32xf32> to vector<8x32xbf16>
    %34 = vector.extract_strided_slice %33 {offsets = [0, 0], sizes = [8, 16], strides = [1, 1]} : vector<8x32xbf16> to vector<8x16xbf16>
    %35 = vector.extract_strided_slice %33 {offsets = [0, 16], sizes = [8, 16], strides = [1, 1]} : vector<8x32xbf16> to vector<8x16xbf16>
    %36 = vector.shape_cast %34 : vector<8x16xbf16> to vector<1x8x16xbf16>
    %37 = vector.shape_cast %35 : vector<8x16xbf16> to vector<1x8x16xbf16>
    %38 = tpu.concatenate %36, %37 in 0 : vector<1x8x16xbf16>, vector<1x8x16xbf16> -> vector<2x8x16xbf16>
    %39 = arith.truncf %28 : vector<8x32xf32> to vector<8x32xbf16>
    %40 = vector.extract_strided_slice %39 {offsets = [0, 0], sizes = [8, 16], strides = [1, 1]} : vector<8x32xbf16> to vector<8x16xbf16>
    %41 = vector.extract_strided_slice %39 {offsets = [0, 16], sizes = [8, 16], strides = [1, 1]} : vector<8x32xbf16> to vector<8x16xbf16>
    %42 = vector.shape_cast %40 : vector<8x16xbf16> to vector<1x8x16xbf16>
    %43 = vector.shape_cast %41 : vector<8x16xbf16> to vector<1x8x16xbf16>
    %44 = tpu.concatenate %42, %43 in 0 : vector<1x8x16xbf16>, vector<1x8x16xbf16> -> vector<2x8x16xbf16>
    %45 = arith.truncf %32 : vector<8x32xf32> to vector<8x32xbf16>
    %46 = vector.extract_strided_slice %45 {offsets = [0, 0], sizes = [8, 16], strides = [1, 1]} : vector<8x32xbf16> to vector<8x16xbf16>
    %47 = vector.extract_strided_slice %45 {offsets = [0, 16], sizes = [8, 16], strides = [1, 1]} : vector<8x32xbf16> to vector<8x16xbf16>
    %48 = vector.shape_cast %46 : vector<8x16xbf16> to vector<1x8x16xbf16>
    %49 = vector.shape_cast %47 : vector<8x16xbf16> to vector<1x8x16xbf16>
    %50 = tpu.concatenate %48, %49 in 0 : vector<1x8x16xbf16>, vector<1x8x16xbf16> -> vector<2x8x16xbf16>
    "tpu.trace_start"() <{level = 10 : i32, message = "hqe,hke->hqk"}> : () -> ()
    %cst_32 = arith.constant dense<0.000000e+00> : vector<2x8x8xf32>
    %51 = tpu.matmul %38, %44, %cst_32 {dimension_numbers = #tpu.dot_dimension_numbers<[2], [2], [1], [1], [0, 0, 0, 1, 1, 1], [0], [0]>} : vector<2x8x16xbf16>, vector<2x8x16xbf16>, vector<2x8x8xf32> -> vector<2x8x8xf32>
    "tpu.trace_stop"() : () -> ()
    %52 = vector.shape_cast %12 : vector<8x8xf32> to vector<1x8x8xf32>
    %53 = vector.broadcast %52 : vector<1x8x8xf32> to vector<2x8x8xf32>
    %54 = arith.addf %51, %53 : vector<2x8x8xf32>
    %cst_33 = arith.constant dense<0xFF800000> : vector<2x8xf32>
    %55 = vector.multi_reduction <maximumf>, %54, %cst_33 [2] : vector<2x8x8xf32> to vector<2x8xf32>
    %56 = vector.shape_cast %55 : vector<2x8xf32> to vector<2x8x1xf32>
    %57 = vector.broadcast %56 : vector<2x8x1xf32> to vector<2x8x8xf32>
    %58 = arith.subf %54, %57 : vector<2x8x8xf32>
    %59 = math.exp %58 : vector<2x8x8xf32>
    %cst_34 = arith.constant dense<0.000000e+00> : vector<2x8xf32>
    %60 = vector.multi_reduction <add>, %59, %cst_34 [2] : vector<2x8x8xf32> to vector<2x8xf32>
    %61 = vector.shape_cast %60 : vector<2x8xf32> to vector<2x8x1xf32>
    %62 = tpu.reciprocal %61 {approx = true} : vector<2x8x1xf32> -> vector<2x8x1xf32>
    %63 = vector.broadcast %62 : vector<2x8x1xf32> to vector<2x8x8xf32>
    %64 = arith.mulf %59, %63 : vector<2x8x8xf32>
    %65 = arith.truncf %64 : vector<2x8x8xf32> to vector<2x8x8xbf16>
    "tpu.trace_start"() <{level = 10 : i32, message = "hqk,hke->hqe"}> : () -> ()
    %cst_35 = arith.constant dense<0.000000e+00> : vector<2x8x16xf32>
    %66 = tpu.matmul %65, %50, %cst_35 {dimension_numbers = #tpu.dot_dimension_numbers<[2], [1], [1], [2], [0, 0, 0, 1, 1, 2], [0], [0]>} : vector<2x8x8xbf16>, vector<2x8x16xbf16>, vector<2x8x16xf32> -> vector<2x8x16xf32>
    "tpu.trace_stop"() : () -> ()
    %67 = vector.extract_strided_slice %66 {offsets = [0, 0, 0], sizes = [1, 8, 16], strides = [1, 1, 1]} : vector<2x8x16xf32> to vector<1x8x16xf32>
    %68 = vector.shape_cast %67 : vector<1x8x16xf32> to vector<8x16xf32>
    %69 = vector.extract_strided_slice %66 {offsets = [1, 0, 0], sizes = [1, 8, 16], strides = [1, 1, 1]} : vector<2x8x16xf32> to vector<1x8x16xf32>
    %70 = vector.shape_cast %69 : vector<1x8x16xf32> to vector<8x16xf32>
    %71 = tpu.concatenate %68, %70 in 1 : vector<8x16xf32>, vector<8x16xf32> -> vector<8x32xf32>
    %72 = arith.truncf %71 : vector<8x32xf32> to vector<8x32xbf16>
    %cst_36 = arith.constant dense<0.000000e+00> : vector<8x32xf32>
    %73 = tpu.matmul %72, %19, %cst_36 {dimension_numbers = #tpu.dot_dimension_numbers<[1], [0], [0], [1], [0, 0, 1, 1], [], []>} : vector<8x32xbf16>, vector<32x32xbf16>, vector<8x32xf32> -> vector<8x32xf32>
    %74 = vector.broadcast %20 : vector<1x32xf32> to vector<8x32xf32>
    %75 = arith.addf %73, %74 : vector<8x32xf32>
    %76 = arith.addf %1, %75 : vector<8x32xf32>
    %c0_37 = arith.constant 0 : index
    %c0_38 = arith.constant 0 : index
    %77 = vector.load %arg13[%c0_37, %c0_38] : memref<1x32xf32, #tpu.memory_space<vmem>>, vector<1x32xf32>
    %c0_39 = arith.constant 0 : index
    %c0_40 = arith.constant 0 : index
    %78 = vector.load %arg14[%c0_39, %c0_40] : memref<1x32xf32, #tpu.memory_space<vmem>>, vector<1x32xf32>
    %cst_41 = arith.constant dense<0.000000e+00> : vector<8xf32>
    %79 = vector.multi_reduction <add>, %76, %cst_41 [1] : vector<8x32xf32> to vector<8xf32>
    %80 = vector.shape_cast %79 : vector<8xf32> to vector<8x1xf32>
    %cst_42 = arith.constant 3.200000e+01 : f32
    %81 = vector.broadcast %cst_42 : f32 to vector<8x1xf32>
    %82 = arith.divf %80, %81 : vector<8x1xf32>
    %83 = vector.broadcast %82 : vector<8x1xf32> to vector<8x32xf32>
    %84 = arith.subf %76, %83 : vector<8x32xf32>
    %85 = arith.mulf %84, %84 : vector<8x32xf32>
    %cst_43 = arith.constant dense<0.000000e+00> : vector<8xf32>
    %86 = vector.multi_reduction <add>, %85, %cst_43 [1] : vector<8x32xf32> to vector<8xf32>
    %87 = vector.shape_cast %86 : vector<8xf32> to vector<8x1xf32>
    %cst_44 = arith.constant 3.200000e+01 : f32
    %88 = vector.broadcast %cst_44 : f32 to vector<8x1xf32>
    %89 = arith.divf %87, %88 : vector<8x1xf32>
    %90 = vector.broadcast %82 : vector<8x1xf32> to vector<8x32xf32>
    %91 = arith.subf %76, %90 : vector<8x32xf32>
    %cst_45 = arith.constant 9.99999974E-6 : f32
    %92 = vector.broadcast %cst_45 : f32 to vector<8x1xf32>
    %93 = arith.addf %89, %92 : vector<8x1xf32>
    %94 = math.rsqrt %93 : vector<8x1xf32>
    %95 = vector.broadcast %94 : vector<8x1xf32> to vector<8x32xf32>
    %96 = arith.mulf %91, %95 : vector<8x32xf32>
    %97 = vector.broadcast %77 : vector<1x32xf32> to vector<8x32xf32>
    %98 = arith.mulf %96, %97 : vector<8x32xf32>
    %99 = vector.broadcast %78 : vector<1x32xf32> to vector<8x32xf32>
    %100 = arith.addf %98, %99 : vector<8x32xf32>
    %c0_46 = arith.constant 0 : index
    %c0_47 = arith.constant 0 : index
    %101 = vector.load %arg15[%c0_46, %c0_47] : memref<32x32xbf16, #tpu.memory_space<vmem>>, vector<32x32xbf16>
    %c0_48 = arith.constant 0 : index
    %c0_49 = arith.constant 0 : index
    %102 = vector.load %arg16[%c0_48, %c0_49] : memref<1x32xf32, #tpu.memory_space<vmem>>, vector<1x32xf32>
    %c0_50 = arith.constant 0 : index
    %c0_51 = arith.constant 0 : index
    %103 = vector.load %arg17[%c0_50, %c0_51] : memref<32x32xbf16, #tpu.memory_space<vmem>>, vector<32x32xbf16>
    %c0_52 = arith.constant 0 : index
    %c0_53 = arith.constant 0 : index
    %104 = vector.load %arg18[%c0_52, %c0_53] : memref<1x32xf32, #tpu.memory_space<vmem>>, vector<1x32xf32>
    %c0_54 = arith.constant 0 : index
    %c0_55 = arith.constant 0 : index
    %105 = vector.load %arg19[%c0_54, %c0_55] : memref<32x32xbf16, #tpu.memory_space<vmem>>, vector<32x32xbf16>
    %c0_56 = arith.constant 0 : index
    %c0_57 = arith.constant 0 : index
    %106 = vector.load %arg20[%c0_56, %c0_57] : memref<1x32xf32, #tpu.memory_space<vmem>>, vector<1x32xf32>
    %c0_58 = arith.constant 0 : index
    %c0_59 = arith.constant 0 : index
    %107 = vector.load %arg21[%c0_58, %c0_59] : memref<32x32xbf16, #tpu.memory_space<vmem>>, vector<32x32xbf16>
    %c0_60 = arith.constant 0 : index
    %c0_61 = arith.constant 0 : index
    %108 = vector.load %arg22[%c0_60, %c0_61] : memref<1x32xf32, #tpu.memory_space<vmem>>, vector<1x32xf32>
    %109 = arith.truncf %100 : vector<8x32xf32> to vector<8x32xbf16>
    %cst_62 = arith.constant dense<0.000000e+00> : vector<8x32xf32>
    %110 = tpu.matmul %109, %101, %cst_62 {dimension_numbers = #tpu.dot_dimension_numbers<[1], [0], [0], [1], [0, 0, 1, 1], [], []>} : vector<8x32xbf16>, vector<32x32xbf16>, vector<8x32xf32> -> vector<8x32xf32>
    %111 = vector.broadcast %102 : vector<1x32xf32> to vector<8x32xf32>
    %112 = arith.addf %110, %111 : vector<8x32xf32>
    %113 = arith.truncf %3 : vector<8x32xf32> to vector<8x32xbf16>
    %cst_63 = arith.constant dense<0.000000e+00> : vector<8x32xf32>
    %114 = tpu.matmul %113, %103, %cst_63 {dimension_numbers = #tpu.dot_dimension_numbers<[1], [0], [0], [1], [0, 0, 1, 1], [], []>} : vector<8x32xbf16>, vector<32x32xbf16>, vector<8x32xf32> -> vector<8x32xf32>
    %115 = vector.broadcast %104 : vector<1x32xf32> to vector<8x32xf32>
    %116 = arith.addf %114, %115 : vector<8x32xf32>
    %117 = arith.truncf %5 : vector<8x32xf32> to vector<8x32xbf16>
    %cst_64 = arith.constant dense<0.000000e+00> : vector<8x32xf32>
    %118 = tpu.matmul %117, %105, %cst_64 {dimension_numbers = #tpu.dot_dimension_numbers<[1], [0], [0], [1], [0, 0, 1, 1], [], []>} : vector<8x32xbf16>, vector<32x32xbf16>, vector<8x32xf32> -> vector<8x32xf32>
    %119 = vector.broadcast %106 : vector<1x32xf32> to vector<8x32xf32>
    %120 = arith.addf %118, %119 : vector<8x32xf32>
    %121 = arith.truncf %112 : vector<8x32xf32> to vector<8x32xbf16>
    %122 = vector.extract_strided_slice %121 {offsets = [0, 0], sizes = [8, 16], strides = [1, 1]} : vector<8x32xbf16> to vector<8x16xbf16>
    %123 = vector.extract_strided_slice %121 {offsets = [0, 16], sizes = [8, 16], strides = [1, 1]} : vector<8x32xbf16> to vector<8x16xbf16>
    %124 = vector.shape_cast %122 : vector<8x16xbf16> to vector<1x8x16xbf16>
    %125 = vector.shape_cast %123 : vector<8x16xbf16> to vector<1x8x16xbf16>
    %126 = tpu.concatenate %124, %125 in 0 : vector<1x8x16xbf16>, vector<1x8x16xbf16> -> vector<2x8x16xbf16>
    %127 = arith.truncf %116 : vector<8x32xf32> to vector<8x32xbf16>
    %128 = vector.extract_strided_slice %127 {offsets = [0, 0], sizes = [8, 16], strides = [1, 1]} : vector<8x32xbf16> to vector<8x16xbf16>
    %129 = vector.extract_strided_slice %127 {offsets = [0, 16], sizes = [8, 16], strides = [1, 1]} : vector<8x32xbf16> to vector<8x16xbf16>
    %130 = vector.shape_cast %128 : vector<8x16xbf16> to vector<1x8x16xbf16>
    %131 = vector.shape_cast %129 : vector<8x16xbf16> to vector<1x8x16xbf16>
    %132 = tpu.concatenate %130, %131 in 0 : vector<1x8x16xbf16>, vector<1x8x16xbf16> -> vector<2x8x16xbf16>
    %133 = arith.truncf %120 : vector<8x32xf32> to vector<8x32xbf16>
    %134 = vector.extract_strided_slice %133 {offsets = [0, 0], sizes = [8, 16], strides = [1, 1]} : vector<8x32xbf16> to vector<8x16xbf16>
    %135 = vector.extract_strided_slice %133 {offsets = [0, 16], sizes = [8, 16], strides = [1, 1]} : vector<8x32xbf16> to vector<8x16xbf16>
    %136 = vector.shape_cast %134 : vector<8x16xbf16> to vector<1x8x16xbf16>
    %137 = vector.shape_cast %135 : vector<8x16xbf16> to vector<1x8x16xbf16>
    %138 = tpu.concatenate %136, %137 in 0 : vector<1x8x16xbf16>, vector<1x8x16xbf16> -> vector<2x8x16xbf16>
    "tpu.trace_start"() <{level = 10 : i32, message = "hqe,hke->hqk"}> : () -> ()
    %cst_65 = arith.constant dense<0.000000e+00> : vector<2x8x8xf32>
    %139 = tpu.matmul %126, %132, %cst_65 {dimension_numbers = #tpu.dot_dimension_numbers<[2], [2], [1], [1], [0, 0, 0, 1, 1, 1], [0], [0]>} : vector<2x8x16xbf16>, vector<2x8x16xbf16>, vector<2x8x8xf32> -> vector<2x8x8xf32>
    "tpu.trace_stop"() : () -> ()
    %cst_66 = arith.constant dense<0xFF800000> : vector<2x8xf32>
    %140 = vector.multi_reduction <maximumf>, %139, %cst_66 [2] : vector<2x8x8xf32> to vector<2x8xf32>
    %141 = vector.shape_cast %140 : vector<2x8xf32> to vector<2x8x1xf32>
    %142 = vector.broadcast %141 : vector<2x8x1xf32> to vector<2x8x8xf32>
    %143 = arith.subf %139, %142 : vector<2x8x8xf32>
    %144 = math.exp %143 : vector<2x8x8xf32>
    %cst_67 = arith.constant dense<0.000000e+00> : vector<2x8xf32>
    %145 = vector.multi_reduction <add>, %144, %cst_67 [2] : vector<2x8x8xf32> to vector<2x8xf32>
    %146 = vector.shape_cast %145 : vector<2x8xf32> to vector<2x8x1xf32>
    %147 = tpu.reciprocal %146 {approx = true} : vector<2x8x1xf32> -> vector<2x8x1xf32>
    %148 = vector.broadcast %147 : vector<2x8x1xf32> to vector<2x8x8xf32>
    %149 = arith.mulf %144, %148 : vector<2x8x8xf32>
    %150 = arith.truncf %149 : vector<2x8x8xf32> to vector<2x8x8xbf16>
    "tpu.trace_start"() <{level = 10 : i32, message = "hqk,hke->hqe"}> : () -> ()
    %cst_68 = arith.constant dense<0.000000e+00> : vector<2x8x16xf32>
    %151 = tpu.matmul %150, %138, %cst_68 {dimension_numbers = #tpu.dot_dimension_numbers<[2], [1], [1], [2], [0, 0, 0, 1, 1, 2], [0], [0]>} : vector<2x8x8xbf16>, vector<2x8x16xbf16>, vector<2x8x16xf32> -> vector<2x8x16xf32>
    "tpu.trace_stop"() : () -> ()
    %152 = vector.extract_strided_slice %151 {offsets = [0, 0, 0], sizes = [1, 8, 16], strides = [1, 1, 1]} : vector<2x8x16xf32> to vector<1x8x16xf32>
    %153 = vector.shape_cast %152 : vector<1x8x16xf32> to vector<8x16xf32>
    %154 = vector.extract_strided_slice %151 {offsets = [1, 0, 0], sizes = [1, 8, 16], strides = [1, 1, 1]} : vector<2x8x16xf32> to vector<1x8x16xf32>
    %155 = vector.shape_cast %154 : vector<1x8x16xf32> to vector<8x16xf32>
    %156 = tpu.concatenate %153, %155 in 1 : vector<8x16xf32>, vector<8x16xf32> -> vector<8x32xf32>
    %157 = arith.truncf %156 : vector<8x32xf32> to vector<8x32xbf16>
    %cst_69 = arith.constant dense<0.000000e+00> : vector<8x32xf32>
    %158 = tpu.matmul %157, %107, %cst_69 {dimension_numbers = #tpu.dot_dimension_numbers<[1], [0], [0], [1], [0, 0, 1, 1], [], []>} : vector<8x32xbf16>, vector<32x32xbf16>, vector<8x32xf32> -> vector<8x32xf32>
    %159 = vector.broadcast %108 : vector<1x32xf32> to vector<8x32xf32>
    %160 = arith.addf %158, %159 : vector<8x32xf32>
    %161 = arith.addf %100, %160 : vector<8x32xf32>
    %c0_70 = arith.constant 0 : index
    %c0_71 = arith.constant 0 : index
    %162 = vector.load %arg23[%c0_70, %c0_71] : memref<1x32xf32, #tpu.memory_space<vmem>>, vector<1x32xf32>
    %c0_72 = arith.constant 0 : index
    %c0_73 = arith.constant 0 : index
    %163 = vector.load %arg24[%c0_72, %c0_73] : memref<1x32xf32, #tpu.memory_space<vmem>>, vector<1x32xf32>
    %cst_74 = arith.constant dense<0.000000e+00> : vector<8xf32>
    %164 = vector.multi_reduction <add>, %161, %cst_74 [1] : vector<8x32xf32> to vector<8xf32>
    %165 = vector.shape_cast %164 : vector<8xf32> to vector<8x1xf32>
    %cst_75 = arith.constant 3.200000e+01 : f32
    %166 = vector.broadcast %cst_75 : f32 to vector<8x1xf32>
    %167 = arith.divf %165, %166 : vector<8x1xf32>
    %168 = vector.broadcast %167 : vector<8x1xf32> to vector<8x32xf32>
    %169 = arith.subf %161, %168 : vector<8x32xf32>
    %170 = arith.mulf %169, %169 : vector<8x32xf32>
    %cst_76 = arith.constant dense<0.000000e+00> : vector<8xf32>
    %171 = vector.multi_reduction <add>, %170, %cst_76 [1] : vector<8x32xf32> to vector<8xf32>
    %172 = vector.shape_cast %171 : vector<8xf32> to vector<8x1xf32>
    %cst_77 = arith.constant 3.200000e+01 : f32
    %173 = vector.broadcast %cst_77 : f32 to vector<8x1xf32>
    %174 = arith.divf %172, %173 : vector<8x1xf32>
    %175 = vector.broadcast %167 : vector<8x1xf32> to vector<8x32xf32>
    %176 = arith.subf %161, %175 : vector<8x32xf32>
    %cst_78 = arith.constant 9.99999974E-6 : f32
    %177 = vector.broadcast %cst_78 : f32 to vector<8x1xf32>
    %178 = arith.addf %174, %177 : vector<8x1xf32>
    %179 = math.rsqrt %178 : vector<8x1xf32>
    %180 = vector.broadcast %179 : vector<8x1xf32> to vector<8x32xf32>
    %181 = arith.mulf %176, %180 : vector<8x32xf32>
    %182 = vector.broadcast %162 : vector<1x32xf32> to vector<8x32xf32>
    %183 = arith.mulf %181, %182 : vector<8x32xf32>
    %184 = vector.broadcast %163 : vector<1x32xf32> to vector<8x32xf32>
    %185 = arith.addf %183, %184 : vector<8x32xf32>
    %186 = arith.truncf %185 : vector<8x32xf32> to vector<8x32xbf16>
    %c0_79 = arith.constant 0 : index
    %c0_80 = arith.constant 0 : index
    %187 = vector.load %arg25[%c0_79, %c0_80] : memref<32x128xbf16, #tpu.memory_space<vmem>>, vector<32x128xbf16>
    %cst_81 = arith.constant dense<0.000000e+00> : vector<8x128xf32>
    %188 = tpu.matmul %186, %187, %cst_81 {dimension_numbers = #tpu.dot_dimension_numbers<[1], [0], [0], [1], [0, 0, 1, 1], [], []>} : vector<8x32xbf16>, vector<32x128xbf16>, vector<8x128xf32> -> vector<8x128xf32>
    %c0_82 = arith.constant 0 : index
    %c0_83 = arith.constant 0 : index
    %189 = vector.load %arg26[%c0_82, %c0_83] : memref<1x128xf32, #tpu.memory_space<vmem>>, vector<1x128xf32>
    %190 = vector.broadcast %189 : vector<1x128xf32> to vector<8x128xf32>
    %191 = arith.addf %188, %190 : vector<8x128xf32>
    %cst_84 = arith.constant 0.000000e+00 : f32
    %192 = vector.broadcast %cst_84 : f32 to vector<8x128xf32>
    %193 = arith.maximumf %191, %192 : vector<8x128xf32>
    %194 = arith.truncf %193 : vector<8x128xf32> to vector<8x128xbf16>
    %c0_85 = arith.constant 0 : index
    %c0_86 = arith.constant 0 : index
    %195 = vector.load %arg27[%c0_85, %c0_86] : memref<128x32xbf16, #tpu.memory_space<vmem>>, vector<128x32xbf16>
    %cst_87 = arith.constant dense<0.000000e+00> : vector<8x32xf32>
    %196 = tpu.matmul %194, %195, %cst_87 {dimension_numbers = #tpu.dot_dimension_numbers<[1], [0], [0], [1], [0, 0, 1, 1], [], []>} : vector<8x128xbf16>, vector<128x32xbf16>, vector<8x32xf32> -> vector<8x32xf32>
    %c0_88 = arith.constant 0 : index
    %c0_89 = arith.constant 0 : index
    %197 = vector.load %arg28[%c0_88, %c0_89] : memref<1x32xf32, #tpu.memory_space<vmem>>, vector<1x32xf32>
    %198 = vector.broadcast %197 : vector<1x32xf32> to vector<8x32xf32>
    %199 = arith.addf %196, %198 : vector<8x32xf32>
    %200 = arith.addf %185, %199 : vector<8x32xf32>
    %c0_90 = arith.constant 0 : index
    %c0_91 = arith.constant 0 : index
    %201 = vector.load %arg29[%c0_90, %c0_91] : memref<1x32xf32, #tpu.memory_space<vmem>>, vector<1x32xf32>
    %c0_92 = arith.constant 0 : index
    %c0_93 = arith.constant 0 : index
    %202 = vector.load %arg30[%c0_92, %c0_93] : memref<1x32xf32, #tpu.memory_space<vmem>>, vector<1x32xf32>
    %cst_94 = arith.constant dense<0.000000e+00> : vector<8xf32>
    %203 = vector.multi_reduction <add>, %200, %cst_94 [1] : vector<8x32xf32> to vector<8xf32>
    %204 = vector.shape_cast %203 : vector<8xf32> to vector<8x1xf32>
    %cst_95 = arith.constant 3.200000e+01 : f32
    %205 = vector.broadcast %cst_95 : f32 to vector<8x1xf32>
    %206 = arith.divf %204, %205 : vector<8x1xf32>
    %207 = vector.broadcast %206 : vector<8x1xf32> to vector<8x32xf32>
    %208 = arith.subf %200, %207 : vector<8x32xf32>
    %209 = arith.mulf %208, %208 : vector<8x32xf32>
    %cst_96 = arith.constant dense<0.000000e+00> : vector<8xf32>
    %210 = vector.multi_reduction <add>, %209, %cst_96 [1] : vector<8x32xf32> to vector<8xf32>
    %211 = vector.shape_cast %210 : vector<8xf32> to vector<8x1xf32>
    %cst_97 = arith.constant 3.200000e+01 : f32
    %212 = vector.broadcast %cst_97 : f32 to vector<8x1xf32>
    %213 = arith.divf %211, %212 : vector<8x1xf32>
    %214 = vector.broadcast %206 : vector<8x1xf32> to vector<8x32xf32>
    %215 = arith.subf %200, %214 : vector<8x32xf32>
    %cst_98 = arith.constant 9.99999974E-6 : f32
    %216 = vector.broadcast %cst_98 : f32 to vector<8x1xf32>
    %217 = arith.addf %213, %216 : vector<8x1xf32>
    %218 = math.rsqrt %217 : vector<8x1xf32>
    %219 = vector.broadcast %218 : vector<8x1xf32> to vector<8x32xf32>
    %220 = arith.mulf %215, %219 : vector<8x32xf32>
    %221 = vector.broadcast %201 : vector<1x32xf32> to vector<8x32xf32>
    %222 = arith.mulf %220, %221 : vector<8x32xf32>
    %223 = vector.broadcast %202 : vector<1x32xf32> to vector<8x32xf32>
    %224 = arith.addf %222, %223 : vector<8x32xf32>
    %c0_99 = arith.constant 0 : index
    %c0_100 = arith.constant 0 : index
    %c0_101 = arith.constant 0 : index
    %225 = vector.load %arg31[%c0_99, %c0_100, %c0_101] : memref<1x8x32xf32, #tpu.memory_space<vmem>>, vector<1x8x32xf32>
    %226 = vector.shape_cast %225 : vector<1x8x32xf32> to vector<8x32xf32>
    %227 = vector.shape_cast %224 : vector<8x32xf32> to vector<1x8x32xf32>
    tpu.vector_store %arg31[%c0_99, %c0_100, %c0_101], %227 {strides = array<i32>} : memref<1x8x32xf32, #tpu.memory_space<vmem>>, vector<1x8x32xf32>,
    return
  }
  func.func @transform_0(%arg0: i32) -> (i32, i32, i32) {
    %c0_i32 = arith.constant 0 : i32
    %c0_i32_0 = arith.constant 0 : i32
    %c0_i32_1 = arith.constant 0 : i32
    return %arg0, %c0_i32, %c0_i32_0 : i32, i32, i32
  }
  func.func @transform_1(%arg0: i32) -> (i32, i32, i32) {
    %c0_i32 = arith.constant 0 : i32
    %c0_i32_0 = arith.constant 0 : i32
    %c0_i32_1 = arith.constant 0 : i32
    return %arg0, %c0_i32, %c0_i32_0 : i32, i32, i32
  }
  func.func @transform_2(%arg0: i32) -> (i32, i32, i32) {
    %c0_i32 = arith.constant 0 : i32
    %c0_i32_0 = arith.constant 0 : i32
    %c0_i32_1 = arith.constant 0 : i32
    return %arg0, %c0_i32, %c0_i32_0 : i32, i32, i32
  }
  func.func @transform_3(%arg0: i32) -> (i32, i32, i32) {
    %c0_i32 = arith.constant 0 : i32
    %c0_i32_0 = arith.constant 0 : i32
    %c0_i32_1 = arith.constant 0 : i32
    return %arg0, %c0_i32, %c0_i32_0 : i32, i32, i32
  }
  func.func @transform_4(%arg0: i32) -> (i32, i32) {
    %c0_i32 = arith.constant 0 : i32
    %c0_i32_0 = arith.constant 0 : i32
    %c0_i32_1 = arith.constant 0 : i32
    return %c0_i32, %c0_i32_0 : i32, i32
  }
  func.func @transform_5(%arg0: i32) -> (i32, i32) {
    %c0_i32 = arith.constant 0 : i32
    %c0_i32_0 = arith.constant 0 : i32
    %c0_i32_1 = arith.constant 0 : i32
    return %c0_i32, %c0_i32_0 : i32, i32
  }
  func.func @transform_6(%arg0: i32) -> (i32, i32) {
    %c0_i32 = arith.constant 0 : i32
    %c0_i32_0 = arith.constant 0 : i32
    %c0_i32_1 = arith.constant 0 : i32
    return %c0_i32, %c0_i32_0 : i32, i32
  }
  func.func @transform_7(%arg0: i32) -> (i32, i32) {
    %c0_i32 = arith.constant 0 : i32
    %c0_i32_0 = arith.constant 0 : i32
    %c0_i32_1 = arith.constant 0 : i32
    return %c0_i32, %c0_i32_0 : i32, i32
  }
  func.func @transform_8(%arg0: i32) -> (i32, i32) {
    %c0_i32 = arith.constant 0 : i32
    %c0_i32_0 = arith.constant 0 : i32
    %c0_i32_1 = arith.constant 0 : i32
    return %c0_i32, %c0_i32_0 : i32, i32
  }
  func.func @transform_9(%arg0: i32) -> (i32, i32) {
    %c0_i32 = arith.constant 0 : i32
    %c0_i32_0 = arith.constant 0 : i32
    %c0_i32_1 = arith.constant 0 : i32
    return %c0_i32, %c0_i32_0 : i32, i32
  }
  func.func @transform_10(%arg0: i32) -> (i32, i32) {
    %c0_i32 = arith.constant 0 : i32
    %c0_i32_0 = arith.constant 0 : i32
    %c0_i32_1 = arith.constant 0 : i32
    return %c0_i32, %c0_i32_0 : i32, i32
  }
  func.func @transform_11(%arg0: i32) -> (i32, i32) {
    %c0_i32 = arith.constant 0 : i32
    %c0_i32_0 = arith.constant 0 : i32
    %c0_i32_1 = arith.constant 0 : i32
    return %c0_i32, %c0_i32_0 : i32, i32
  }
  func.func @transform_12(%arg0: i32) -> (i32, i32) {
    %c0_i32 = arith.constant 0 : i32
    %c0_i32_0 = arith.constant 0 : i32
    %c0_i32_1 = arith.constant 0 : i32
    return %c0_i32, %c0_i32_0 : i32, i32
  }
  func.func @transform_13(%arg0: i32) -> (i32, i32) {
    %c0_i32 = arith.constant 0 : i32
    %c0_i32_0 = arith.constant 0 : i32
    %c0_i32_1 = arith.constant 0 : i32
    return %c0_i32, %c0_i32_0 : i32, i32
  }
  func.func @transform_14(%arg0: i32) -> (i32, i32) {
    %c0_i32 = arith.constant 0 : i32
    %c0_i32_0 = arith.constant 0 : i32
    %c0_i32_1 = arith.constant 0 : i32
    return %c0_i32, %c0_i32_0 : i32, i32
  }
  func.func @transform_15(%arg0: i32) -> (i32, i32) {
    %c0_i32 = arith.constant 0 : i32
    %c0_i32_0 = arith.constant 0 : i32
    %c0_i32_1 = arith.constant 0 : i32
    return %c0_i32, %c0_i32_0 : i32, i32
  }
  func.func @transform_16(%arg0: i32) -> (i32, i32) {
    %c0_i32 = arith.constant 0 : i32
    %c0_i32_0 = arith.constant 0 : i32
    %c0_i32_1 = arith.constant 0 : i32
    return %c0_i32, %c0_i32_0 : i32, i32
  }
  func.func @transform_17(%arg0: i32) -> (i32, i32) {
    %c0_i32 = arith.constant 0 : i32
    %c0_i32_0 = arith.constant 0 : i32
    %c0_i32_1 = arith.constant 0 : i32
    return %c0_i32, %c0_i32_0 : i32, i32
  }
  func.func @transform_18(%arg0: i32) -> (i32, i32) {
    %c0_i32 = arith.constant 0 : i32
    %c0_i32_0 = arith.constant 0 : i32
    %c0_i32_1 = arith.constant 0 : i32
    return %c0_i32, %c0_i32_0 : i32, i32
  }
  func.func @transform_19(%arg0: i32) -> (i32, i32) {
    %c0_i32 = arith.constant 0 : i32
    %c0_i32_0 = arith.constant 0 : i32
    %c0_i32_1 = arith.constant 0 : i32
    return %c0_i32, %c0_i32_0 : i32, i32
  }
  func.func @transform_20(%arg0: i32) -> (i32, i32) {
    %c0_i32 = arith.constant 0 : i32
    %c0_i32_0 = arith.constant 0 : i32
    %c0_i32_1 = arith.constant 0 : i32
    return %c0_i32, %c0_i32_0 : i32, i32
  }
  func.func @transform_21(%arg0: i32) -> (i32, i32) {
    %c0_i32 = arith.constant 0 : i32
    %c0_i32_0 = arith.constant 0 : i32
    %c0_i32_1 = arith.constant 0 : i32
    return %c0_i32, %c0_i32_0 : i32, i32
  }
  func.func @transform_22(%arg0: i32) -> (i32, i32) {
    %c0_i32 = arith.constant 0 : i32
    %c0_i32_0 = arith.constant 0 : i32
    %c0_i32_1 = arith.constant 0 : i32
    return %c0_i32, %c0_i32_0 : i32, i32
  }
  func.func @transform_23(%arg0: i32) -> (i32, i32) {
    %c0_i32 = arith.constant 0 : i32
    %c0_i32_0 = arith.constant 0 : i32
    %c0_i32_1 = arith.constant 0 : i32
    return %c0_i32, %c0_i32_0 : i32, i32
  }
  func.func @transform_24(%arg0: i32) -> (i32, i32) {
    %c0_i32 = arith.constant 0 : i32
    %c0_i32_0 = arith.constant 0 : i32
    %c0_i32_1 = arith.constant 0 : i32
    return %c0_i32, %c0_i32_0 : i32, i32
  }
  func.func @transform_25(%arg0: i32) -> (i32, i32) {
    %c0_i32 = arith.constant 0 : i32
    %c0_i32_0 = arith.constant 0 : i32
    %c0_i32_1 = arith.constant 0 : i32
    return %c0_i32, %c0_i32_0 : i32, i32
  }
  func.func @transform_26(%arg0: i32) -> (i32, i32) {
    %c0_i32 = arith.constant 0 : i32
    %c0_i32_0 = arith.constant 0 : i32
    %c0_i32_1 = arith.constant 0 : i32
    return %c0_i32, %c0_i32_0 : i32, i32
  }
  func.func @transform_27(%arg0: i32) -> (i32, i32) {
    %c0_i32 = arith.constant 0 : i32
    %c0_i32_0 = arith.constant 0 : i32
    %c0_i32_1 = arith.constant 0 : i32
    return %c0_i32, %c0_i32_0 : i32, i32
  }
  func.func @transform_28(%arg0: i32) -> (i32, i32) {
    %c0_i32 = arith.constant 0 : i32
    %c0_i32_0 = arith.constant 0 : i32
    %c0_i32_1 = arith.constant 0 : i32
    return %c0_i32, %c0_i32_0 : i32, i32
  }
  func.func @transform_29(%arg0: i32) -> (i32, i32) {
    %c0_i32 = arith.constant 0 : i32
    %c0_i32_0 = arith.constant 0 : i32
    %c0_i32_1 = arith.constant 0 : i32
    return %c0_i32, %c0_i32_0 : i32, i32
  }
  func.func @transform_30(%arg0: i32) -> (i32, i32, i32) {
    %c0_i32 = arith.constant 0 : i32
    %c0_i32_0 = arith.constant 0 : i32
    %c0_i32_1 = arith.constant 0 : i32
    return %arg0, %c0_i32, %c0_i32_0 : i32, i32, i32
  }
}

</mosaic_0001>

<llo_original>
// kernel: decoder_layer.1
$region0: #{decoder_layer.1}
  #allocation0 [shape = 'u32[]', space=smem, size = 0x4, offset = 0x4, fixed_abs, tag = 'smem constant byte address 0x4 - core index']
  #allocation1 [shape = 'u32[144,128]{1,0:T(1,128)}', space=vmem, size = 0x12000, scoped, tag = 'internal scratch']
  %s0 = inlined_call_operand.smem [shape: u32[31], index: -1, kind: input, shape index: {}]
  %s1 = sld [smem:[%s0]]
  %s2 = scalar_lea.smem %s0, 1
  %s3 = sld [smem:[%s2]]
  %s4 = scalar_lea.smem %s0, 2
  %s5 = sld [smem:[%s4]]
  %s6 = scalar_lea.smem %s0, 3
  %s7 = sld [smem:[%s6]]
  %s8 = scalar_lea.smem %s0, 4
  %s9 = sld [smem:[%s8]]
  %s10 = scalar_lea.smem %s0, 5
  %s11 = sld [smem:[%s10]]
  %s12 = scalar_lea.smem %s0, 6
  %s13 = sld [smem:[%s12]]
  %s14 = scalar_lea.smem %s0, 7
  %s15 = sld [smem:[%s14]]
  %s16 = scalar_lea.smem %s0, 8
  %s17 = sld [smem:[%s16]]
  %s18 = scalar_lea.smem %s0, 9
  %s19 = sld [smem:[%s18]]
  %s20 = scalar_lea.smem %s0, 10
  %s21 = sld [smem:[%s20]]
  %s22 = scalar_lea.smem %s0, 11
  %s23 = sld [smem:[%s22]]
  %s24 = scalar_lea.smem %s0, 12
  %s25 = sld [smem:[%s24]]
  %s26 = scalar_lea.smem %s0, 13
  %s27 = sld [smem:[%s26]]
  %s28 = scalar_lea.smem %s0, 14
  %s29 = sld [smem:[%s28]]
  %s30 = scalar_lea.smem %s0, 15
  %s31 = sld [smem:[%s30]]
  %s32 = scalar_lea.smem %s0, 16
  %s33 = sld [smem:[%s32]]
  %s34 = scalar_lea.smem %s0, 17
  %s35 = sld [smem:[%s34]]
  %s36 = scalar_lea.smem %s0, 18
  %s37 = sld [smem:[%s36]]
  %s38 = scalar_lea.smem %s0, 19
  %s39 = sld [smem:[%s38]]
  %s40 = scalar_lea.smem %s0, 20
  %s41 = sld [smem:[%s40]]
  %s42 = scalar_lea.smem %s0, 21
  %s43 = sld [smem:[%s42]]
  %s44 = scalar_lea.smem %s0, 22
  %s45 = sld [smem:[%s44]]
  %s46 = scalar_lea.smem %s0, 23
  %s47 = sld [smem:[%s46]]
  %s48 = scalar_lea.smem %s0, 24
  %s49 = sld [smem:[%s48]]
  %s50 = scalar_lea.smem %s0, 25
  %s51 = sld [smem:[%s50]]
  %s52 = scalar_lea.smem %s0, 26
  %s53 = sld [smem:[%s52]]
  %s54 = scalar_lea.smem %s0, 27
  %s55 = sld [smem:[%s54]]
  %s56 = scalar_lea.smem %s0, 28
  %s57 = sld [smem:[%s56]]
  %s58 = scalar_lea.smem %s0, 29
  %s59 = sld [smem:[%s58]]
  %s60 = scalar_lea.smem %s0, 30
  %s61 = sld [smem:[%s60]]
  %s62 = sld [smem:[#allocation0]]
  $region201: #{decoder_layer.1} parent=0
    _
  %s64 = ssub.s32 1, %s62
  %s65 = scalar_select 0, %s64, %s62
  $region1: #{decoder_layer.1} parent=0
    #allocation2 [shape = 'u8[512]{0}', space=vmem, size = 0x400, scoped, tag = 'input window, operand 5, single buffered']
    #allocation3 [shape = 's32[2]{0}', space=sflag, size = 0x8, scoped, tag = 'scoped memory for decoder_layer.1']
    #allocation4 [shape = 's32[2]{0}', space=sflag, size = 0x8, scoped, tag = 'scoped memory for decoder_layer.1']
    #allocation5 [shape = 'u8[8192]{0}', space=vmem, size = 0x2000, scoped, tag = 'input window, operand 6, single buffered']
    #allocation6 [shape = 's32[1]{0}', space=sflag, size = 0x4, scoped, tag = 'scoped memory for decoder_layer.1']
    #allocation7 [shape = 'u8[512]{0}', space=vmem, size = 0x400, scoped, tag = 'input window, operand 7, single buffered']
    #allocation8 [shape = 'u8[8192]{0}', space=vmem, size = 0x2000, scoped, tag = 'input window, operand 8, single buffered']
    #allocation9 [shape = 's32[1]{0}', space=sflag, size = 0x4, scoped, tag = 'scoped memory for decoder_layer.1']
    #allocation10 [shape = 'u8[512]{0}', space=vmem, size = 0x400, scoped, tag = 'input window, operand 9, single buffered']
    #allocation11 [shape = 'u8[512]{0}', space=vmem, size = 0x400, scoped, tag = 'input window, operand 11, single buffered']
    #allocation12 [shape = 's32[1]{0}', space=sflag, size = 0x4, scoped, tag = 'scoped memory for decoder_layer.1']
    #allocation13 [shape = 'u8[512]{0}', space=vmem, size = 0x400, scoped, tag = 'input window, operand 12, single buffered']
    #allocation14 [shape = 'u8[512]{0}', space=vmem, size = 0x400, scoped, tag = 'input window, operand 13, single buffered']
    #allocation15 [shape = 's32[1]{0}', space=sflag, size = 0x4, scoped, tag = 'scoped memory for decoder_layer.1']
    #allocation16 [shape = 'u8[512]{0}', space=vmem, size = 0x400, scoped, tag = 'input window, operand 15, single buffered']
    #allocation17 [shape = 'u8[8192]{0}', space=vmem, size = 0x2000, scoped, tag = 'input window, operand 16, single buffered']
    #allocation18 [shape = 's32[1]{0}', space=sflag, size = 0x4, scoped, tag = 'scoped memory for decoder_layer.1']
    #allocation19 [shape = 'u8[512]{0}', space=vmem, size = 0x400, scoped, tag = 'input window, operand 17, single buffered']
    #allocation20 [shape = 'u8[8192]{0}', space=vmem, size = 0x2000, scoped, tag = 'input window, operand 20, single buffered']
    #allocation21 [shape = 's32[1]{0}', space=sflag, size = 0x4, scoped, tag = 'scoped memory for decoder_layer.1']
    #allocation22 [shape = 'u8[8192]{0}', space=vmem, size = 0x2000, scoped, tag = 'output window, operand 0']
    %66 = vsyncpa [#allocation3], 0
    %67 = vsyncpa [#allocation6], 0
    %68 = vsyncpa [#allocation9], 0
    %69 = vsyncpa [#allocation12], 0
    %70 = vsyncpa [#allocation15], 0
    %71 = vsyncpa [#allocation18], 0
    %72 = vsyncpa [#allocation21], 0
    %73 = vsyncpa [#allocation4], 0
    %s74 = scalar_lea.sflag [#allocation4], 1
    %75 = vsyncpa %s74, 0
    loop: start=0, step=1, limit=4
    $region2: #{decoder_layer.1} parent=1 // loop_pre_header
      _
    $region3: #{decoder_layer.1} parent=1 // loop_header
      %s77 = sphi 0, %s81
      %p78 = scmp.ge.s32.totalorder %s77, 4
      %s87 = sphi 0, %s89
      %s90 = sphi 0, %s87
      %s91 = sphi 0, %s90
      %s107 = sphi 0, %s91
      %s113 = sphi 0, %s115
      %s116 = sphi 0, %s113
      %s117 = sphi 0, %s116
      %s133 = sphi 0, %s117
      %s139 = sphi 0, %s141
      %s142 = sphi 0, %s139
      %s143 = sphi 0, %s142
      %s159 = sphi 0, %s143
      %s165 = sphi 0, %s167
      %s168 = sphi 0, %s165
      %s169 = sphi 0, %s168
      %s185 = sphi 0, %s169
      %s189 = sphi 0, %s189
      %s191 = sphi 0, %s189
      %s192 = sphi 0, %s191
      %s206 = sphi 0, %s192
      %s210 = sphi 0, %s210
      %s212 = sphi 0, %s210
      %s213 = sphi 0, %s212
      %s227 = sphi 0, %s213
      %s231 = sphi 0, %s231
      %s233 = sphi 0, %s231
      %s234 = sphi 0, %s233
      %s248 = sphi 0, %s234
      %s252 = sphi 0, %s252
      %s254 = sphi 0, %s252
      %s255 = sphi 0, %s254
      %s269 = sphi 0, %s255
      %s273 = sphi 0, %s273
      %s275 = sphi 0, %s273
      %s276 = sphi 0, %s275
      %s290 = sphi 0, %s276
      %s294 = sphi 0, %s294
      %s296 = sphi 0, %s294
      %s297 = sphi 0, %s296
      %s311 = sphi 0, %s297
      %s315 = sphi 0, %s315
      %s317 = sphi 0, %s315
      %s318 = sphi 0, %s317
      %s332 = sphi 0, %s318
      %s336 = sphi 0, %s336
      %s338 = sphi 0, %s336
      %s339 = sphi 0, %s338
      %s353 = sphi 0, %s339
      %s357 = sphi 0, %s357
      %s359 = sphi 0, %s357
      %s360 = sphi 0, %s359
      %s374 = sphi 0, %s360
      %s378 = sphi 0, %s378
      %s380 = sphi 0, %s378
      %s381 = sphi 0, %s380
      %s395 = sphi 0, %s381
      %s399 = sphi 0, %s399
      %s401 = sphi 0, %s399
      %s402 = sphi 0, %s401
      %s416 = sphi 0, %s402
      %s420 = sphi 0, %s420
      %s422 = sphi 0, %s420
      %s423 = sphi 0, %s422
      %s437 = sphi 0, %s423
      %s441 = sphi 0, %s441
      %s443 = sphi 0, %s441
      %s444 = sphi 0, %s443
      %s458 = sphi 0, %s444
      %s462 = sphi 0, %s462
      %s464 = sphi 0, %s462
      %s465 = sphi 0, %s464
      %s479 = sphi 0, %s465
      %s483 = sphi 0, %s483
      %s485 = sphi 0, %s483
      %s486 = sphi 0, %s485
      %s500 = sphi 0, %s486
      %s504 = sphi 0, %s504
      %s506 = sphi 0, %s504
      %s507 = sphi 0, %s506
      %s521 = sphi 0, %s507
      %s525 = sphi 0, %s525
      %s527 = sphi 0, %s525
      %s528 = sphi 0, %s527
      %s542 = sphi 0, %s528
      %s546 = sphi 0, %s546
      %s548 = sphi 0, %s546
      %s549 = sphi 0, %s548
      %s563 = sphi 0, %s549
      %s567 = sphi 0, %s567
      %s569 = sphi 0, %s567
      %s570 = sphi 0, %s569
      %s584 = sphi 0, %s570
      %s588 = sphi 0, %s588
      %s590 = sphi 0, %s588
      %s591 = sphi 0, %s590
      %s605 = sphi 0, %s591
      %s609 = sphi 0, %s609
      %s611 = sphi 0, %s609
      %s612 = sphi 0, %s611
      %s626 = sphi 0, %s612
      %s630 = sphi 0, %s630
      %s632 = sphi 0, %s630
      %s633 = sphi 0, %s632
      %s647 = sphi 0, %s633
      %s651 = sphi 0, %s651
      %s653 = sphi 0, %s651
      %s654 = sphi 0, %s653
      %s668 = sphi 0, %s654
      %s672 = sphi 0, %s672
      %s674 = sphi 0, %s672
      %s675 = sphi 0, %s674
      %s689 = sphi 0, %s675
      %s693 = sphi 0, %s693
      %s695 = sphi 0, %s693
      %s696 = sphi 0, %s695
      %s710 = sphi 0, %s696
      %s714 = sphi 0, %s714
      %s716 = sphi 0, %s714
      %s717 = sphi 0, %s716
      %s731 = sphi 0, %s717
      %s737 = sphi 0, %s739
      %s740 = sphi 0, %s737
      %s741 = sphi 0, %s740
      %s757 = sphi 0, %s741
    $region4: #{decoder_layer.1} parent=1 // loop_header_branch
      %80 = sbr.rel (%p78) target = $region8
    $region5: #{decoder_layer.1} parent=1 // loop_body
      %s82 = ssub.s32 %s77, 1
      %s83 = ssub.s32 %s77, 2
      %s84 = sadd.s32 %s77, 1
      %s85 = ssub.s32 %s77, %s84
      %p86 = scmp.eq.s32.totalorder %s85, 0
      %s88 = sadd.s32 %s87, 1
      %s89 = scalar_select %p86, %s87, %s88
      %p92 = pneg %p86
      %p93 = scmp.eq.s32.totalorder %s77, 1
      %p94 = por %p92, %p93
      %p95 = scmp.ne.s32.totalorder %s87, %s90
      %p96 = scmp.eq.s32.totalorder %s77, 0
      %p97 = por %p95, %p96
      %p98 = scmp.ne.s32.totalorder %s87, %s90
      %p99 = scmp.eq.s32.totalorder %s82, 1
      %p100 = por %p98, %p99
      %p101 = scmp.ne.s32.totalorder %s90, %s91
      %p102 = scmp.eq.s32.totalorder %s82, 0
      %p103 = por %p101, %p102
      %p104 = scmp.ne.s32.totalorder %s90, %s91
      %p105 = scmp.eq.s32.totalorder %s83, 1
      %p106 = por %p104, %p105
      %p108 = scmp.ne.s32.totalorder %s91, %s107
      %p109 = scmp.eq.s32.totalorder %s83, 0
      %p110 = por %p108, %p109
      %s111 = ssub.s32 %s77, %s84
      %p112 = scmp.eq.s32.totalorder %s111, 0
      %s114 = sadd.s32 %s113, 1
      %s115 = scalar_select %p112, %s113, %s114
      %p118 = pneg %p112
      %p119 = scmp.eq.s32.totalorder %s77, 1
      %p120 = por %p118, %p119
      %p121 = scmp.ne.s32.totalorder %s113, %s116
      %p122 = scmp.eq.s32.totalorder %s77, 0
      %p123 = por %p121, %p122
      %p124 = scmp.ne.s32.totalorder %s113, %s116
      %p125 = scmp.eq.s32.totalorder %s82, 1
      %p126 = por %p124, %p125
      %p127 = scmp.ne.s32.totalorder %s116, %s117
      %p128 = scmp.eq.s32.totalorder %s82, 0
      %p129 = por %p127, %p128
      %p130 = scmp.ne.s32.totalorder %s116, %s117
      %p131 = scmp.eq.s32.totalorder %s83, 1
      %p132 = por %p130, %p131
      %p134 = scmp.ne.s32.totalorder %s117, %s133
      %p135 = scmp.eq.s32.totalorder %s83, 0
      %p136 = por %p134, %p135
      %s137 = ssub.s32 %s77, %s84
      %p138 = scmp.eq.s32.totalorder %s137, 0
      %s140 = sadd.s32 %s139, 1
      %s141 = scalar_select %p138, %s139, %s140
      %p144 = pneg %p138
      %p145 = scmp.eq.s32.totalorder %s77, 1
      %p146 = por %p144, %p145
      %p147 = scmp.ne.s32.totalorder %s139, %s142
      %p148 = scmp.eq.s32.totalorder %s77, 0
      %p149 = por %p147, %p148
      %p150 = scmp.ne.s32.totalorder %s139, %s142
      %p151 = scmp.eq.s32.totalorder %s82, 1
      %p152 = por %p150, %p151
      %p153 = scmp.ne.s32.totalorder %s142, %s143
      %p154 = scmp.eq.s32.totalorder %s82, 0
      %p155 = por %p153, %p154
      %p156 = scmp.ne.s32.totalorder %s142, %s143
      %p157 = scmp.eq.s32.totalorder %s83, 1
      %p158 = por %p156, %p157
      %p160 = scmp.ne.s32.totalorder %s143, %s159
      %p161 = scmp.eq.s32.totalorder %s83, 0
      %p162 = por %p160, %p161
      %s163 = ssub.s32 %s77, %s84
      %p164 = scmp.eq.s32.totalorder %s163, 0
      %s166 = sadd.s32 %s165, 1
      %s167 = scalar_select %p164, %s165, %s166
      %p170 = pneg %p164
      %p171 = scmp.eq.s32.totalorder %s77, 1
      %p172 = por %p170, %p171
      %p173 = scmp.ne.s32.totalorder %s165, %s168
      %p174 = scmp.eq.s32.totalorder %s77, 0
      %p175 = por %p173, %p174
      %p176 = scmp.ne.s32.totalorder %s165, %s168
      %p177 = scmp.eq.s32.totalorder %s82, 1
      %p178 = por %p176, %p177
      %p179 = scmp.ne.s32.totalorder %s168, %s169
      %p180 = scmp.eq.s32.totalorder %s82, 0
      %p181 = por %p179, %p180
      %p182 = scmp.ne.s32.totalorder %s168, %s169
      %p183 = scmp.eq.s32.totalorder %s83, 1
      %p184 = por %p182, %p183
      %p186 = scmp.ne.s32.totalorder %s169, %s185
      %p187 = scmp.eq.s32.totalorder %s83, 0
      %p188 = por %p186, %p187
      %s190 = sadd.s32 %s189, 1
      %p193 = scmp.eq.s32.totalorder %s77, 1
      %p194 = scmp.ne.s32.totalorder %s189, %s191
      %p195 = scmp.eq.s32.totalorder %s77, 0
      %p196 = por %p194, %p195
      %p197 = scmp.ne.s32.totalorder %s189, %s191
      %p198 = scmp.eq.s32.totalorder %s82, 1
      %p199 = por %p197, %p198
      %p200 = scmp.ne.s32.totalorder %s191, %s192
      %p201 = scmp.eq.s32.totalorder %s82, 0
      %p202 = por %p200, %p201
      %p203 = scmp.ne.s32.totalorder %s191, %s192
      %p204 = scmp.eq.s32.totalorder %s83, 1
      %p205 = por %p203, %p204
      %p207 = scmp.ne.s32.totalorder %s192, %s206
      %p208 = scmp.eq.s32.totalorder %s83, 0
      %p209 = por %p207, %p208
      %s211 = sadd.s32 %s210, 1
      %p214 = scmp.eq.s32.totalorder %s77, 1
      %p215 = scmp.ne.s32.totalorder %s210, %s212
      %p216 = scmp.eq.s32.totalorder %s77, 0
      %p217 = por %p215, %p216
      %p218 = scmp.ne.s32.totalorder %s210, %s212
      %p219 = scmp.eq.s32.totalorder %s82, 1
      %p220 = por %p218, %p219
      %p221 = scmp.ne.s32.totalorder %s212, %s213
      %p222 = scmp.eq.s32.totalorder %s82, 0
      %p223 = por %p221, %p222
      %p224 = scmp.ne.s32.totalorder %s212, %s213
      %p225 = scmp.eq.s32.totalorder %s83, 1
      %p226 = por %p224, %p225
      %p228 = scmp.ne.s32.totalorder %s213, %s227
      %p229 = scmp.eq.s32.totalorder %s83, 0
      %p230 = por %p228, %p229
      %s232 = sadd.s32 %s231, 1
      %p235 = scmp.eq.s32.totalorder %s77, 1
      %p236 = scmp.ne.s32.totalorder %s231, %s233
      %p237 = scmp.eq.s32.totalorder %s77, 0
      %p238 = por %p236, %p237
      %p239 = scmp.ne.s32.totalorder %s231, %s233
      %p240 = scmp.eq.s32.totalorder %s82, 1
      %p241 = por %p239, %p240
      %p242 = scmp.ne.s32.totalorder %s233, %s234
      %p243 = scmp.eq.s32.totalorder %s82, 0
      %p244 = por %p242, %p243
      %p245 = scmp.ne.s32.totalorder %s233, %s234
      %p246 = scmp.eq.s32.totalorder %s83, 1
      %p247 = por %p245, %p246
      %p249 = scmp.ne.s32.totalorder %s234, %s248
      %p250 = scmp.eq.s32.totalorder %s83, 0
      %p251 = por %p249, %p250
      %s253 = sadd.s32 %s252, 1
      %p256 = scmp.eq.s32.totalorder %s77, 1
      %p257 = scmp.ne.s32.totalorder %s252, %s254
      %p258 = scmp.eq.s32.totalorder %s77, 0
      %p259 = por %p257, %p258
      %p260 = scmp.ne.s32.totalorder %s252, %s254
      %p261 = scmp.eq.s32.totalorder %s82, 1
      %p262 = por %p260, %p261
      %p263 = scmp.ne.s32.totalorder %s254, %s255
      %p264 = scmp.eq.s32.totalorder %s82, 0
      %p265 = por %p263, %p264
      %p266 = scmp.ne.s32.totalorder %s254, %s255
      %p267 = scmp.eq.s32.totalorder %s83, 1
      %p268 = por %p266, %p267
      %p270 = scmp.ne.s32.totalorder %s255, %s269
      %p271 = scmp.eq.s32.totalorder %s83, 0
      %p272 = por %p270, %p271
      %s274 = sadd.s32 %s273, 1
      %p277 = scmp.eq.s32.totalorder %s77, 1
      %p278 = scmp.ne.s32.totalorder %s273, %s275
      %p279 = scmp.eq.s32.totalorder %s77, 0
      %p280 = por %p278, %p279
      %p281 = scmp.ne.s32.totalorder %s273, %s275
      %p282 = scmp.eq.s32.totalorder %s82, 1
      %p283 = por %p281, %p282
      %p284 = scmp.ne.s32.totalorder %s275, %s276
      %p285 = scmp.eq.s32.totalorder %s82, 0
      %p286 = por %p284, %p285
      %p287 = scmp.ne.s32.totalorder %s275, %s276
      %p288 = scmp.eq.s32.totalorder %s83, 1
      %p289 = por %p287, %p288
      %p291 = scmp.ne.s32.totalorder %s276, %s290
      %p292 = scmp.eq.s32.totalorder %s83, 0
      %p293 = por %p291, %p292
      %s295 = sadd.s32 %s294, 1
      %p298 = scmp.eq.s32.totalorder %s77, 1
      %p299 = scmp.ne.s32.totalorder %s294, %s296
      %p300 = scmp.eq.s32.totalorder %s77, 0
      %p301 = por %p299, %p300
      %p302 = scmp.ne.s32.totalorder %s294, %s296
      %p303 = scmp.eq.s32.totalorder %s82, 1
      %p304 = por %p302, %p303
      %p305 = scmp.ne.s32.totalorder %s296, %s297
      %p306 = scmp.eq.s32.totalorder %s82, 0
      %p307 = por %p305, %p306
      %p308 = scmp.ne.s32.totalorder %s296, %s297
      %p309 = scmp.eq.s32.totalorder %s83, 1
      %p310 = por %p308, %p309
      %p312 = scmp.ne.s32.totalorder %s297, %s311
      %p313 = scmp.eq.s32.totalorder %s83, 0
      %p314 = por %p312, %p313
      %s316 = sadd.s32 %s315, 1
      %p319 = scmp.eq.s32.totalorder %s77, 1
      %p320 = scmp.ne.s32.totalorder %s315, %s317
      %p321 = scmp.eq.s32.totalorder %s77, 0
      %p322 = por %p320, %p321
      %p323 = scmp.ne.s32.totalorder %s315, %s317
      %p324 = scmp.eq.s32.totalorder %s82, 1
      %p325 = por %p323, %p324
      %p326 = scmp.ne.s32.totalorder %s317, %s318
      %p327 = scmp.eq.s32.totalorder %s82, 0
      %p328 = por %p326, %p327
      %p329 = scmp.ne.s32.totalorder %s317, %s318
      %p330 = scmp.eq.s32.totalorder %s83, 1
      %p331 = por %p329, %p330
      %p333 = scmp.ne.s32.totalorder %s318, %s332
      %p334 = scmp.eq.s32.totalorder %s83, 0
      %p335 = por %p333, %p334
      %s337 = sadd.s32 %s336, 1
      %p340 = scmp.eq.s32.totalorder %s77, 1
      %p341 = scmp.ne.s32.totalorder %s336, %s338
      %p342 = scmp.eq.s32.totalorder %s77, 0
      %p343 = por %p341, %p342
      %p344 = scmp.ne.s32.totalorder %s336, %s338
      %p345 = scmp.eq.s32.totalorder %s82, 1
      %p346 = por %p344, %p345
      %p347 = scmp.ne.s32.totalorder %s338, %s339
      %p348 = scmp.eq.s32.totalorder %s82, 0
      %p349 = por %p347, %p348
      %p350 = scmp.ne.s32.totalorder %s338, %s339
      %p351 = scmp.eq.s32.totalorder %s83, 1
      %p352 = por %p350, %p351
      %p354 = scmp.ne.s32.totalorder %s339, %s353
      %p355 = scmp.eq.s32.totalorder %s83, 0
      %p356 = por %p354, %p355
      %s358 = sadd.s32 %s357, 1
      %p361 = scmp.eq.s32.totalorder %s77, 1
      %p362 = scmp.ne.s32.totalorder %s357, %s359
      %p363 = scmp.eq.s32.totalorder %s77, 0
      %p364 = por %p362, %p363
      %p365 = scmp.ne.s32.totalorder %s357, %s359
      %p366 = scmp.eq.s32.totalorder %s82, 1
      %p367 = por %p365, %p366
      %p368 = scmp.ne.s32.totalorder %s359, %s360
      %p369 = scmp.eq.s32.totalorder %s82, 0
      %p370 = por %p368, %p369
      %p371 = scmp.ne.s32.totalorder %s359, %s360
      %p372 = scmp.eq.s32.totalorder %s83, 1
      %p373 = por %p371, %p372
      %p375 = scmp.ne.s32.totalorder %s360, %s374
      %p376 = scmp.eq.s32.totalorder %s83, 0
      %p377 = por %p375, %p376
      %s379 = sadd.s32 %s378, 1
      %p382 = scmp.eq.s32.totalorder %s77, 1
      %p383 = scmp.ne.s32.totalorder %s378, %s380
      %p384 = scmp.eq.s32.totalorder %s77, 0
      %p385 = por %p383, %p384
      %p386 = scmp.ne.s32.totalorder %s378, %s380
      %p387 = scmp.eq.s32.totalorder %s82, 1
      %p388 = por %p386, %p387
      %p389 = scmp.ne.s32.totalorder %s380, %s381
      %p390 = scmp.eq.s32.totalorder %s82, 0
      %p391 = por %p389, %p390
      %p392 = scmp.ne.s32.totalorder %s380, %s381
      %p393 = scmp.eq.s32.totalorder %s83, 1
      %p394 = por %p392, %p393
      %p396 = scmp.ne.s32.totalorder %s381, %s395
      %p397 = scmp.eq.s32.totalorder %s83, 0
      %p398 = por %p396, %p397
      %s400 = sadd.s32 %s399, 1
      %p403 = scmp.eq.s32.totalorder %s77, 1
      %p404 = scmp.ne.s32.totalorder %s399, %s401
      %p405 = scmp.eq.s32.totalorder %s77, 0
      %p406 = por %p404, %p405
      %p407 = scmp.ne.s32.totalorder %s399, %s401
      %p408 = scmp.eq.s32.totalorder %s82, 1
      %p409 = por %p407, %p408
      %p410 = scmp.ne.s32.totalorder %s401, %s402
      %p411 = scmp.eq.s32.totalorder %s82, 0
      %p412 = por %p410, %p411
      %p413 = scmp.ne.s32.totalorder %s401, %s402
      %p414 = scmp.eq.s32.totalorder %s83, 1
      %p415 = por %p413, %p414
      %p417 = scmp.ne.s32.totalorder %s402, %s416
      %p418 = scmp.eq.s32.totalorder %s83, 0
      %p419 = por %p417, %p418
      %s421 = sadd.s32 %s420, 1
      %p424 = scmp.eq.s32.totalorder %s77, 1
      %p425 = scmp.ne.s32.totalorder %s420, %s422
      %p426 = scmp.eq.s32.totalorder %s77, 0
      %p427 = por %p425, %p426
      %p428 = scmp.ne.s32.totalorder %s420, %s422
      %p429 = scmp.eq.s32.totalorder %s82, 1
      %p430 = por %p428, %p429
      %p431 = scmp.ne.s32.totalorder %s422, %s423
      %p432 = scmp.eq.s32.totalorder %s82, 0
      %p433 = por %p431, %p432
      %p434 = scmp.ne.s32.totalorder %s422, %s423
      %p435 = scmp.eq.s32.totalorder %s83, 1
      %p436 = por %p434, %p435
      %p438 = scmp.ne.s32.totalorder %s423, %s437
      %p439 = scmp.eq.s32.totalorder %s83, 0
      %p440 = por %p438, %p439
      %s442 = sadd.s32 %s441, 1
      %p445 = scmp.eq.s32.totalorder %s77, 1
      %p446 = scmp.ne.s32.totalorder %s441, %s443
      %p447 = scmp.eq.s32.totalorder %s77, 0
      %p448 = por %p446, %p447
      %p449 = scmp.ne.s32.totalorder %s441, %s443
      %p450 = scmp.eq.s32.totalorder %s82, 1
      %p451 = por %p449, %p450
      %p452 = scmp.ne.s32.totalorder %s443, %s444
      %p453 = scmp.eq.s32.totalorder %s82, 0
      %p454 = por %p452, %p453
      %p455 = scmp.ne.s32.totalorder %s443, %s444
      %p456 = scmp.eq.s32.totalorder %s83, 1
      %p457 = por %p455, %p456
      %p459 = scmp.ne.s32.totalorder %s444, %s458
      %p460 = scmp.eq.s32.totalorder %s83, 0
      %p461 = por %p459, %p460
      %s463 = sadd.s32 %s462, 1
      %p466 = scmp.eq.s32.totalorder %s77, 1
      %p467 = scmp.ne.s32.totalorder %s462, %s464
      %p468 = scmp.eq.s32.totalorder %s77, 0
      %p469 = por %p467, %p468
      %p470 = scmp.ne.s32.totalorder %s462, %s464
      %p471 = scmp.eq.s32.totalorder %s82, 1
      %p472 = por %p470, %p471
      %p473 = scmp.ne.s32.totalorder %s464, %s465
      %p474 = scmp.eq.s32.totalorder %s82, 0
      %p475 = por %p473, %p474
      %p476 = scmp.ne.s32.totalorder %s464, %s465
      %p477 = scmp.eq.s32.totalorder %s83, 1
      %p478 = por %p476, %p477
      %p480 = scmp.ne.s32.totalorder %s465, %s479
      %p481 = scmp.eq.s32.totalorder %s83, 0
      %p482 = por %p480, %p481
      %s484 = sadd.s32 %s483, 1
      %p487 = scmp.eq.s32.totalorder %s77, 1
      %p488 = scmp.ne.s32.totalorder %s483, %s485
      %p489 = scmp.eq.s32.totalorder %s77, 0
      %p490 = por %p488, %p489
      %p491 = scmp.ne.s32.totalorder %s483, %s485
      %p492 = scmp.eq.s32.totalorder %s82, 1
      %p493 = por %p491, %p492
      %p494 = scmp.ne.s32.totalorder %s485, %s486
      %p495 = scmp.eq.s32.totalorder %s82, 0
      %p496 = por %p494, %p495
      %p497 = scmp.ne.s32.totalorder %s485, %s486
      %p498 = scmp.eq.s32.totalorder %s83, 1
      %p499 = por %p497, %p498
      %p501 = scmp.ne.s32.totalorder %s486, %s500
      %p502 = scmp.eq.s32.totalorder %s83, 0
      %p503 = por %p501, %p502
      %s505 = sadd.s32 %s504, 1
      %p508 = scmp.eq.s32.totalorder %s77, 1
      %p509 = scmp.ne.s32.totalorder %s504, %s506
      %p510 = scmp.eq.s32.totalorder %s77, 0
      %p511 = por %p509, %p510
      %p512 = scmp.ne.s32.totalorder %s504, %s506
      %p513 = scmp.eq.s32.totalorder %s82, 1
      %p514 = por %p512, %p513
      %p515 = scmp.ne.s32.totalorder %s506, %s507
      %p516 = scmp.eq.s32.totalorder %s82, 0
      %p517 = por %p515, %p516
      %p518 = scmp.ne.s32.totalorder %s506, %s507
      %p519 = scmp.eq.s32.totalorder %s83, 1
      %p520 = por %p518, %p519
      %p522 = scmp.ne.s32.totalorder %s507, %s521
      %p523 = scmp.eq.s32.totalorder %s83, 0
      %p524 = por %p522, %p523
      %s526 = sadd.s32 %s525, 1
      %p529 = scmp.eq.s32.totalorder %s77, 1
      %p530 = scmp.ne.s32.totalorder %s525, %s527
      %p531 = scmp.eq.s32.totalorder %s77, 0
      %p532 = por %p530, %p531
      %p533 = scmp.ne.s32.totalorder %s525, %s527
      %p534 = scmp.eq.s32.totalorder %s82, 1
      %p535 = por %p533, %p534
      %p536 = scmp.ne.s32.totalorder %s527, %s528
      %p537 = scmp.eq.s32.totalorder %s82, 0
      %p538 = por %p536, %p537
      %p539 = scmp.ne.s32.totalorder %s527, %s528
      %p540 = scmp.eq.s32.totalorder %s83, 1
      %p541 = por %p539, %p540
      %p543 = scmp.ne.s32.totalorder %s528, %s542
      %p544 = scmp.eq.s32.totalorder %s83, 0
      %p545 = por %p543, %p544
      %s547 = sadd.s32 %s546, 1
      %p550 = scmp.eq.s32.totalorder %s77, 1
      %p551 = scmp.ne.s32.totalorder %s546, %s548
      %p552 = scmp.eq.s32.totalorder %s77, 0
      %p553 = por %p551, %p552
      %p554 = scmp.ne.s32.totalorder %s546, %s548
      %p555 = scmp.eq.s32.totalorder %s82, 1
      %p556 = por %p554, %p555
      %p557 = scmp.ne.s32.totalorder %s548, %s549
      %p558 = scmp.eq.s32.totalorder %s82, 0
      %p559 = por %p557, %p558
      %p560 = scmp.ne.s32.totalorder %s548, %s549
      %p561 = scmp.eq.s32.totalorder %s83, 1
      %p562 = por %p560, %p561
      %p564 = scmp.ne.s32.totalorder %s549, %s563
      %p565 = scmp.eq.s32.totalorder %s83, 0
      %p566 = por %p564, %p565
      %s568 = sadd.s32 %s567, 1
      %p571 = scmp.eq.s32.totalorder %s77, 1
      %p572 = scmp.ne.s32.totalorder %s567, %s569
      %p573 = scmp.eq.s32.totalorder %s77, 0
      %p574 = por %p572, %p573
      %p575 = scmp.ne.s32.totalorder %s567, %s569
      %p576 = scmp.eq.s32.totalorder %s82, 1
      %p577 = por %p575, %p576
      %p578 = scmp.ne.s32.totalorder %s569, %s570
      %p579 = scmp.eq.s32.totalorder %s82, 0
      %p580 = por %p578, %p579
      %p581 = scmp.ne.s32.totalorder %s569, %s570
      %p582 = scmp.eq.s32.totalorder %s83, 1
      %p583 = por %p581, %p582
      %p585 = scmp.ne.s32.totalorder %s570, %s584
      %p586 = scmp.eq.s32.totalorder %s83, 0
      %p587 = por %p585, %p586
      %s589 = sadd.s32 %s588, 1
      %p592 = scmp.eq.s32.totalorder %s77, 1
      %p593 = scmp.ne.s32.totalorder %s588, %s590
      %p594 = scmp.eq.s32.totalorder %s77, 0
      %p595 = por %p593, %p594
      %p596 = scmp.ne.s32.totalorder %s588, %s590
      %p597 = scmp.eq.s32.totalorder %s82, 1
      %p598 = por %p596, %p597
      %p599 = scmp.ne.s32.totalorder %s590, %s591
      %p600 = scmp.eq.s32.totalorder %s82, 0
      %p601 = por %p599, %p600
      %p602 = scmp.ne.s32.totalorder %s590, %s591
      %p603 = scmp.eq.s32.totalorder %s83, 1
      %p604 = por %p602, %p603
      %p606 = scmp.ne.s32.totalorder %s591, %s605
      %p607 = scmp.eq.s32.totalorder %s83, 0
      %p608 = por %p606, %p607
      %s610 = sadd.s32 %s609, 1
      %p613 = scmp.eq.s32.totalorder %s77, 1
      %p614 = scmp.ne.s32.totalorder %s609, %s611
      %p615 = scmp.eq.s32.totalorder %s77, 0
      %p616 = por %p614, %p615
      %p617 = scmp.ne.s32.totalorder %s609, %s611
      %p618 = scmp.eq.s32.totalorder %s82, 1
      %p619 = por %p617, %p618
      %p620 = scmp.ne.s32.totalorder %s611, %s612
      %p621 = scmp.eq.s32.totalorder %s82, 0
      %p622 = por %p620, %p621
      %p623 = scmp.ne.s32.totalorder %s611, %s612
      %p624 = scmp.eq.s32.totalorder %s83, 1
      %p625 = por %p623, %p624
      %p627 = scmp.ne.s32.totalorder %s612, %s626
      %p628 = scmp.eq.s32.totalorder %s83, 0
      %p629 = por %p627, %p628
      %s631 = sadd.s32 %s630, 1
      %p634 = scmp.eq.s32.totalorder %s77, 1
      %p635 = scmp.ne.s32.totalorder %s630, %s632
      %p636 = scmp.eq.s32.totalorder %s77, 0
      %p637 = por %p635, %p636
      %p638 = scmp.ne.s32.totalorder %s630, %s632
      %p639 = scmp.eq.s32.totalorder %s82, 1
      %p640 = por %p638, %p639
      %p641 = scmp.ne.s32.totalorder %s632, %s633
      %p642 = scmp.eq.s32.totalorder %s82, 0
      %p643 = por %p641, %p642
      %p644 = scmp.ne.s32.totalorder %s632, %s633
      %p645 = scmp.eq.s32.totalorder %s83, 1
      %p646 = por %p644, %p645
      %p648 = scmp.ne.s32.totalorder %s633, %s647
      %p649 = scmp.eq.s32.totalorder %s83, 0
      %p650 = por %p648, %p649
      %s652 = sadd.s32 %s651, 1
      %p655 = scmp.eq.s32.totalorder %s77, 1
      %p656 = scmp.ne.s32.totalorder %s651, %s653
      %p657 = scmp.eq.s32.totalorder %s77, 0
      %p658 = por %p656, %p657
      %p659 = scmp.ne.s32.totalorder %s651, %s653
      %p660 = scmp.eq.s32.totalorder %s82, 1
      %p661 = por %p659, %p660
      %p662 = scmp.ne.s32.totalorder %s653, %s654
      %p663 = scmp.eq.s32.totalorder %s82, 0
      %p664 = por %p662, %p663
      %p665 = scmp.ne.s32.totalorder %s653, %s654
      %p666 = scmp.eq.s32.totalorder %s83, 1
      %p667 = por %p665, %p666
      %p669 = scmp.ne.s32.totalorder %s654, %s668
      %p670 = scmp.eq.s32.totalorder %s83, 0
      %p671 = por %p669, %p670
      %s673 = sadd.s32 %s672, 1
      %p676 = scmp.eq.s32.totalorder %s77, 1
      %p677 = scmp.ne.s32.totalorder %s672, %s674
      %p678 = scmp.eq.s32.totalorder %s77, 0
      %p679 = por %p677, %p678
      %p680 = scmp.ne.s32.totalorder %s672, %s674
      %p681 = scmp.eq.s32.totalorder %s82, 1
      %p682 = por %p680, %p681
      %p683 = scmp.ne.s32.totalorder %s674, %s675
      %p684 = scmp.eq.s32.totalorder %s82, 0
      %p685 = por %p683, %p684
      %p686 = scmp.ne.s32.totalorder %s674, %s675
      %p687 = scmp.eq.s32.totalorder %s83, 1
      %p688 = por %p686, %p687
      %p690 = scmp.ne.s32.totalorder %s675, %s689
      %p691 = scmp.eq.s32.totalorder %s83, 0
      %p692 = por %p690, %p691
      %s694 = sadd.s32 %s693, 1
      %p697 = scmp.eq.s32.totalorder %s77, 1
      %p698 = scmp.ne.s32.totalorder %s693, %s695
      %p699 = scmp.eq.s32.totalorder %s77, 0
      %p700 = por %p698, %p699
      %p701 = scmp.ne.s32.totalorder %s693, %s695
      %p702 = scmp.eq.s32.totalorder %s82, 1
      %p703 = por %p701, %p702
      %p704 = scmp.ne.s32.totalorder %s695, %s696
      %p705 = scmp.eq.s32.totalorder %s82, 0
      %p706 = por %p704, %p705
      %p707 = scmp.ne.s32.totalorder %s695, %s696
      %p708 = scmp.eq.s32.totalorder %s83, 1
      %p709 = por %p707, %p708
      %p711 = scmp.ne.s32.totalorder %s696, %s710
      %p712 = scmp.eq.s32.totalorder %s83, 0
      %p713 = por %p711, %p712
      %s715 = sadd.s32 %s714, 1
      %p718 = scmp.eq.s32.totalorder %s77, 1
      %p719 = scmp.ne.s32.totalorder %s714, %s716
      %p720 = scmp.eq.s32.totalorder %s77, 0
      %p721 = por %p719, %p720
      %p722 = scmp.ne.s32.totalorder %s714, %s716
      %p723 = scmp.eq.s32.totalorder %s82, 1
      %p724 = por %p722, %p723
      %p725 = scmp.ne.s32.totalorder %s716, %s717
      %p726 = scmp.eq.s32.totalorder %s82, 0
      %p727 = por %p725, %p726
      %p728 = scmp.ne.s32.totalorder %s716, %s717
      %p729 = scmp.eq.s32.totalorder %s83, 1
      %p730 = por %p728, %p729
      %p732 = scmp.ne.s32.totalorder %s717, %s731
      %p733 = scmp.eq.s32.totalorder %s83, 0
      %p734 = por %p732, %p733
      %s735 = ssub.s32 %s77, %s84
      %p736 = scmp.eq.s32.totalorder %s735, 0
      %s738 = sadd.s32 %s737, 1
      %s739 = scalar_select %p736, %s737, %s738
      %p742 = pneg %p736
      %p743 = scmp.eq.s32.totalorder %s77, 1
      %p744 = por %p742, %p743
      %p745 = scmp.ne.s32.totalorder %s737, %s740
      %p746 = scmp.eq.s32.totalorder %s77, 0
      %p747 = por %p745, %p746
      %p748 = scmp.ne.s32.totalorder %s737, %s740
      %p749 = scmp.eq.s32.totalorder %s82, 1
      %p750 = por %p748, %p749
      %p751 = scmp.ne.s32.totalorder %s740, %s741
      %p752 = scmp.eq.s32.totalorder %s82, 0
      %p753 = por %p751, %p752
      %p754 = scmp.ne.s32.totalorder %s740, %s741
      %p755 = scmp.eq.s32.totalorder %s83, 1
      %p756 = por %p754, %p755
      %p758 = scmp.ne.s32.totalorder %s741, %s757
      %p759 = scmp.eq.s32.totalorder %s83, 0
      %p760 = por %p758, %p759
      %p761 = scmp.le.s32.totalorder 1, %s77
      %p762 = scmp.lt.s32.totalorder %s77, 3
      %p763 = pnand %p761, %p762
      %p764 = pneg %p763
      // Predicated region
      $region9: #{decoder_layer.1} parent=5 // pred_check
        _
      $region10: #{decoder_layer.1} parent=5 // pred_check_branch
        %766 = sbr.rel (%p763) target = $region12
      $region11: #{decoder_layer.1} parent=5 // pred_region
        %s767 = ssub.s32 %s77, 1
        // Predicated region
        $region13: #{decoder_layer.1} parent=11 // pred_check
          %p768 = pneg %p202
        $region14: #{decoder_layer.1} parent=11 // pred_check_branch
          %770 = sbr.rel (%p768) target = $region16
        $region15: #{decoder_layer.1} parent=11 // pred_region
          _
        $region16: #{decoder_layer.1} parent=11 // pred_fallthru
          _
        // Predicated region
        $region17: #{decoder_layer.1} parent=11 // pred_check
          %p771 = pneg %p223
        $region18: #{decoder_layer.1} parent=11 // pred_check_branch
          %773 = sbr.rel (%p771) target = $region20
        $region19: #{decoder_layer.1} parent=11 // pred_region
          %s775 = ssub.s32 16, 16
          %776 = vsyncadd [#allocation3], %s775
          %s778 = sshll.u32 [#allocation2], 4
          %s779 = int_to_ptr.vmem [resolvable:$true] %s778
          %781 = dma.hbm_to_vmem [thread:$0]  %s11, 16, %s779, [#allocation3]
        $region20: #{decoder_layer.1} parent=11 // pred_fallthru
          _
        // Predicated region
        $region21: #{decoder_layer.1} parent=11 // pred_check
          %p782 = pneg %p244
        $region22: #{decoder_layer.1} parent=11 // pred_check_branch
          %784 = sbr.rel (%p782) target = $region24
        $region23: #{decoder_layer.1} parent=11 // pred_region
          %s786 = ssub.s32 256, 256
          %787 = vsyncadd [#allocation6], %s786
          %s788 = sshll.u32 [#allocation5], 4
          %s789 = int_to_ptr.vmem [resolvable:$true] %s788
          %794 = dma.hbm_to_vmem [thread:$0]  %s13, 256, %s789, [#allocation6], 64, 64, 4
        $region24: #{decoder_layer.1} parent=11 // pred_fallthru
          _
        // Predicated region
        $region25: #{decoder_layer.1} parent=11 // pred_check
          %p795 = pneg %p265
        $region26: #{decoder_layer.1} parent=11 // pred_check_branch
          %797 = sbr.rel (%p795) target = $region28
        $region27: #{decoder_layer.1} parent=11 // pred_region
          %s799 = ssub.s32 16, 16
          %800 = vsyncadd [#allocation6], %s799
          %s802 = sshll.u32 [#allocation7], 4
          %s803 = int_to_ptr.vmem [resolvable:$true] %s802
          %805 = dma.hbm_to_vmem [thread:$0]  %s15, 16, %s803, [#allocation6]
        $region28: #{decoder_layer.1} parent=11 // pred_fallthru
          _
        // Predicated region
        $region29: #{decoder_layer.1} parent=11 // pred_check
          %p806 = pneg %p286
        $region30: #{decoder_layer.1} parent=11 // pred_check_branch
          %808 = sbr.rel (%p806) target = $region32
        $region31: #{decoder_layer.1} parent=11 // pred_region
          %s810 = ssub.s32 256, 256
          %811 = vsyncadd [#allocation9], %s810
          %s812 = sshll.u32 [#allocation8], 4
          %s813 = int_to_ptr.vmem [resolvable:$true] %s812
          %818 = dma.hbm_to_vmem [thread:$0]  %s17, 256, %s813, [#allocation9], 64, 64, 4
        $region32: #{decoder_layer.1} parent=11 // pred_fallthru
          _
        // Predicated region
        $region33: #{decoder_layer.1} parent=11 // pred_check
          %p819 = pneg %p307
        $region34: #{decoder_layer.1} parent=11 // pred_check_branch
          %821 = sbr.rel (%p819) target = $region36
        $region35: #{decoder_layer.1} parent=11 // pred_region
          %s823 = ssub.s32 16, 16
          %824 = vsyncadd [#allocation9], %s823
          %s826 = sshll.u32 [#allocation10], 4
          %s827 = int_to_ptr.vmem [resolvable:$true] %s826
          %829 = dma.hbm_to_vmem [thread:$0]  %s19, 16, %s827, [#allocation9]
        $region36: #{decoder_layer.1} parent=11 // pred_fallthru
          _
        // Predicated region
        $region37: #{decoder_layer.1} parent=11 // pred_check
          %p830 = pneg %p328
        $region38: #{decoder_layer.1} parent=11 // pred_check_branch
          %832 = sbr.rel (%p830) target = $region40
        $region39: #{decoder_layer.1} parent=11 // pred_region
          _
        $region40: #{decoder_layer.1} parent=11 // pred_fallthru
          _
        // Predicated region
        $region41: #{decoder_layer.1} parent=11 // pred_check
          %p833 = pneg %p349
        $region42: #{decoder_layer.1} parent=11 // pred_check_branch
          %835 = sbr.rel (%p833) target = $region44
        $region43: #{decoder_layer.1} parent=11 // pred_region
          %s837 = ssub.s32 16, 16
          %838 = vsyncadd [#allocation12], %s837
          %s840 = sshll.u32 [#allocation11], 4
          %s841 = int_to_ptr.vmem [resolvable:$true] %s840
          %843 = dma.hbm_to_vmem [thread:$0]  %s23, 16, %s841, [#allocation12]
        $region44: #{decoder_layer.1} parent=11 // pred_fallthru
          _
        // Predicated region
        $region45: #{decoder_layer.1} parent=11 // pred_check
          %p844 = pneg %p370
        $region46: #{decoder_layer.1} parent=11 // pred_check_branch
          %846 = sbr.rel (%p844) target = $region48
        $region47: #{decoder_layer.1} parent=11 // pred_region
          %s848 = ssub.s32 16, 16
          %849 = vsyncadd [#allocation12], %s848
          %s851 = sshll.u32 [#allocation13], 4
          %s852 = int_to_ptr.vmem [resolvable:$true] %s851
          %854 = dma.hbm_to_vmem [thread:$0]  %s25, 16, %s852, [#allocation12]
        $region48: #{decoder_layer.1} parent=11 // pred_fallthru
          _
        // Predicated region
        $region49: #{decoder_layer.1} parent=11 // pred_check
          %p855 = pneg %p391
        $region50: #{decoder_layer.1} parent=11 // pred_check_branch
          %857 = sbr.rel (%p855) target = $region52
        $region51: #{decoder_layer.1} parent=11 // pred_region
          %s859 = ssub.s32 16, 16
          %860 = vsyncadd [#allocation15], %s859
          %s862 = sshll.u32 [#allocation14], 4
          %s863 = int_to_ptr.vmem [resolvable:$true] %s862
          %865 = dma.hbm_to_vmem [thread:$0]  %s27, 16, %s863, [#allocation15]
        $region52: #{decoder_layer.1} parent=11 // pred_fallthru
          _
        // Predicated region
        $region53: #{decoder_layer.1} parent=11 // pred_check
          %p866 = pneg %p412
        $region54: #{decoder_layer.1} parent=11 // pred_check_branch
          %868 = sbr.rel (%p866) target = $region56
        $region55: #{decoder_layer.1} parent=11 // pred_region
          _
        $region56: #{decoder_layer.1} parent=11 // pred_fallthru
          _
        // Predicated region
        $region57: #{decoder_layer.1} parent=11 // pred_check
          %p869 = pneg %p433
        $region58: #{decoder_layer.1} parent=11 // pred_check_branch
          %871 = sbr.rel (%p869) target = $region60
        $region59: #{decoder_layer.1} parent=11 // pred_region
          %s873 = ssub.s32 16, 16
          %874 = vsyncadd [#allocation15], %s873
          %s876 = sshll.u32 [#allocation16], 4
          %s877 = int_to_ptr.vmem [resolvable:$true] %s876
          %879 = dma.hbm_to_vmem [thread:$0]  %s31, 16, %s877, [#allocation15]
        $region60: #{decoder_layer.1} parent=11 // pred_fallthru
          _
        // Predicated region
        $region61: #{decoder_layer.1} parent=11 // pred_check
          %p880 = pneg %p454
        $region62: #{decoder_layer.1} parent=11 // pred_check_branch
          %882 = sbr.rel (%p880) target = $region64
        $region63: #{decoder_layer.1} parent=11 // pred_region
          %s884 = ssub.s32 256, 256
          %885 = vsyncadd [#allocation18], %s884
          %s886 = sshll.u32 [#allocation17], 4
          %s887 = int_to_ptr.vmem [resolvable:$true] %s886
          %892 = dma.hbm_to_vmem [thread:$0]  %s33, 256, %s887, [#allocation18], 64, 64, 4
        $region64: #{decoder_layer.1} parent=11 // pred_fallthru
          _
        // Predicated region
        $region65: #{decoder_layer.1} parent=11 // pred_check
          %p893 = pneg %p475
        $region66: #{decoder_layer.1} parent=11 // pred_check_branch
          %895 = sbr.rel (%p893) target = $region68
        $region67: #{decoder_layer.1} parent=11 // pred_region
          %s897 = ssub.s32 16, 16
          %898 = vsyncadd [#allocation18], %s897
          %s900 = sshll.u32 [#allocation19], 4
          %s901 = int_to_ptr.vmem [resolvable:$true] %s900
          %903 = dma.hbm_to_vmem [thread:$0]  %s35, 16, %s901, [#allocation18]
        $region68: #{decoder_layer.1} parent=11 // pred_fallthru
          _
        // Predicated region
        $region69: #{decoder_layer.1} parent=11 // pred_check
          %p904 = pneg %p496
        $region70: #{decoder_layer.1} parent=11 // pred_check_branch
          %906 = sbr.rel (%p904) target = $region72
        $region71: #{decoder_layer.1} parent=11 // pred_region
          _
        $region72: #{decoder_layer.1} parent=11 // pred_fallthru
          _
        // Predicated region
        $region73: #{decoder_layer.1} parent=11 // pred_check
          %p907 = pneg %p517
        $region74: #{decoder_layer.1} parent=11 // pred_check_branch
          %909 = sbr.rel (%p907) target = $region76
        $region75: #{decoder_layer.1} parent=11 // pred_region
          _
        $region76: #{decoder_layer.1} parent=11 // pred_fallthru
          _
        // Predicated region
        $region77: #{decoder_layer.1} parent=11 // pred_check
          %p910 = pneg %p538
        $region78: #{decoder_layer.1} parent=11 // pred_check_branch
          %912 = sbr.rel (%p910) target = $region80
        $region79: #{decoder_layer.1} parent=11 // pred_region
          %s914 = ssub.s32 256, 256
          %915 = vsyncadd [#allocation21], %s914
          %s916 = sshll.u32 [#allocation20], 4
          %s917 = int_to_ptr.vmem [resolvable:$true] %s916
          %922 = dma.hbm_to_vmem [thread:$0]  %s41, 256, %s917, [#allocation21], 64, 64, 4
        $region80: #{decoder_layer.1} parent=11 // pred_fallthru
          _
        // Predicated region
        $region81: #{decoder_layer.1} parent=11 // pred_check
          %p923 = pneg %p559
        $region82: #{decoder_layer.1} parent=11 // pred_check_branch
          %925 = sbr.rel (%p923) target = $region84
        $region83: #{decoder_layer.1} parent=11 // pred_region
          _
        $region84: #{decoder_layer.1} parent=11 // pred_fallthru
          _
        // Predicated region
        $region85: #{decoder_layer.1} parent=11 // pred_check
          %p926 = pneg %p580
        $region86: #{decoder_layer.1} parent=11 // pred_check_branch
          %928 = sbr.rel (%p926) target = $region88
        $region87: #{decoder_layer.1} parent=11 // pred_region
          _
        $region88: #{decoder_layer.1} parent=11 // pred_fallthru
          _
        // Predicated region
        $region89: #{decoder_layer.1} parent=11 // pred_check
          %p929 = pneg %p601
        $region90: #{decoder_layer.1} parent=11 // pred_check_branch
          %931 = sbr.rel (%p929) target = $region92
        $region91: #{decoder_layer.1} parent=11 // pred_region
          _
        $region92: #{decoder_layer.1} parent=11 // pred_fallthru
          _
        // Predicated region
        $region93: #{decoder_layer.1} parent=11 // pred_check
          %p932 = pneg %p622
        $region94: #{decoder_layer.1} parent=11 // pred_check_branch
          %934 = sbr.rel (%p932) target = $region96
        $region95: #{decoder_layer.1} parent=11 // pred_region
          _
        $region96: #{decoder_layer.1} parent=11 // pred_fallthru
          _
        // Predicated region
        $region97: #{decoder_layer.1} parent=11 // pred_check
          %p935 = pneg %p643
        $region98: #{decoder_layer.1} parent=11 // pred_check_branch
          %937 = sbr.rel (%p935) target = $region100
        $region99: #{decoder_layer.1} parent=11 // pred_region
          _
        $region100: #{decoder_layer.1} parent=11 // pred_fallthru
          _
        // Predicated region
        $region101: #{decoder_layer.1} parent=11 // pred_check
          %p938 = pneg %p664
        $region102: #{decoder_layer.1} parent=11 // pred_check_branch
          %940 = sbr.rel (%p938) target = $region104
        $region103: #{decoder_layer.1} parent=11 // pred_region
          _
        $region104: #{decoder_layer.1} parent=11 // pred_fallthru
          _
        // Predicated region
        $region105: #{decoder_layer.1} parent=11 // pred_check
          %p941 = pneg %p685
        $region106: #{decoder_layer.1} parent=11 // pred_check_branch
          %943 = sbr.rel (%p941) target = $region108
        $region107: #{decoder_layer.1} parent=11 // pred_region
          _
        $region108: #{decoder_layer.1} parent=11 // pred_fallthru
          _
        // Predicated region
        $region109: #{decoder_layer.1} parent=11 // pred_check
          %p944 = pneg %p706
        $region110: #{decoder_layer.1} parent=11 // pred_check_branch
          %946 = sbr.rel (%p944) target = $region112
        $region111: #{decoder_layer.1} parent=11 // pred_region
          _
        $region112: #{decoder_layer.1} parent=11 // pred_fallthru
          _
        // Predicated region
        $region113: #{decoder_layer.1} parent=11 // pred_check
          %p947 = pneg %p727
        $region114: #{decoder_layer.1} parent=11 // pred_check_branch
          %949 = sbr.rel (%p947) target = $region116
        $region115: #{decoder_layer.1} parent=11 // pred_region
          _
        $region116: #{decoder_layer.1} parent=11 // pred_fallthru
          _
      $region12: #{decoder_layer.1} parent=5 // pred_fallthru
        _
      %p950 = scmp.lt.s32.totalorder %s77, 2
      // Predicated region
      $region117: #{decoder_layer.1} parent=5 // pred_check
        %p951 = pneg %p950
      $region118: #{decoder_layer.1} parent=5 // pred_check_branch
        %953 = sbr.rel (%p951) target = $region120
      $region119: #{decoder_layer.1} parent=5 // pred_region
        // Predicated region
        $region121: #{decoder_layer.1} parent=119 // pred_check
          %p954 = pneg %p97
        $region122: #{decoder_layer.1} parent=119 // pred_check_branch
          %956 = sbr.rel (%p954) target = $region124
        $region123: #{decoder_layer.1} parent=119 // pred_region
          %p957 = scmp.lt.s32.totalorder %s77, 1
          %s958 = scalar_select %p957, %s77, 1
          %s959 = smul.addr %s958, 8
          %s960 = scalar_lea.vmem %s1, %s959
        $region124: #{decoder_layer.1} parent=119 // pred_fallthru
          _
        // Predicated region
        $region125: #{decoder_layer.1} parent=119 // pred_check
          %p961 = pneg %p123
        $region126: #{decoder_layer.1} parent=119 // pred_check_branch
          %963 = sbr.rel (%p961) target = $region128
        $region127: #{decoder_layer.1} parent=119 // pred_region
          %p964 = scmp.lt.s32.totalorder %s77, 1
          %s965 = scalar_select %p964, %s77, 1
          %s966 = smul.addr %s965, 8
          %s967 = scalar_lea.vmem %s3, %s966
        $region128: #{decoder_layer.1} parent=119 // pred_fallthru
          _
        // Predicated region
        $region129: #{decoder_layer.1} parent=119 // pred_check
          %p968 = pneg %p149
        $region130: #{decoder_layer.1} parent=119 // pred_check_branch
          %970 = sbr.rel (%p968) target = $region132
        $region131: #{decoder_layer.1} parent=119 // pred_region
          %p971 = scmp.lt.s32.totalorder %s77, 1
          %s972 = scalar_select %p971, %s77, 1
          %s973 = smul.addr %s972, 8
          %s974 = scalar_lea.vmem %s5, %s973
        $region132: #{decoder_layer.1} parent=119 // pred_fallthru
          _
        // Predicated region
        $region133: #{decoder_layer.1} parent=119 // pred_check
          %p975 = pneg %p175
        $region134: #{decoder_layer.1} parent=119 // pred_check_branch
          %977 = sbr.rel (%p975) target = $region136
        $region135: #{decoder_layer.1} parent=119 // pred_region
          %p978 = scmp.lt.s32.totalorder %s77, 1
          %s979 = scalar_select %p978, %s77, 1
          %s980 = smul.addr %s979, 8
          %s981 = scalar_lea.vmem %s7, %s980
        $region136: #{decoder_layer.1} parent=119 // pred_fallthru
          _
      $region120: #{decoder_layer.1} parent=5 // pred_fallthru
        _
      %p982 = scmp.le.s32.totalorder 1, %s77
      %p983 = scmp.lt.s32.totalorder %s77, 3
      %p984 = pnand %p982, %p983
      %p985 = pneg %p984
      // Predicated region
      $region137: #{decoder_layer.1} parent=5 // pred_check
        _
      $region138: #{decoder_layer.1} parent=5 // pred_check_branch
        %987 = sbr.rel (%p984) target = $region140
      $region139: #{decoder_layer.1} parent=5 // pred_region
        %s988 = ssub.s32 %s77, 1
        // Predicated region
        $region141: #{decoder_layer.1} parent=139 // pred_check
          %p989 = pneg %p223
        $region142: #{decoder_layer.1} parent=139 // pred_check_branch
          %991 = sbr.rel (%p989) target = $region144
        $region143: #{decoder_layer.1} parent=139 // pred_region
          %992 = dma.done [#allocation3], 16
        $region144: #{decoder_layer.1} parent=139 // pred_fallthru
          _
        // Predicated region
        $region145: #{decoder_layer.1} parent=139 // pred_check
          %p993 = pneg %p244
        $region146: #{decoder_layer.1} parent=139 // pred_check_branch
          %995 = sbr.rel (%p993) target = $region148
        $region147: #{decoder_layer.1} parent=139 // pred_region
          %996 = dma.done [#allocation6], 256
        $region148: #{decoder_layer.1} parent=139 // pred_fallthru
          _
        // Predicated region
        $region149: #{decoder_layer.1} parent=139 // pred_check
          %p997 = pneg %p265
        $region150: #{decoder_layer.1} parent=139 // pred_check_branch
          %999 = sbr.rel (%p997) target = $region152
        $region151: #{decoder_layer.1} parent=139 // pred_region
          %1000 = dma.done [#allocation6], 16
        $region152: #{decoder_layer.1} parent=139 // pred_fallthru
          _
        // Predicated region
        $region153: #{decoder_layer.1} parent=139 // pred_check
          %p1001 = pneg %p286
        $region154: #{decoder_layer.1} parent=139 // pred_check_branch
          %1003 = sbr.rel (%p1001) target = $region156
        $region155: #{decoder_layer.1} parent=139 // pred_region
          %1004 = dma.done [#allocation9], 256
        $region156: #{decoder_layer.1} parent=139 // pred_fallthru
          _
        // Predicated region
        $region157: #{decoder_layer.1} parent=139 // pred_check
          %p1005 = pneg %p307
        $region158: #{decoder_layer.1} parent=139 // pred_check_branch
          %1007 = sbr.rel (%p1005) target = $region160
        $region159: #{decoder_layer.1} parent=139 // pred_region
          %1008 = dma.done [#allocation9], 16
        $region160: #{decoder_layer.1} parent=139 // pred_fallthru
          _
        // Predicated region
        $region161: #{decoder_layer.1} parent=139 // pred_check
          %p1009 = pneg %p349
        $region162: #{decoder_layer.1} parent=139 // pred_check_branch
          %1011 = sbr.rel (%p1009) target = $region164
        $region163: #{decoder_layer.1} parent=139 // pred_region
          %1012 = dma.done [#allocation12], 16
        $region164: #{decoder_layer.1} parent=139 // pred_fallthru
          _
        // Predicated region
        $region165: #{decoder_layer.1} parent=139 // pred_check
          %p1013 = pneg %p370
        $region166: #{decoder_layer.1} parent=139 // pred_check_branch
          %1015 = sbr.rel (%p1013) target = $region168
        $region167: #{decoder_layer.1} parent=139 // pred_region
          %1016 = dma.done [#allocation12], 16
        $region168: #{decoder_layer.1} parent=139 // pred_fallthru
          _
        // Predicated region
        $region169: #{decoder_layer.1} parent=139 // pred_check
          %p1017 = pneg %p391
        $region170: #{decoder_layer.1} parent=139 // pred_check_branch
          %1019 = sbr.rel (%p1017) target = $region172
        $region171: #{decoder_layer.1} parent=139 // pred_region
          %1020 = dma.done [#allocation15], 16
        $region172: #{decoder_layer.1} parent=139 // pred_fallthru
          _
        // Predicated region
        $region173: #{decoder_layer.1} parent=139 // pred_check
          %p1021 = pneg %p433
        $region174: #{decoder_layer.1} parent=139 // pred_check_branch
          %1023 = sbr.rel (%p1021) target = $region176
        $region175: #{decoder_layer.1} parent=139 // pred_region
          %1024 = dma.done [#allocation15], 16
        $region176: #{decoder_layer.1} parent=139 // pred_fallthru
          _
        // Predicated region
        $region177: #{decoder_layer.1} parent=139 // pred_check
          %p1025 = pneg %p454
        $region178: #{decoder_layer.1} parent=139 // pred_check_branch
          %1027 = sbr.rel (%p1025) target = $region180
        $region179: #{decoder_layer.1} parent=139 // pred_region
          %1028 = dma.done [#allocation18], 256
        $region180: #{decoder_layer.1} parent=139 // pred_fallthru
          _
        // Predicated region
        $region181: #{decoder_layer.1} parent=139 // pred_check
          %p1029 = pneg %p475
        $region182: #{decoder_layer.1} parent=139 // pred_check_branch
          %1031 = sbr.rel (%p1029) target = $region184
        $region183: #{decoder_layer.1} parent=139 // pred_region
          %1032 = dma.done [#allocation18], 16
        $region184: #{decoder_layer.1} parent=139 // pred_fallthru
          _
        // Predicated region
        $region185: #{decoder_layer.1} parent=139 // pred_check
          %p1033 = pneg %p538
        $region186: #{decoder_layer.1} parent=139 // pred_check_branch
          %1035 = sbr.rel (%p1033) target = $region188
        $region187: #{decoder_layer.1} parent=139 // pred_region
          %1036 = dma.done [#allocation21], 256
        $region188: #{decoder_layer.1} parent=139 // pred_fallthru
          _
        %p1037 = scmp.lt.s32.totalorder %s82, 1
        %s1038 = scalar_select %p1037, %s82, 1
        %s1039 = smul.addr %s1038, 8
        %s1040 = scalar_lea.vmem %s1, %s1039
        %p1041 = pneg %p103
        %p1042 = pneg %p100
        %p1043 = scmp.lt.s32.totalorder %s82, 1
        %s1044 = scalar_select %p1043, %s82, 1
        %s1045 = smul.addr %s1044, 8
        %s1046 = scalar_lea.vmem %s3, %s1045
        %p1047 = pneg %p129
        %p1048 = pneg %p126
        %p1049 = scmp.lt.s32.totalorder %s82, 1
        %s1050 = scalar_select %p1049, %s82, 1
        %s1051 = smul.addr %s1050, 8
        %s1052 = scalar_lea.vmem %s5, %s1051
        %p1053 = pneg %p155
        %p1054 = pneg %p152
        %p1055 = scmp.lt.s32.totalorder %s82, 1
        %s1056 = scalar_select %p1055, %s82, 1
        %s1057 = smul.addr %s1056, 8
        %s1058 = scalar_lea.vmem %s7, %s1057
        %p1059 = pneg %p181
        %p1060 = pneg %p178
        %p1061 = pneg %p202
        %p1062 = pneg %p199
        %p1063 = pneg %p223
        %p1064 = pneg %p220
        %p1065 = pneg %p244
        %p1066 = pneg %p241
        %p1067 = pneg %p265
        %p1068 = pneg %p262
        %p1069 = pneg %p286
        %p1070 = pneg %p283
        %p1071 = pneg %p307
        %p1072 = pneg %p304
        %p1073 = pneg %p328
        %p1074 = pneg %p325
        %p1075 = pneg %p349
        %p1076 = pneg %p346
        %p1077 = pneg %p370
        %p1078 = pneg %p367
        %p1079 = pneg %p391
        %p1080 = pneg %p388
        %p1081 = pneg %p412
        %p1082 = pneg %p409
        %p1083 = pneg %p433
        %p1084 = pneg %p430
        %p1085 = pneg %p454
        %p1086 = pneg %p451
        %p1087 = pneg %p475
        %p1088 = pneg %p472
        %p1089 = pneg %p496
        %p1090 = pneg %p493
        %p1091 = pneg %p517
        %p1092 = pneg %p514
        %p1093 = pneg %p538
        %p1094 = pneg %p535
        %p1095 = pneg %p559
        %p1096 = pneg %p556
        %p1097 = pneg %p580
        %p1098 = pneg %p577
        %p1099 = pneg %p601
        %p1100 = pneg %p598
        %p1101 = pneg %p622
        %p1102 = pneg %p619
        %p1103 = pneg %p643
        %p1104 = pneg %p640
        %p1105 = pneg %p664
        %p1106 = pneg %p661
        %p1107 = pneg %p685
        %p1108 = pneg %p682
        %p1109 = pneg %p706
        %p1110 = pneg %p703
        %p1111 = pneg %p727
        %p1112 = pneg %p724
        %p1113 = pneg %p753
        %p1114 = pneg %p750
        %s1115 = sand.u32 %s740, 1
        %s1116 = scalar_lea.sflag [#allocation4], %s1115
        %s1117 = sand.u32 %s740, 1
        %s1118 = smul.addr %s1117, 8
        %s1119 = scalar_lea.vmem [#allocation22], %s1118
        %p1120 = scmp.lt.s32.totalorder %s82, 1
        %s1121 = scalar_select %p1120, %s82, 1
        %s1122 = smul.addr %s1121, 8
        %s1123 = scalar_lea.vmem %s1, %s1122
        %p1124 = scmp.lt.s32.totalorder %s82, 1
        %s1125 = scalar_select %p1124, %s82, 1
        %s1126 = smul.addr %s1125, 8
        %s1127 = scalar_lea.vmem %s3, %s1126
        %p1128 = scmp.lt.s32.totalorder %s82, 1
        %s1129 = scalar_select %p1128, %s82, 1
        %s1130 = smul.addr %s1129, 8
        %s1131 = scalar_lea.vmem %s5, %s1130
        %p1132 = scmp.lt.s32.totalorder %s82, 1
        %s1133 = scalar_select %p1132, %s82, 1
        %s1134 = smul.addr %s1133, 8
        %s1135 = scalar_lea.vmem %s7, %s1134
        %v1137 = vld [vmem:[%s1123] sm:$0xff]
        %v1138 = vld [vmem:[%s1127] sm:$0xff]
        %v1139 = vld [vmem:[%s1131] sm:$0xff]
        %v1140 = vld [vmem:[%s1135] sm:$0xff]
        %vm1141 = vcmp.ne.f32.partialorder %v1140, 0.0
        %v1142 = vsel %vm1141, 0.0, -1e+09
        %v1143 = vld [vmem:[%s9] sm:$0xf]
        %v1144 = vld [vmem:[%s9 + $0x4] sm:$0xf]
        %v1145 = vld [vmem:[%s9 + $0x8] sm:$0xf]
        %v1146 = vld [vmem:[%s9 + $0xc] sm:$0xf]
        %v1147 = vld [vmem:[#allocation2] sm:$0x1]
        %v1148 = vld [vmem:[#allocation5] sm:$0xf]
        %v1149 = vld [vmem:[#allocation5 + $0x4] sm:$0xf]
        %v1150 = vld [vmem:[#allocation5 + $0x8] sm:$0xf]
        %v1151 = vld [vmem:[#allocation5 + $0xc] sm:$0xf]
        %v1152 = vld [vmem:[#allocation7] sm:$0x1]
        %v1153 = vld [vmem:[#allocation8] sm:$0xf]
        %v1154 = vld [vmem:[#allocation8 + $0x4] sm:$0xf]
        %v1155 = vld [vmem:[#allocation8 + $0x8] sm:$0xf]
        %v1156 = vld [vmem:[#allocation8 + $0xc] sm:$0xf]
        %v1157 = vld [vmem:[#allocation10] sm:$0x1]
        %v1158 = vld [vmem:[%s21] sm:$0xf]
        %v1159 = vld [vmem:[%s21 + $0x4] sm:$0xf]
        %v1160 = vld [vmem:[%s21 + $0x8] sm:$0xf]
        %v1161 = vld [vmem:[%s21 + $0xc] sm:$0xf]
        %v1162 = vld [vmem:[#allocation11] sm:$0x1]
        %v1163 = vpack.c.bf16 %v1137, %v1137
        %v1165 = vlaneseq
        %v1166 = vshrl.u32 %v1165, 7
        %v1167 = vsub.s32 0, %v1166
        %v1168 = vrot.slane %v1147, %v1167
        %v1174 = vunpack.c.l.b16 %v1143
        %v1175 = vunpack.c.l.b16 %v1144
        %v1176 = vunpack.c.l.b16 %v1145
        %v1177 = vunpack.c.l.b16 %v1146
        %v1178 = vpack.c.b16 %v1175, %v1174
        %v1179 = vpack.c.b16 %v1177, %v1176
        %vm1182 = vcmask 261120
        %v1184 = vsel %vm1182, %v1163, 0
        %1186 = vmatprep.subr.bf16.mxu0 0
        %1187 = vmatpush1.bf16.msra.mxu0 %v1178
        %1188 = vmatprep.subr.bf16.mxu0 0
        %1189 = vmatpush1.bf16.msra.mxu0 %v1179
        %1190 = vmatprep.subr.bf16.mxu0 0
        %1191 = vmatpush1.bf16.msra.mxu0 0
        %1192 = vmatprep.subr.bf16.mxu0 0
        %1193 = vmatpush1.bf16.msra.mxu0 0
        %1194 = vmatprep.subr.bf16.mxu0 0
        %1195 = vmatpush1.bf16.msra.mxu0 0
        %1196 = vmatprep.subr.bf16.mxu0 0
        %1197 = vmatpush1.bf16.msra.mxu0 0
        %1198 = vmatprep.subr.bf16.mxu0 0
        %1199 = vmatpush1.bf16.msra.mxu0 0
        %1200 = vmatprep.subr.bf16.mxu0 0
        %1201 = vmatpush1.bf16.msra.mxu0 0
        %1202 = vmatprep.subr.bf16.mxu0 0
        %1203 = vmatpush1.bf16.msra.mxu0 0
        %1204 = vmatprep.subr.bf16.mxu0 0
        %1205 = vmatpush1.bf16.msra.mxu0 0
        %1206 = vmatprep.subr.bf16.mxu0 0
        %1207 = vmatpush1.bf16.msra.mxu0 0
        %1208 = vmatprep.subr.bf16.mxu0 0
        %1209 = vmatpush1.bf16.msra.mxu0 0
        %1210 = vmatprep.subr.bf16.mxu0 0
        %1211 = vmatpush1.bf16.msra.mxu0 0
        %1212 = vmatprep.subr.bf16.mxu0 0
        %1213 = vmatpush1.bf16.msra.mxu0 0
        %1214 = vmatprep.subr.bf16.mxu0 0
        %1215 = vmatpush1.bf16.msra.mxu0 0
        %1216 = vmatprep.subr.bf16.mxu0 0
        %1217 = vmatpush1.bf16.msra.mxu0 0
        %1218 = vmatprep.mubr.bf16.mxu0 0
        %1219 = vmatmul.mubr.bf16.gmra.mrb[0].mxu0 %v1184
        %v1220 = vpop.f32.mrb[0].mxu0
        %v1221 = vadd.f32 %v1168, %v1220
        %v1222 = vpop.f32.mrb[0].mxu0
        %v1223 = vpop.f32.mrb[0].mxu0
        %v1224 = vpop.f32.mrb[0].mxu0
        %1225 = vdwg.mxu0
        %v1227 = vlaneseq
        %v1228 = vshrl.u32 %v1227, 7
        %v1229 = vsub.s32 0, %v1228
        %v1230 = vrot.slane %v1152, %v1229
        %v1236 = vunpack.c.l.b16 %v1148
        %v1237 = vunpack.c.l.b16 %v1149
        %v1238 = vunpack.c.l.b16 %v1150
        %v1239 = vunpack.c.l.b16 %v1151
        %v1240 = vpack.c.b16 %v1237, %v1236
        %v1241 = vpack.c.b16 %v1239, %v1238
        %1244 = vmatprep.subr.bf16.mxu0 0
        %1245 = vmatpush1.bf16.msra.mxu0 %v1240
        %1246 = vmatprep.subr.bf16.mxu0 0
        %1247 = vmatpush1.bf16.msra.mxu0 %v1241
        %1248 = vmatprep.subr.bf16.mxu0 0
        %1249 = vmatpush1.bf16.msra.mxu0 0
        %1250 = vmatprep.subr.bf16.mxu0 0
        %1251 = vmatpush1.bf16.msra.mxu0 0
        %1252 = vmatprep.subr.bf16.mxu0 0
        %1253 = vmatpush1.bf16.msra.mxu0 0
        %1254 = vmatprep.subr.bf16.mxu0 0
        %1255 = vmatpush1.bf16.msra.mxu0 0
        %1256 = vmatprep.subr.bf16.mxu0 0
        %1257 = vmatpush1.bf16.msra.mxu0 0
        %1258 = vmatprep.subr.bf16.mxu0 0
        %1259 = vmatpush1.bf16.msra.mxu0 0
        %1260 = vmatprep.subr.bf16.mxu0 0
        %1261 = vmatpush1.bf16.msra.mxu0 0
        %1262 = vmatprep.subr.bf16.mxu0 0
        %1263 = vmatpush1.bf16.msra.mxu0 0
        %1264 = vmatprep.subr.bf16.mxu0 0
        %1265 = vmatpush1.bf16.msra.mxu0 0
        %1266 = vmatprep.subr.bf16.mxu0 0
        %1267 = vmatpush1.bf16.msra.mxu0 0
        %1268 = vmatprep.subr.bf16.mxu0 0
        %1269 = vmatpush1.bf16.msra.mxu0 0
        %1270 = vmatprep.subr.bf16.mxu0 0
        %1271 = vmatpush1.bf16.msra.mxu0 0
        %1272 = vmatprep.subr.bf16.mxu0 0
        %1273 = vmatpush1.bf16.msra.mxu0 0
        %1274 = vmatprep.subr.bf16.mxu0 0
        %1275 = vmatpush1.bf16.msra.mxu0 0
        %1276 = vmatprep.mubr.bf16.mxu0 0
        %1277 = vmatmul.mubr.bf16.gmra.mrb[0].mxu0 %v1184
        %v1278 = vpop.f32.mrb[0].mxu0
        %v1279 = vadd.f32 %v1230, %v1278
        %v1280 = vpop.f32.mrb[0].mxu0
        %v1281 = vpop.f32.mrb[0].mxu0
        %v1282 = vpop.f32.mrb[0].mxu0
        %1283 = vdwg.mxu0
        %v1285 = vlaneseq
        %v1286 = vshrl.u32 %v1285, 7
        %v1287 = vsub.s32 0, %v1286
        %v1288 = vrot.slane %v1157, %v1287
        %v1294 = vunpack.c.l.b16 %v1153
        %v1295 = vunpack.c.l.b16 %v1154
        %v1296 = vunpack.c.l.b16 %v1155
        %v1297 = vunpack.c.l.b16 %v1156
        %v1298 = vpack.c.b16 %v1295, %v1294
        %v1299 = vpack.c.b16 %v1297, %v1296
        %1302 = vmatprep.subr.bf16.mxu0 0
        %1303 = vmatpush1.bf16.msra.mxu0 %v1298
        %1304 = vmatprep.subr.bf16.mxu0 0
        %1305 = vmatpush1.bf16.msra.mxu0 %v1299
        %1306 = vmatprep.subr.bf16.mxu0 0
        %1307 = vmatpush1.bf16.msra.mxu0 0
        %1308 = vmatprep.subr.bf16.mxu0 0
        %1309 = vmatpush1.bf16.msra.mxu0 0
        %1310 = vmatprep.subr.bf16.mxu0 0
        %1311 = vmatpush1.bf16.msra.mxu0 0
        %1312 = vmatprep.subr.bf16.mxu0 0
        %1313 = vmatpush1.bf16.msra.mxu0 0
        %1314 = vmatprep.subr.bf16.mxu0 0
        %1315 = vmatpush1.bf16.msra.mxu0 0
        %1316 = vmatprep.subr.bf16.mxu0 0
        %1317 = vmatpush1.bf16.msra.mxu0 0
        %1318 = vmatprep.subr.bf16.mxu0 0
        %1319 = vmatpush1.bf16.msra.mxu0 0
        %1320 = vmatprep.subr.bf16.mxu0 0
        %1321 = vmatpush1.bf16.msra.mxu0 0
        %1322 = vmatprep.subr.bf16.mxu0 0
        %1323 = vmatpush1.bf16.msra.mxu0 0
        %1324 = vmatprep.subr.bf16.mxu0 0
        %1325 = vmatpush1.bf16.msra.mxu0 0
        %1326 = vmatprep.subr.bf16.mxu0 0
        %1327 = vmatpush1.bf16.msra.mxu0 0
        %1328 = vmatprep.subr.bf16.mxu0 0
        %1329 = vmatpush1.bf16.msra.mxu0 0
        %1330 = vmatprep.subr.bf16.mxu0 0
        %1331 = vmatpush1.bf16.msra.mxu0 0
        %1332 = vmatprep.subr.bf16.mxu0 0
        %1333 = vmatpush1.bf16.msra.mxu0 0
        %1334 = vmatprep.mubr.bf16.mxu0 0
        %1335 = vmatmul.mubr.bf16.gmra.mrb[0].mxu0 %v1184
        %v1336 = vpop.f32.mrb[0].mxu0
        %v1337 = vadd.f32 %v1288, %v1336
        %v1338 = vpop.f32.mrb[0].mxu0
        %v1339 = vpop.f32.mrb[0].mxu0
        %v1340 = vpop.f32.mrb[0].mxu0
        %1341 = vdwg.mxu0
        %v1342 = vpack.c.bf16 %v1221, %v1221
        %1344 = vrot.lane.b32.xlu0 %v1342, 112
        %v1345 = vpop.permute.xlu0 %1344
        %v1346 = vpack.c.bf16 %v1279, %v1279
        %1348 = vrot.lane.b32.xlu0 %v1346, 112
        %v1349 = vpop.permute.xlu0 %1348
        %v1350 = vpack.c.bf16 %v1337, %v1337
        %1352 = vrot.lane.b32.xlu0 %v1350, 112
        %v1353 = vpop.permute.xlu0 %1352
        %vm1354 = vcmask 130048
        %v1356 = vsel %vm1354, %v1342, 0
        %v1359 = vsel %vm1354, %v1346, 0
        %1361 = vmatprep.subr.bf16.mxu0 0
        %1362 = vmatpush1.bf16.xpose.msra.mxu0 %v1359
        %1363 = vmatprep.subr.bf16.mxu0 0
        %1364 = vmatpush1.bf16.xpose.msra.mxu0 0
        %1365 = vmatprep.subr.bf16.mxu0 0
        %1366 = vmatpush1.bf16.xpose.msra.mxu0 0
        %1367 = vmatprep.subr.bf16.mxu0 0
        %1368 = vmatpush1.bf16.xpose.msra.mxu0 0
        %1369 = vmatprep.subr.bf16.mxu0 0
        %1370 = vmatpush1.bf16.xpose.msra.mxu0 0
        %1371 = vmatprep.subr.bf16.mxu0 0
        %1372 = vmatpush1.bf16.xpose.msra.mxu0 0
        %1373 = vmatprep.subr.bf16.mxu0 0
        %1374 = vmatpush1.bf16.xpose.msra.mxu0 0
        %1375 = vmatprep.subr.bf16.mxu0 0
        %1376 = vmatpush1.bf16.xpose.msra.mxu0 0
        %1377 = vmatprep.subr.bf16.mxu0 0
        %1378 = vmatpush1.bf16.xpose.msra.mxu0 0
        %1379 = vmatprep.subr.bf16.mxu0 0
        %1380 = vmatpush1.bf16.xpose.msra.mxu0 0
        %1381 = vmatprep.subr.bf16.mxu0 0
        %1382 = vmatpush1.bf16.xpose.msra.mxu0 0
        %1383 = vmatprep.subr.bf16.mxu0 0
        %1384 = vmatpush1.bf16.xpose.msra.mxu0 0
        %1385 = vmatprep.subr.bf16.mxu0 0
        %1386 = vmatpush1.bf16.xpose.msra.mxu0 0
        %1387 = vmatprep.subr.bf16.mxu0 0
        %1388 = vmatpush1.bf16.xpose.msra.mxu0 0
        %1389 = vmatprep.subr.bf16.mxu0 0
        %1390 = vmatpush1.bf16.xpose.msra.mxu0 0
        %1391 = vmatprep.subr.bf16.mxu0 0
        %1392 = vmatpush1.bf16.xpose.msra.mxu0 0
        %1393 = vmatprep.mubr.bf16.mxu0 0
        %1394 = vmatmul.mubr.bf16.gmra.mrb[0].mxu0 %v1356
        %v1395 = vpop.f32.mrb[0].mxu0
        %v1396 = vadd.f32 %v1142, %v1395
        %v1397 = vpop.f32.mrb[0].mxu0
        %v1398 = vpop.f32.mrb[0].mxu0
        %v1399 = vpop.f32.mrb[0].mxu0
        %1400 = vdwg.mxu0
        %v1402 = vsel %vm1354, %v1345, 0
        %v1405 = vsel %vm1354, %v1349, 0
        %1407 = vmatprep.subr.bf16.mxu0 0
        %1408 = vmatpush1.bf16.xpose.msra.mxu0 %v1405
        %1409 = vmatprep.subr.bf16.mxu0 0
        %1410 = vmatpush1.bf16.xpose.msra.mxu0 0
        %1411 = vmatprep.subr.bf16.mxu0 0
        %1412 = vmatpush1.bf16.xpose.msra.mxu0 0
        %1413 = vmatprep.subr.bf16.mxu0 0
        %1414 = vmatpush1.bf16.xpose.msra.mxu0 0
        %1415 = vmatprep.subr.bf16.mxu0 0
        %1416 = vmatpush1.bf16.xpose.msra.mxu0 0
        %1417 = vmatprep.subr.bf16.mxu0 0
        %1418 = vmatpush1.bf16.xpose.msra.mxu0 0
        %1419 = vmatprep.subr.bf16.mxu0 0
        %1420 = vmatpush1.bf16.xpose.msra.mxu0 0
        %1421 = vmatprep.subr.bf16.mxu0 0
        %1422 = vmatpush1.bf16.xpose.msra.mxu0 0
        %1423 = vmatprep.subr.bf16.mxu0 0
        %1424 = vmatpush1.bf16.xpose.msra.mxu0 0
        %1425 = vmatprep.subr.bf16.mxu0 0
        %1426 = vmatpush1.bf16.xpose.msra.mxu0 0
        %1427 = vmatprep.subr.bf16.mxu0 0
        %1428 = vmatpush1.bf16.xpose.msra.mxu0 0
        %1429 = vmatprep.subr.bf16.mxu0 0
        %1430 = vmatpush1.bf16.xpose.msra.mxu0 0
        %1431 = vmatprep.subr.bf16.mxu0 0
        %1432 = vmatpush1.bf16.xpose.msra.mxu0 0
        %1433 = vmatprep.subr.bf16.mxu0 0
        %1434 = vmatpush1.bf16.xpose.msra.mxu0 0
        %1435 = vmatprep.subr.bf16.mxu0 0
        %1436 = vmatpush1.bf16.xpose.msra.mxu0 0
        %1437 = vmatprep.subr.bf16.mxu0 0
        %1438 = vmatpush1.bf16.xpose.msra.mxu0 0
        %1439 = vmatprep.mubr.bf16.mxu0 0
        %1440 = vmatmul.mubr.bf16.gmra.mrb[0].mxu0 %v1402
        %v1441 = vpop.f32.mrb[0].mxu0
        %v1442 = vadd.f32 %v1142, %v1441
        %v1443 = vpop.f32.mrb[0].mxu0
        %v1444 = vpop.f32.mrb[0].mxu0
        %v1445 = vpop.f32.mrb[0].mxu0
        %1446 = vdwg.mxu0
        %vm1447 = vcmask 64512
        %v1448 = vsel %vm1447, %v1396, -inf
        %1449 = vmax.xlane.f32.xlu0 %v1448
        %v1450 = vpop.xlane.xlu0 %1449
        %v1451 = vsel %vm1447, %v1442, -inf
        %1452 = vmax.xlane.f32.xlu0 %v1451
        %v1453 = vpop.xlane.xlu0 %1452
        %v1454 = vsub.f32 %v1396, %v1450
        %v1455 = vsub.f32 %v1442, %v1453
        %v1456 = vmul.f32 %v1454, 1.442695
        %v1457 = vpow.pop %v1456
        %v1458 = vmul.f32 %v1455, 1.442695
        %v1459 = vpow.pop %v1458
        %v1460 = vsel %vm1447, %v1457, 0.0
        %1461 = vadd.xlane.f32.xlu0 %v1460
        %v1462 = vpop.xlane.xlu0 %1461
        %v1463 = vsel %vm1447, %v1459, 0.0
        %1464 = vadd.xlane.f32.xlu0 %v1463
        %v1465 = vpop.xlane.xlu0 %1464
        %v1466 = vrcp.pop %v1462
        %v1467 = vrcp.pop %v1465
        %v1468 = vmul.f32 %v1457, %v1466
        %v1469 = vmul.f32 %v1459, %v1467
        %v1470 = vpack.c.bf16 %v1468, %v1468
        %v1471 = vpack.c.bf16 %v1469, %v1469
        %v1473 = vsel %vm1447, %v1470, 0
        %vm1475 = vcmask 1043456
        %v1477 = vsel %vm1475, %v1350, 0
        %1479 = vmatprep.subr.bf16.mxu0 0
        %1480 = vmatpush1.bf16.msra.mxu0 %v1477
        %1481 = vmatprep.subr.bf16.mxu0 0
        %1482 = vmatpush1.bf16.msra.mxu0 0
        %1483 = vmatprep.subr.bf16.mxu0 0
        %1484 = vmatpush1.bf16.msra.mxu0 0
        %1485 = vmatprep.subr.bf16.mxu0 0
        %1486 = vmatpush1.bf16.msra.mxu0 0
        %1487 = vmatprep.subr.bf16.mxu0 0
        %1488 = vmatpush1.bf16.msra.mxu0 0
        %1489 = vmatprep.subr.bf16.mxu0 0
        %1490 = vmatpush1.bf16.msra.mxu0 0
        %1491 = vmatprep.subr.bf16.mxu0 0
        %1492 = vmatpush1.bf16.msra.mxu0 0
        %1493 = vmatprep.subr.bf16.mxu0 0
        %1494 = vmatpush1.bf16.msra.mxu0 0
        %1495 = vmatprep.subr.bf16.mxu0 0
        %1496 = vmatpush1.bf16.msra.mxu0 0
        %1497 = vmatprep.subr.bf16.mxu0 0
        %1498 = vmatpush1.bf16.msra.mxu0 0
        %1499 = vmatprep.subr.bf16.mxu0 0
        %1500 = vmatpush1.bf16.msra.mxu0 0
        %1501 = vmatprep.subr.bf16.mxu0 0
        %1502 = vmatpush1.bf16.msra.mxu0 0
        %1503 = vmatprep.subr.bf16.mxu0 0
        %1504 = vmatpush1.bf16.msra.mxu0 0
        %1505 = vmatprep.subr.bf16.mxu0 0
        %1506 = vmatpush1.bf16.msra.mxu0 0
        %1507 = vmatprep.subr.bf16.mxu0 0
        %1508 = vmatpush1.bf16.msra.mxu0 0
        %1509 = vmatprep.subr.bf16.mxu0 0
        %1510 = vmatpush1.bf16.msra.mxu0 0
        %1511 = vmatprep.mubr.bf16.mxu0 0
        %1512 = vmatmul.mubr.bf16.gmra.mrb[0].mxu0 %v1473
        %v1513 = vpop.f32.mrb[0].mxu0
        %v1514 = vadd.f32 0.0, %v1513
        %v1515 = vpop.f32.mrb[0].mxu0
        %v1516 = vpop.f32.mrb[0].mxu0
        %v1517 = vpop.f32.mrb[0].mxu0
        %1518 = vdwg.mxu0
        %v1520 = vsel %vm1447, %v1471, 0
        %v1523 = vsel %vm1475, %v1353, 0
        %1525 = vmatprep.subr.bf16.mxu0 0
        %1526 = vmatpush1.bf16.msra.mxu0 %v1523
        %1527 = vmatprep.subr.bf16.mxu0 0
        %1528 = vmatpush1.bf16.msra.mxu0 0
        %1529 = vmatprep.subr.bf16.mxu0 0
        %1530 = vmatpush1.bf16.msra.mxu0 0
        %1531 = vmatprep.subr.bf16.mxu0 0
        %1532 = vmatpush1.bf16.msra.mxu0 0
        %1533 = vmatprep.subr.bf16.mxu0 0
        %1534 = vmatpush1.bf16.msra.mxu0 0
        %1535 = vmatprep.subr.bf16.mxu0 0
        %1536 = vmatpush1.bf16.msra.mxu0 0
        %1537 = vmatprep.subr.bf16.mxu0 0
        %1538 = vmatpush1.bf16.msra.mxu0 0
        %1539 = vmatprep.subr.bf16.mxu0 0
        %1540 = vmatpush1.bf16.msra.mxu0 0
        %1541 = vmatprep.subr.bf16.mxu0 0
        %1542 = vmatpush1.bf16.msra.mxu0 0
        %1543 = vmatprep.subr.bf16.mxu0 0
        %1544 = vmatpush1.bf16.msra.mxu0 0
        %1545 = vmatprep.subr.bf16.mxu0 0
        %1546 = vmatpush1.bf16.msra.mxu0 0
        %1547 = vmatprep.subr.bf16.mxu0 0
        %1548 = vmatpush1.bf16.msra.mxu0 0
        %1549 = vmatprep.subr.bf16.mxu0 0
        %1550 = vmatpush1.bf16.msra.mxu0 0
        %1551 = vmatprep.subr.bf16.mxu0 0
        %1552 = vmatpush1.bf16.msra.mxu0 0
        %1553 = vmatprep.subr.bf16.mxu0 0
        %1554 = vmatpush1.bf16.msra.mxu0 0
        %1555 = vmatprep.subr.bf16.mxu0 0
        %1556 = vmatpush1.bf16.msra.mxu0 0
        %1557 = vmatprep.mubr.bf16.mxu0 0
        %1558 = vmatmul.mubr.bf16.gmra.mrb[0].mxu0 %v1520
        %v1559 = vpop.f32.mrb[0].mxu0
        %v1560 = vadd.f32 0.0, %v1559
        %v1561 = vpop.f32.mrb[0].mxu0
        %v1562 = vpop.f32.mrb[0].mxu0
        %v1563 = vpop.f32.mrb[0].mxu0
        %1564 = vdwg.mxu0
        %1566 = vrot.lane.b32.xlu0 %v1560, 16
        %v1567 = vpop.permute.xlu0 %1566
        %v1569 = vsel %vm1354, %v1514, %v1567
        %v1570 = vpack.c.bf16 %v1569, %v1569
        %v1572 = vlaneseq
        %v1573 = vshrl.u32 %v1572, 7
        %v1574 = vsub.s32 0, %v1573
        %v1575 = vrot.slane %v1162, %v1574
        %v1581 = vunpack.c.l.b16 %v1158
        %v1582 = vunpack.c.l.b16 %v1159
        %v1583 = vunpack.c.l.b16 %v1160
        %v1584 = vunpack.c.l.b16 %v1161
        %v1585 = vpack.c.b16 %v1582, %v1581
        %v1586 = vpack.c.b16 %v1584, %v1583
        %v1590 = vsel %vm1182, %v1570, 0
        %1592 = vmatprep.subr.bf16.mxu0 0
        %1593 = vmatpush1.bf16.msra.mxu0 %v1585
        %1594 = vmatprep.subr.bf16.mxu0 0
        %1595 = vmatpush1.bf16.msra.mxu0 %v1586
        %1596 = vmatprep.subr.bf16.mxu0 0
        %1597 = vmatpush1.bf16.msra.mxu0 0
        %1598 = vmatprep.subr.bf16.mxu0 0
        %1599 = vmatpush1.bf16.msra.mxu0 0
        %1600 = vmatprep.subr.bf16.mxu0 0
        %1601 = vmatpush1.bf16.msra.mxu0 0
        %1602 = vmatprep.subr.bf16.mxu0 0
        %1603 = vmatpush1.bf16.msra.mxu0 0
        %1604 = vmatprep.subr.bf16.mxu0 0
        %1605 = vmatpush1.bf16.msra.mxu0 0
        %1606 = vmatprep.subr.bf16.mxu0 0
        %1607 = vmatpush1.bf16.msra.mxu0 0
        %1608 = vmatprep.subr.bf16.mxu0 0
        %1609 = vmatpush1.bf16.msra.mxu0 0
        %1610 = vmatprep.subr.bf16.mxu0 0
        %1611 = vmatpush1.bf16.msra.mxu0 0
        %1612 = vmatprep.subr.bf16.mxu0 0
        %1613 = vmatpush1.bf16.msra.mxu0 0
        %1614 = vmatprep.subr.bf16.mxu0 0
        %1615 = vmatpush1.bf16.msra.mxu0 0
        %1616 = vmatprep.subr.bf16.mxu0 0
        %1617 = vmatpush1.bf16.msra.mxu0 0
        %1618 = vmatprep.subr.bf16.mxu0 0
        %1619 = vmatpush1.bf16.msra.mxu0 0
        %1620 = vmatprep.subr.bf16.mxu0 0
        %1621 = vmatpush1.bf16.msra.mxu0 0
        %1622 = vmatprep.subr.bf16.mxu0 0
        %1623 = vmatpush1.bf16.msra.mxu0 0
        %1624 = vmatprep.mubr.bf16.mxu0 0
        %1625 = vmatmul.mubr.bf16.gmra.mrb[0].mxu0 %v1590
        %v1626 = vpop.f32.mrb[0].mxu0
        %v1627 = vadd.f32 %v1575, %v1626
        %v1628 = vpop.f32.mrb[0].mxu0
        %v1629 = vpop.f32.mrb[0].mxu0
        %v1630 = vpop.f32.mrb[0].mxu0
        %1631 = vdwg.mxu0
        %v1632 = vadd.f32 %v1137, %v1627
        %v1633 = vld [vmem:[#allocation13] sm:$0x1]
        %v1634 = vld [vmem:[#allocation14] sm:$0x1]
        %v1635 = vsel %vm1182, %v1632, 0.0
        %1636 = vadd.xlane.f32.xlu0 %v1635
        %v1637 = vpop.xlane.xlu0 %1636
        %v1638 = vrcp.pop 32.0
        %v1639 = vmul.f32 %v1637, %v1638
        %v1640 = vsub.f32 %v1632, %v1639
        %v1641 = vmul.f32 %v1640, %v1640
        %v1642 = vsel %vm1182, %v1641, 0.0
        %1643 = vadd.xlane.f32.xlu0 %v1642
        %v1644 = vpop.xlane.xlu0 %1643
        %v1645 = vmul.f32 %v1644, %v1638
        %v1646 = vadd.f32 %v1645, 1e-05
        %v1647 = vrsqrt.pop %v1646
        %v1648 = vmul.f32 %v1640, %v1647
        %v1650 = vlaneseq
        %v1651 = vshrl.u32 %v1650, 7
        %v1652 = vsub.s32 0, %v1651
        %v1653 = vrot.slane %v1633, %v1652
        %v1655 = vmul.f32 %v1648, %v1653
        %v1657 = vlaneseq
        %v1658 = vshrl.u32 %v1657, 7
        %v1659 = vsub.s32 0, %v1658
        %v1660 = vrot.slane %v1634, %v1659
        %v1662 = vadd.f32 %v1655, %v1660
        %v1663 = vld [vmem:[%s29] sm:$0xf]
        %v1664 = vld [vmem:[%s29 + $0x4] sm:$0xf]
        %v1665 = vld [vmem:[%s29 + $0x8] sm:$0xf]
        %v1666 = vld [vmem:[%s29 + $0xc] sm:$0xf]
        %v1667 = vld [vmem:[#allocation16] sm:$0x1]
        %v1668 = vld [vmem:[#allocation17] sm:$0xf]
        %v1669 = vld [vmem:[#allocation17 + $0x4] sm:$0xf]
        %v1670 = vld [vmem:[#allocation17 + $0x8] sm:$0xf]
        %v1671 = vld [vmem:[#allocation17 + $0xc] sm:$0xf]
        %v1672 = vld [vmem:[#allocation19] sm:$0x1]
        %v1673 = vld [vmem:[%s37] sm:$0xf]
        %v1674 = vld [vmem:[%s37 + $0x4] sm:$0xf]
        %v1675 = vld [vmem:[%s37 + $0x8] sm:$0xf]
        %v1676 = vld [vmem:[%s37 + $0xc] sm:$0xf]
        %v1677 = vld [vmem:[%s39] sm:$0x1]
        %v1678 = vld [vmem:[#allocation20] sm:$0xf]
        %v1679 = vld [vmem:[#allocation20 + $0x4] sm:$0xf]
        %v1680 = vld [vmem:[#allocation20 + $0x8] sm:$0xf]
        %v1681 = vld [vmem:[#allocation20 + $0xc] sm:$0xf]
        %v1682 = vld [vmem:[%s43] sm:$0x1]
        %v1683 = vpack.c.bf16 %v1662, %v1662
        %v1685 = vlaneseq
        %v1686 = vshrl.u32 %v1685, 7
        %v1687 = vsub.s32 0, %v1686
        %v1688 = vrot.slane %v1667, %v1687
        %v1694 = vunpack.c.l.b16 %v1663
        %v1695 = vunpack.c.l.b16 %v1664
        %v1696 = vunpack.c.l.b16 %v1665
        %v1697 = vunpack.c.l.b16 %v1666
        %v1698 = vpack.c.b16 %v1695, %v1694
        %v1699 = vpack.c.b16 %v1697, %v1696
        %v1703 = vsel %vm1182, %v1683, 0
        %1705 = vmatprep.subr.bf16.mxu0 0
        %1706 = vmatpush1.bf16.msra.mxu0 %v1698
        %1707 = vmatprep.subr.bf16.mxu0 0
        %1708 = vmatpush1.bf16.msra.mxu0 %v1699
        %1709 = vmatprep.subr.bf16.mxu0 0
        %1710 = vmatpush1.bf16.msra.mxu0 0
        %1711 = vmatprep.subr.bf16.mxu0 0
        %1712 = vmatpush1.bf16.msra.mxu0 0
        %1713 = vmatprep.subr.bf16.mxu0 0
        %1714 = vmatpush1.bf16.msra.mxu0 0
        %1715 = vmatprep.subr.bf16.mxu0 0
        %1716 = vmatpush1.bf16.msra.mxu0 0
        %1717 = vmatprep.subr.bf16.mxu0 0
        %1718 = vmatpush1.bf16.msra.mxu0 0
        %1719 = vmatprep.subr.bf16.mxu0 0
        %1720 = vmatpush1.bf16.msra.mxu0 0
        %1721 = vmatprep.subr.bf16.mxu0 0
        %1722 = vmatpush1.bf16.msra.mxu0 0
        %1723 = vmatprep.subr.bf16.mxu0 0
        %1724 = vmatpush1.bf16.msra.mxu0 0
        %1725 = vmatprep.subr.bf16.mxu0 0
        %1726 = vmatpush1.bf16.msra.mxu0 0
        %1727 = vmatprep.subr.bf16.mxu0 0
        %1728 = vmatpush1.bf16.msra.mxu0 0
        %1729 = vmatprep.subr.bf16.mxu0 0
        %1730 = vmatpush1.bf16.msra.mxu0 0
        %1731 = vmatprep.subr.bf16.mxu0 0
        %1732 = vmatpush1.bf16.msra.mxu0 0
        %1733 = vmatprep.subr.bf16.mxu0 0
        %1734 = vmatpush1.bf16.msra.mxu0 0
        %1735 = vmatprep.subr.bf16.mxu0 0
        %1736 = vmatpush1.bf16.msra.mxu0 0
        %1737 = vmatprep.mubr.bf16.mxu0 0
        %1738 = vmatmul.mubr.bf16.gmra.mrb[0].mxu0 %v1703
        %v1739 = vpop.f32.mrb[0].mxu0
        %v1740 = vadd.f32 %v1688, %v1739
        %v1741 = vpop.f32.mrb[0].mxu0
        %v1742 = vpop.f32.mrb[0].mxu0
        %v1743 = vpop.f32.mrb[0].mxu0
        %1744 = vdwg.mxu0
        %v1745 = vpack.c.bf16 %v1138, %v1138
        %v1747 = vlaneseq
        %v1748 = vshrl.u32 %v1747, 7
        %v1749 = vsub.s32 0, %v1748
        %v1750 = vrot.slane %v1672, %v1749
        %v1756 = vunpack.c.l.b16 %v1668
        %v1757 = vunpack.c.l.b16 %v1669
        %v1758 = vunpack.c.l.b16 %v1670
        %v1759 = vunpack.c.l.b16 %v1671
        %v1760 = vpack.c.b16 %v1757, %v1756
        %v1761 = vpack.c.b16 %v1759, %v1758
        %v1765 = vsel %vm1182, %v1745, 0
        %1767 = vmatprep.subr.bf16.mxu0 0
        %1768 = vmatpush1.bf16.msra.mxu0 %v1760
        %1769 = vmatprep.subr.bf16.mxu0 0
        %1770 = vmatpush1.bf16.msra.mxu0 %v1761
        %1771 = vmatprep.subr.bf16.mxu0 0
        %1772 = vmatpush1.bf16.msra.mxu0 0
        %1773 = vmatprep.subr.bf16.mxu0 0
        %1774 = vmatpush1.bf16.msra.mxu0 0
        %1775 = vmatprep.subr.bf16.mxu0 0
        %1776 = vmatpush1.bf16.msra.mxu0 0
        %1777 = vmatprep.subr.bf16.mxu0 0
        %1778 = vmatpush1.bf16.msra.mxu0 0
        %1779 = vmatprep.subr.bf16.mxu0 0
        %1780 = vmatpush1.bf16.msra.mxu0 0
        %1781 = vmatprep.subr.bf16.mxu0 0
        %1782 = vmatpush1.bf16.msra.mxu0 0
        %1783 = vmatprep.subr.bf16.mxu0 0
        %1784 = vmatpush1.bf16.msra.mxu0 0
        %1785 = vmatprep.subr.bf16.mxu0 0
        %1786 = vmatpush1.bf16.msra.mxu0 0
        %1787 = vmatprep.subr.bf16.mxu0 0
        %1788 = vmatpush1.bf16.msra.mxu0 0
        %1789 = vmatprep.subr.bf16.mxu0 0
        %1790 = vmatpush1.bf16.msra.mxu0 0
        %1791 = vmatprep.subr.bf16.mxu0 0
        %1792 = vmatpush1.bf16.msra.mxu0 0
        %1793 = vmatprep.subr.bf16.mxu0 0
        %1794 = vmatpush1.bf16.msra.mxu0 0
        %1795 = vmatprep.subr.bf16.mxu0 0
        %1796 = vmatpush1.bf16.msra.mxu0 0
        %1797 = vmatprep.subr.bf16.mxu0 0
        %1798 = vmatpush1.bf16.msra.mxu0 0
        %1799 = vmatprep.mubr.bf16.mxu0 0
        %1800 = vmatmul.mubr.bf16.gmra.mrb[0].mxu0 %v1765
        %v1801 = vpop.f32.mrb[0].mxu0
        %v1802 = vadd.f32 %v1750, %v1801
        %v1803 = vpop.f32.mrb[0].mxu0
        %v1804 = vpop.f32.mrb[0].mxu0
        %v1805 = vpop.f32.mrb[0].mxu0
        %1806 = vdwg.mxu0
        %v1807 = vpack.c.bf16 %v1139, %v1139
        %v1809 = vlaneseq
        %v1810 = vshrl.u32 %v1809, 7
        %v1811 = vsub.s32 0, %v1810
        %v1812 = vrot.slane %v1677, %v1811
        %v1818 = vunpack.c.l.b16 %v1673
        %v1819 = vunpack.c.l.b16 %v1674
        %v1820 = vunpack.c.l.b16 %v1675
        %v1821 = vunpack.c.l.b16 %v1676
        %v1822 = vpack.c.b16 %v1819, %v1818
        %v1823 = vpack.c.b16 %v1821, %v1820
        %v1827 = vsel %vm1182, %v1807, 0
        %1829 = vmatprep.subr.bf16.mxu0 0
        %1830 = vmatpush1.bf16.msra.mxu0 %v1822
        %1831 = vmatprep.subr.bf16.mxu0 0
        %1832 = vmatpush1.bf16.msra.mxu0 %v1823
        %1833 = vmatprep.subr.bf16.mxu0 0
        %1834 = vmatpush1.bf16.msra.mxu0 0
        %1835 = vmatprep.subr.bf16.mxu0 0
        %1836 = vmatpush1.bf16.msra.mxu0 0
        %1837 = vmatprep.subr.bf16.mxu0 0
        %1838 = vmatpush1.bf16.msra.mxu0 0
        %1839 = vmatprep.subr.bf16.mxu0 0
        %1840 = vmatpush1.bf16.msra.mxu0 0
        %1841 = vmatprep.subr.bf16.mxu0 0
        %1842 = vmatpush1.bf16.msra.mxu0 0
        %1843 = vmatprep.subr.bf16.mxu0 0
        %1844 = vmatpush1.bf16.msra.mxu0 0
        %1845 = vmatprep.subr.bf16.mxu0 0
        %1846 = vmatpush1.bf16.msra.mxu0 0
        %1847 = vmatprep.subr.bf16.mxu0 0
        %1848 = vmatpush1.bf16.msra.mxu0 0
        %1849 = vmatprep.subr.bf16.mxu0 0
        %1850 = vmatpush1.bf16.msra.mxu0 0
        %1851 = vmatprep.subr.bf16.mxu0 0
        %1852 = vmatpush1.bf16.msra.mxu0 0
        %1853 = vmatprep.subr.bf16.mxu0 0
        %1854 = vmatpush1.bf16.msra.mxu0 0
        %1855 = vmatprep.subr.bf16.mxu0 0
        %1856 = vmatpush1.bf16.msra.mxu0 0
        %1857 = vmatprep.subr.bf16.mxu0 0
        %1858 = vmatpush1.bf16.msra.mxu0 0
        %1859 = vmatprep.subr.bf16.mxu0 0
        %1860 = vmatpush1.bf16.msra.mxu0 0
        %1861 = vmatprep.mubr.bf16.mxu0 0
        %1862 = vmatmul.mubr.bf16.gmra.mrb[0].mxu0 %v1827
        %v1863 = vpop.f32.mrb[0].mxu0
        %v1864 = vadd.f32 %v1812, %v1863
        %v1865 = vpop.f32.mrb[0].mxu0
        %v1866 = vpop.f32.mrb[0].mxu0
        %v1867 = vpop.f32.mrb[0].mxu0
        %1868 = vdwg.mxu0
        %v1869 = vpack.c.bf16 %v1740, %v1740
        %1871 = vrot.lane.b32.xlu0 %v1869, 112
        %v1872 = vpop.permute.xlu0 %1871
        %v1873 = vpack.c.bf16 %v1802, %v1802
        %1875 = vrot.lane.b32.xlu0 %v1873, 112
        %v1876 = vpop.permute.xlu0 %1875
        %v1877 = vpack.c.bf16 %v1864, %v1864
        %1879 = vrot.lane.b32.xlu0 %v1877, 112
        %v1880 = vpop.permute.xlu0 %1879
        %v1882 = vsel %vm1354, %v1869, 0
        %v1885 = vsel %vm1354, %v1873, 0
        %1887 = vmatprep.subr.bf16.mxu0 0
        %1888 = vmatpush1.bf16.xpose.msra.mxu0 %v1885
        %1889 = vmatprep.subr.bf16.mxu0 0
        %1890 = vmatpush1.bf16.xpose.msra.mxu0 0
        %1891 = vmatprep.subr.bf16.mxu0 0
        %1892 = vmatpush1.bf16.xpose.msra.mxu0 0
        %1893 = vmatprep.subr.bf16.mxu0 0
        %1894 = vmatpush1.bf16.xpose.msra.mxu0 0
        %1895 = vmatprep.subr.bf16.mxu0 0
        %1896 = vmatpush1.bf16.xpose.msra.mxu0 0
        %1897 = vmatprep.subr.bf16.mxu0 0
        %1898 = vmatpush1.bf16.xpose.msra.mxu0 0
        %1899 = vmatprep.subr.bf16.mxu0 0
        %1900 = vmatpush1.bf16.xpose.msra.mxu0 0
        %1901 = vmatprep.subr.bf16.mxu0 0
        %1902 = vmatpush1.bf16.xpose.msra.mxu0 0
        %1903 = vmatprep.subr.bf16.mxu0 0
        %1904 = vmatpush1.bf16.xpose.msra.mxu0 0
        %1905 = vmatprep.subr.bf16.mxu0 0
        %1906 = vmatpush1.bf16.xpose.msra.mxu0 0
        %1907 = vmatprep.subr.bf16.mxu0 0
        %1908 = vmatpush1.bf16.xpose.msra.mxu0 0
        %1909 = vmatprep.subr.bf16.mxu0 0
        %1910 = vmatpush1.bf16.xpose.msra.mxu0 0
        %1911 = vmatprep.subr.bf16.mxu0 0
        %1912 = vmatpush1.bf16.xpose.msra.mxu0 0
        %1913 = vmatprep.subr.bf16.mxu0 0
        %1914 = vmatpush1.bf16.xpose.msra.mxu0 0
        %1915 = vmatprep.subr.bf16.mxu0 0
        %1916 = vmatpush1.bf16.xpose.msra.mxu0 0
        %1917 = vmatprep.subr.bf16.mxu0 0
        %1918 = vmatpush1.bf16.xpose.msra.mxu0 0
        %1919 = vmatprep.mubr.bf16.mxu0 0
        %1920 = vmatmul.mubr.bf16.gmra.mrb[0].mxu0 %v1882
        %v1921 = vpop.f32.mrb[0].mxu0
        %v1922 = vadd.f32 0.0, %v1921
        %v1923 = vpop.f32.mrb[0].mxu0
        %v1924 = vpop.f32.mrb[0].mxu0
        %v1925 = vpop.f32.mrb[0].mxu0
        %1926 = vdwg.mxu0
        %v1928 = vsel %vm1354, %v1872, 0
        %v1931 = vsel %vm1354, %v1876, 0
        %1933 = vmatprep.subr.bf16.mxu0 0
        %1934 = vmatpush1.bf16.xpose.msra.mxu0 %v1931
        %1935 = vmatprep.subr.bf16.mxu0 0
        %1936 = vmatpush1.bf16.xpose.msra.mxu0 0
        %1937 = vmatprep.subr.bf16.mxu0 0
        %1938 = vmatpush1.bf16.xpose.msra.mxu0 0
        %1939 = vmatprep.subr.bf16.mxu0 0
        %1940 = vmatpush1.bf16.xpose.msra.mxu0 0
        %1941 = vmatprep.subr.bf16.mxu0 0
        %1942 = vmatpush1.bf16.xpose.msra.mxu0 0
        %1943 = vmatprep.subr.bf16.mxu0 0
        %1944 = vmatpush1.bf16.xpose.msra.mxu0 0
        %1945 = vmatprep.subr.bf16.mxu0 0
        %1946 = vmatpush1.bf16.xpose.msra.mxu0 0
        %1947 = vmatprep.subr.bf16.mxu0 0
        %1948 = vmatpush1.bf16.xpose.msra.mxu0 0
        %1949 = vmatprep.subr.bf16.mxu0 0
        %1950 = vmatpush1.bf16.xpose.msra.mxu0 0
        %1951 = vmatprep.subr.bf16.mxu0 0
        %1952 = vmatpush1.bf16.xpose.msra.mxu0 0
        %1953 = vmatprep.subr.bf16.mxu0 0
        %1954 = vmatpush1.bf16.xpose.msra.mxu0 0
        %1955 = vmatprep.subr.bf16.mxu0 0
        %1956 = vmatpush1.bf16.xpose.msra.mxu0 0
        %1957 = vmatprep.subr.bf16.mxu0 0
        %1958 = vmatpush1.bf16.xpose.msra.mxu0 0
        %1959 = vmatprep.subr.bf16.mxu0 0
        %1960 = vmatpush1.bf16.xpose.msra.mxu0 0
        %1961 = vmatprep.subr.bf16.mxu0 0
        %1962 = vmatpush1.bf16.xpose.msra.mxu0 0
        %1963 = vmatprep.subr.bf16.mxu0 0
        %1964 = vmatpush1.bf16.xpose.msra.mxu0 0
        %1965 = vmatprep.mubr.bf16.mxu0 0
        %1966 = vmatmul.mubr.bf16.gmra.mrb[0].mxu0 %v1928
        %v1967 = vpop.f32.mrb[0].mxu0
        %v1968 = vadd.f32 0.0, %v1967
        %v1969 = vpop.f32.mrb[0].mxu0
        %v1970 = vpop.f32.mrb[0].mxu0
        %v1971 = vpop.f32.mrb[0].mxu0
        %1972 = vdwg.mxu0
        %v1973 = vsel %vm1447, %v1922, -inf
        %1974 = vmax.xlane.f32.xlu0 %v1973
        %v1975 = vpop.xlane.xlu0 %1974
        %v1976 = vsel %vm1447, %v1968, -inf
        %1977 = vmax.xlane.f32.xlu0 %v1976
        %v1978 = vpop.xlane.xlu0 %1977
        %v1979 = vsub.f32 %v1922, %v1975
        %v1980 = vsub.f32 %v1968, %v1978
        %v1981 = vmul.f32 %v1979, 1.442695
        %v1982 = vpow.pop %v1981
        %v1983 = vmul.f32 %v1980, 1.442695
        %v1984 = vpow.pop %v1983
        %v1985 = vsel %vm1447, %v1982, 0.0
        %1986 = vadd.xlane.f32.xlu0 %v1985
        %v1987 = vpop.xlane.xlu0 %1986
        %v1988 = vsel %vm1447, %v1984, 0.0
        %1989 = vadd.xlane.f32.xlu0 %v1988
        %v1990 = vpop.xlane.xlu0 %1989
        %v1991 = vrcp.pop %v1987
        %v1992 = vrcp.pop %v1990
        %v1993 = vmul.f32 %v1982, %v1991
        %v1994 = vmul.f32 %v1984, %v1992
        %v1995 = vpack.c.bf16 %v1993, %v1993
        %v1996 = vpack.c.bf16 %v1994, %v1994
        %v1998 = vsel %vm1447, %v1995, 0
        %v2001 = vsel %vm1475, %v1877, 0
        %2003 = vmatprep.subr.bf16.mxu0 0
        %2004 = vmatpush1.bf16.msra.mxu0 %v2001
        %2005 = vmatprep.subr.bf16.mxu0 0
        %2006 = vmatpush1.bf16.msra.mxu0 0
        %2007 = vmatprep.subr.bf16.mxu0 0
        %2008 = vmatpush1.bf16.msra.mxu0 0
        %2009 = vmatprep.subr.bf16.mxu0 0
        %2010 = vmatpush1.bf16.msra.mxu0 0
        %2011 = vmatprep.subr.bf16.mxu0 0
        %2012 = vmatpush1.bf16.msra.mxu0 0
        %2013 = vmatprep.subr.bf16.mxu0 0
        %2014 = vmatpush1.bf16.msra.mxu0 0
        %2015 = vmatprep.subr.bf16.mxu0 0
        %2016 = vmatpush1.bf16.msra.mxu0 0
        %2017 = vmatprep.subr.bf16.mxu0 0
        %2018 = vmatpush1.bf16.msra.mxu0 0
        %2019 = vmatprep.subr.bf16.mxu0 0
        %2020 = vmatpush1.bf16.msra.mxu0 0
        %2021 = vmatprep.subr.bf16.mxu0 0
        %2022 = vmatpush1.bf16.msra.mxu0 0
        %2023 = vmatprep.subr.bf16.mxu0 0
        %2024 = vmatpush1.bf16.msra.mxu0 0
        %2025 = vmatprep.subr.bf16.mxu0 0
        %2026 = vmatpush1.bf16.msra.mxu0 0
        %2027 = vmatprep.subr.bf16.mxu0 0
        %2028 = vmatpush1.bf16.msra.mxu0 0
        %2029 = vmatprep.subr.bf16.mxu0 0
        %2030 = vmatpush1.bf16.msra.mxu0 0
        %2031 = vmatprep.subr.bf16.mxu0 0
        %2032 = vmatpush1.bf16.msra.mxu0 0
        %2033 = vmatprep.subr.bf16.mxu0 0
        %2034 = vmatpush1.bf16.msra.mxu0 0
        %2035 = vmatprep.mubr.bf16.mxu0 0
        %2036 = vmatmul.mubr.bf16.gmra.mrb[0].mxu0 %v1998
        %v2037 = vpop.f32.mrb[0].mxu0
        %v2038 = vadd.f32 0.0, %v2037
        %v2039 = vpop.f32.mrb[0].mxu0
        %v2040 = vpop.f32.mrb[0].mxu0
        %v2041 = vpop.f32.mrb[0].mxu0
        %2042 = vdwg.mxu0
        %v2044 = vsel %vm1447, %v1996, 0
        %v2047 = vsel %vm1475, %v1880, 0
        %2049 = vmatprep.subr.bf16.mxu0 0
        %2050 = vmatpush1.bf16.msra.mxu0 %v2047
        %2051 = vmatprep.subr.bf16.mxu0 0
        %2052 = vmatpush1.bf16.msra.mxu0 0
        %2053 = vmatprep.subr.bf16.mxu0 0
        %2054 = vmatpush1.bf16.msra.mxu0 0
        %2055 = vmatprep.subr.bf16.mxu0 0
        %2056 = vmatpush1.bf16.msra.mxu0 0
        %2057 = vmatprep.subr.bf16.mxu0 0
        %2058 = vmatpush1.bf16.msra.mxu0 0
        %2059 = vmatprep.subr.bf16.mxu0 0
        %2060 = vmatpush1.bf16.msra.mxu0 0
        %2061 = vmatprep.subr.bf16.mxu0 0
        %2062 = vmatpush1.bf16.msra.mxu0 0
        %2063 = vmatprep.subr.bf16.mxu0 0
        %2064 = vmatpush1.bf16.msra.mxu0 0
        %2065 = vmatprep.subr.bf16.mxu0 0
        %2066 = vmatpush1.bf16.msra.mxu0 0
        %2067 = vmatprep.subr.bf16.mxu0 0
        %2068 = vmatpush1.bf16.msra.mxu0 0
        %2069 = vmatprep.subr.bf16.mxu0 0
        %2070 = vmatpush1.bf16.msra.mxu0 0
        %2071 = vmatprep.subr.bf16.mxu0 0
        %2072 = vmatpush1.bf16.msra.mxu0 0
        %2073 = vmatprep.subr.bf16.mxu0 0
        %2074 = vmatpush1.bf16.msra.mxu0 0
        %2075 = vmatprep.subr.bf16.mxu0 0
        %2076 = vmatpush1.bf16.msra.mxu0 0
        %2077 = vmatprep.subr.bf16.mxu0 0
        %2078 = vmatpush1.bf16.msra.mxu0 0
        %2079 = vmatprep.subr.bf16.mxu0 0
        %2080 = vmatpush1.bf16.msra.mxu0 0
        %2081 = vmatprep.mubr.bf16.mxu0 0
        %2082 = vmatmul.mubr.bf16.gmra.mrb[0].mxu0 %v2044
        %v2083 = vpop.f32.mrb[0].mxu0
        %v2084 = vadd.f32 0.0, %v2083
        %v2085 = vpop.f32.mrb[0].mxu0
        %v2086 = vpop.f32.mrb[0].mxu0
        %v2087 = vpop.f32.mrb[0].mxu0
        %2088 = vdwg.mxu0
        %2090 = vrot.lane.b32.xlu0 %v2084, 16
        %v2091 = vpop.permute.xlu0 %2090
        %v2093 = vsel %vm1354, %v2038, %v2091
        %v2094 = vpack.c.bf16 %v2093, %v2093
        %v2096 = vlaneseq
        %v2097 = vshrl.u32 %v2096, 7
        %v2098 = vsub.s32 0, %v2097
        %v2099 = vrot.slane %v1682, %v2098
        %v2105 = vunpack.c.l.b16 %v1678
        %v2106 = vunpack.c.l.b16 %v1679
        %v2107 = vunpack.c.l.b16 %v1680
        %v2108 = vunpack.c.l.b16 %v1681
        %v2109 = vpack.c.b16 %v2106, %v2105
        %v2110 = vpack.c.b16 %v2108, %v2107
        %v2114 = vsel %vm1182, %v2094, 0
        %2116 = vmatprep.subr.bf16.mxu0 0
        %2117 = vmatpush1.bf16.msra.mxu0 %v2109
        %2118 = vmatprep.subr.bf16.mxu0 0
        %2119 = vmatpush1.bf16.msra.mxu0 %v2110
        %2120 = vmatprep.subr.bf16.mxu0 0
        %2121 = vmatpush1.bf16.msra.mxu0 0
        %2122 = vmatprep.subr.bf16.mxu0 0
        %2123 = vmatpush1.bf16.msra.mxu0 0
        %2124 = vmatprep.subr.bf16.mxu0 0
        %2125 = vmatpush1.bf16.msra.mxu0 0
        %2126 = vmatprep.subr.bf16.mxu0 0
        %2127 = vmatpush1.bf16.msra.mxu0 0
        %2128 = vmatprep.subr.bf16.mxu0 0
        %2129 = vmatpush1.bf16.msra.mxu0 0
        %2130 = vmatprep.subr.bf16.mxu0 0
        %2131 = vmatpush1.bf16.msra.mxu0 0
        %2132 = vmatprep.subr.bf16.mxu0 0
        %2133 = vmatpush1.bf16.msra.mxu0 0
        %2134 = vmatprep.subr.bf16.mxu0 0
        %2135 = vmatpush1.bf16.msra.mxu0 0
        %2136 = vmatprep.subr.bf16.mxu0 0
        %2137 = vmatpush1.bf16.msra.mxu0 0
        %2138 = vmatprep.subr.bf16.mxu0 0
        %2139 = vmatpush1.bf16.msra.mxu0 0
        %2140 = vmatprep.subr.bf16.mxu0 0
        %2141 = vmatpush1.bf16.msra.mxu0 0
        %2142 = vmatprep.subr.bf16.mxu0 0
        %2143 = vmatpush1.bf16.msra.mxu0 0
        %2144 = vmatprep.subr.bf16.mxu0 0
        %2145 = vmatpush1.bf16.msra.mxu0 0
        %2146 = vmatprep.subr.bf16.mxu0 0
        %2147 = vmatpush1.bf16.msra.mxu0 0
        %2148 = vmatprep.mubr.bf16.mxu0 0
        %2149 = vmatmul.mubr.bf16.gmra.mrb[0].mxu0 %v2114
        %v2150 = vpop.f32.mrb[0].mxu0
        %v2151 = vadd.f32 %v2099, %v2150
        %v2152 = vpop.f32.mrb[0].mxu0
        %v2153 = vpop.f32.mrb[0].mxu0
        %v2154 = vpop.f32.mrb[0].mxu0
        %2155 = vdwg.mxu0
        %v2156 = vadd.f32 %v1662, %v2151
        %v2157 = vld [vmem:[%s45] sm:$0x1]
        %v2158 = vld [vmem:[%s47] sm:$0x1]
        %v2159 = vsel %vm1182, %v2156, 0.0
        %2160 = vadd.xlane.f32.xlu0 %v2159
        %v2161 = vpop.xlane.xlu0 %2160
        %v2162 = vmul.f32 %v2161, %v1638
        %v2163 = vsub.f32 %v2156, %v2162
        %v2164 = vmul.f32 %v2163, %v2163
        %v2165 = vsel %vm1182, %v2164, 0.0
        %2166 = vadd.xlane.f32.xlu0 %v2165
        %v2167 = vpop.xlane.xlu0 %2166
        %v2168 = vmul.f32 %v2167, %v1638
        %v2169 = vadd.f32 %v2168, 1e-05
        %v2170 = vrsqrt.pop %v2169
        %v2171 = vmul.f32 %v2163, %v2170
        %v2173 = vlaneseq
        %v2174 = vshrl.u32 %v2173, 7
        %v2175 = vsub.s32 0, %v2174
        %v2176 = vrot.slane %v2157, %v2175
        %v2178 = vmul.f32 %v2171, %v2176
        %v2180 = vlaneseq
        %v2181 = vshrl.u32 %v2180, 7
        %v2182 = vsub.s32 0, %v2181
        %v2183 = vrot.slane %v2158, %v2182
        %v2185 = vadd.f32 %v2178, %v2183
        %v2186 = vpack.c.bf16 %v2185, %v2185
        %v2187 = vld [vmem:[%s49] sm:$0xf]
        %v2188 = vld [vmem:[%s49 + $0x4] sm:$0xf]
        %v2189 = vld [vmem:[%s49 + $0x8] sm:$0xf]
        %v2190 = vld [vmem:[%s49 + $0xc] sm:$0xf]
        %v2191 = vld [vmem:[%s51] sm:$0x1]
        %v2193 = vlaneseq
        %v2194 = vshrl.u32 %v2193, 7
        %v2195 = vsub.s32 0, %v2194
        %v2196 = vrot.slane %v2191, %v2195
        %v2202 = vunpack.c.l.b16 %v2187
        %v2203 = vunpack.c.l.b16 %v2188
        %v2204 = vunpack.c.l.b16 %v2189
        %v2205 = vunpack.c.l.b16 %v2190
        %v2206 = vpack.c.b16 %v2203, %v2202
        %v2207 = vpack.c.b16 %v2205, %v2204
        %v2211 = vsel %vm1182, %v2186, 0
        %2213 = vmatprep.subr.bf16.mxu0 0
        %2214 = vmatpush1.bf16.msra.mxu0 %v2206
        %2215 = vmatprep.subr.bf16.mxu0 0
        %2216 = vmatpush1.bf16.msra.mxu0 %v2207
        %2217 = vmatprep.subr.bf16.mxu0 0
        %2218 = vmatpush1.bf16.msra.mxu0 0
        %2219 = vmatprep.subr.bf16.mxu0 0
        %2220 = vmatpush1.bf16.msra.mxu0 0
        %2221 = vmatprep.subr.bf16.mxu0 0
        %2222 = vmatpush1.bf16.msra.mxu0 0
        %2223 = vmatprep.subr.bf16.mxu0 0
        %2224 = vmatpush1.bf16.msra.mxu0 0
        %2225 = vmatprep.subr.bf16.mxu0 0
        %2226 = vmatpush1.bf16.msra.mxu0 0
        %2227 = vmatprep.subr.bf16.mxu0 0
        %2228 = vmatpush1.bf16.msra.mxu0 0
        %2229 = vmatprep.subr.bf16.mxu0 0
        %2230 = vmatpush1.bf16.msra.mxu0 0
        %2231 = vmatprep.subr.bf16.mxu0 0
        %2232 = vmatpush1.bf16.msra.mxu0 0
        %2233 = vmatprep.subr.bf16.mxu0 0
        %2234 = vmatpush1.bf16.msra.mxu0 0
        %2235 = vmatprep.subr.bf16.mxu0 0
        %2236 = vmatpush1.bf16.msra.mxu0 0
        %2237 = vmatprep.subr.bf16.mxu0 0
        %2238 = vmatpush1.bf16.msra.mxu0 0
        %2239 = vmatprep.subr.bf16.mxu0 0
        %2240 = vmatpush1.bf16.msra.mxu0 0
        %2241 = vmatprep.subr.bf16.mxu0 0
        %2242 = vmatpush1.bf16.msra.mxu0 0
        %2243 = vmatprep.subr.bf16.mxu0 0
        %2244 = vmatpush1.bf16.msra.mxu0 0
        %2245 = vmatprep.mubr.bf16.mxu0 0
        %2246 = vmatmul.mubr.bf16.gmra.mrb[0].mxu0 %v2211
        %v2247 = vpop.f32.mrb[0].mxu0
        %v2248 = vadd.f32 %v2196, %v2247
        %v2249 = vpop.f32.mrb[0].mxu0
        %v2250 = vpop.f32.mrb[0].mxu0
        %v2251 = vpop.f32.mrb[0].mxu0
        %2252 = vdwg.mxu0
        %v2253 = vmax.f32 %v2248, 0.0
        %v2254 = vpack.c.bf16 %v2253, %v2253
        %v2255 = vld [vmem:[%s53] sm:$0xf]
        %v2256 = vld [vmem:[%s53 + $0x4] sm:$0xf]
        %v2257 = vld [vmem:[%s53 + $0x8] sm:$0xf]
        %v2258 = vld [vmem:[%s53 + $0xc] sm:$0xf]
        %v2259 = vld [vmem:[%s53 + $0x10] sm:$0xf]
        %v2260 = vld [vmem:[%s53 + $0x14] sm:$0xf]
        %v2261 = vld [vmem:[%s53 + $0x18] sm:$0xf]
        %v2262 = vld [vmem:[%s53 + $0x1c] sm:$0xf]
        %v2263 = vld [vmem:[%s53 + $0x20] sm:$0xf]
        %v2264 = vld [vmem:[%s53 + $0x24] sm:$0xf]
        %v2265 = vld [vmem:[%s53 + $0x28] sm:$0xf]
        %v2266 = vld [vmem:[%s53 + $0x2c] sm:$0xf]
        %v2267 = vld [vmem:[%s53 + $0x30] sm:$0xf]
        %v2268 = vld [vmem:[%s53 + $0x34] sm:$0xf]
        %v2269 = vld [vmem:[%s53 + $0x38] sm:$0xf]
        %v2270 = vld [vmem:[%s53 + $0x3c] sm:$0xf]
        %v2271 = vld [vmem:[%s55] sm:$0x1]
        %v2273 = vlaneseq
        %v2274 = vshrl.u32 %v2273, 7
        %v2275 = vsub.s32 0, %v2274
        %v2276 = vrot.slane %v2271, %v2275
        %v2294 = vunpack.c.l.b16 %v2255
        %v2295 = vunpack.c.l.b16 %v2256
        %v2296 = vunpack.c.l.b16 %v2257
        %v2297 = vunpack.c.l.b16 %v2258
        %v2298 = vunpack.c.l.b16 %v2259
        %v2299 = vunpack.c.l.b16 %v2260
        %v2300 = vunpack.c.l.b16 %v2261
        %v2301 = vunpack.c.l.b16 %v2262
        %v2302 = vunpack.c.l.b16 %v2263
        %v2303 = vunpack.c.l.b16 %v2264
        %v2304 = vunpack.c.l.b16 %v2265
        %v2305 = vunpack.c.l.b16 %v2266
        %v2306 = vunpack.c.l.b16 %v2267
        %v2307 = vunpack.c.l.b16 %v2268
        %v2308 = vunpack.c.l.b16 %v2269
        %v2309 = vunpack.c.l.b16 %v2270
        %v2310 = vpack.c.b16 %v2295, %v2294
        %v2311 = vpack.c.b16 %v2297, %v2296
        %v2312 = vpack.c.b16 %v2299, %v2298
        %v2313 = vpack.c.b16 %v2301, %v2300
        %v2314 = vpack.c.b16 %v2303, %v2302
        %v2315 = vpack.c.b16 %v2305, %v2304
        %v2316 = vpack.c.b16 %v2307, %v2306
        %v2317 = vpack.c.b16 %v2309, %v2308
        %2326 = vmatprep.subr.bf16.mxu0 0
        %2327 = vmatpush1.bf16.msra.mxu0 %v2310
        %2328 = vmatprep.subr.bf16.mxu0 0
        %2329 = vmatpush1.bf16.msra.mxu0 %v2311
        %2330 = vmatprep.subr.bf16.mxu0 0
        %2331 = vmatpush1.bf16.msra.mxu0 %v2312
        %2332 = vmatprep.subr.bf16.mxu0 0
        %2333 = vmatpush1.bf16.msra.mxu0 %v2313
        %2334 = vmatprep.subr.bf16.mxu0 0
        %2335 = vmatpush1.bf16.msra.mxu0 %v2314
        %2336 = vmatprep.subr.bf16.mxu0 0
        %2337 = vmatpush1.bf16.msra.mxu0 %v2315
        %2338 = vmatprep.subr.bf16.mxu0 0
        %2339 = vmatpush1.bf16.msra.mxu0 %v2316
        %2340 = vmatprep.subr.bf16.mxu0 0
        %2341 = vmatpush1.bf16.msra.mxu0 %v2317
        %2342 = vmatprep.subr.bf16.mxu0 0
        %2343 = vmatpush1.bf16.msra.mxu0 0
        %2344 = vmatprep.subr.bf16.mxu0 0
        %2345 = vmatpush1.bf16.msra.mxu0 0
        %2346 = vmatprep.subr.bf16.mxu0 0
        %2347 = vmatpush1.bf16.msra.mxu0 0
        %2348 = vmatprep.subr.bf16.mxu0 0
        %2349 = vmatpush1.bf16.msra.mxu0 0
        %2350 = vmatprep.subr.bf16.mxu0 0
        %2351 = vmatpush1.bf16.msra.mxu0 0
        %2352 = vmatprep.subr.bf16.mxu0 0
        %2353 = vmatpush1.bf16.msra.mxu0 0
        %2354 = vmatprep.subr.bf16.mxu0 0
        %2355 = vmatpush1.bf16.msra.mxu0 0
        %2356 = vmatprep.subr.bf16.mxu0 0
        %2357 = vmatpush1.bf16.msra.mxu0 0
        %2358 = vmatprep.mubr.bf16.mxu0 0
        %2359 = vmatmul.mubr.bf16.gmra.mrb[0].mxu0 %v2254
        %v2360 = vpop.f32.mrb[0].mxu0
        %v2361 = vadd.f32 %v2276, %v2360
        %v2362 = vpop.f32.mrb[0].mxu0
        %v2363 = vpop.f32.mrb[0].mxu0
        %v2364 = vpop.f32.mrb[0].mxu0
        %2365 = vdwg.mxu0
        %v2366 = vadd.f32 %v2185, %v2361
        %v2367 = vld [vmem:[%s57] sm:$0x1]
        %v2368 = vld [vmem:[%s59] sm:$0x1]
        %v2369 = vsel %vm1182, %v2366, 0.0
        %2370 = vadd.xlane.f32.xlu0 %v2369
        %v2371 = vpop.xlane.xlu0 %2370
        %v2372 = vmul.f32 %v2371, %v1638
        %v2373 = vsub.f32 %v2366, %v2372
        %v2374 = vmul.f32 %v2373, %v2373
        %v2375 = vsel %vm1182, %v2374, 0.0
        %2376 = vadd.xlane.f32.xlu0 %v2375
        %v2377 = vpop.xlane.xlu0 %2376
        %v2378 = vmul.f32 %v2377, %v1638
        %v2379 = vadd.f32 %v2378, 1e-05
        %v2380 = vrsqrt.pop %v2379
        %v2381 = vmul.f32 %v2373, %v2380
        %v2383 = vlaneseq
        %v2384 = vshrl.u32 %v2383, 7
        %v2385 = vsub.s32 0, %v2384
        %v2386 = vrot.slane %v2367, %v2385
        %v2388 = vmul.f32 %v2381, %v2386
        %v2390 = vlaneseq
        %v2391 = vshrl.u32 %v2390, 7
        %v2392 = vsub.s32 0, %v2391
        %v2393 = vrot.slane %v2368, %v2392
        %v2395 = vadd.f32 %v2388, %v2393
        %2396 = vst.msk [vmem:[%s1119] sm:$0xff] %vm1182, %v2395
        %s2397 = sand.u32 %s740, 1
        %s2398 = scalar_lea.sflag [#allocation4], %s2397
        %s2399 = sand.u32 %s740, 1
        %s2400 = smul.addr %s2399, 8
        %s2401 = scalar_lea.vmem [#allocation22], %s2400
        // Predicated region
        $region189: #{decoder_layer.1} parent=139 // pred_check
          %p2402 = pneg %p750
        $region190: #{decoder_layer.1} parent=139 // pred_check_branch
          %2404 = sbr.rel (%p2402) target = $region192
        $region191: #{decoder_layer.1} parent=139 // pred_region
          %s2406 = ssub.s32 128, 128
          %2407 = vsyncadd %s2398, %s2406
          %s2408 = smul.addr %s82, 128
          %s2409 = scalar_lea.hbm %s61, %s2408
          %s2411 = sshll.u32 %s2401, 4
          %s2412 = int_to_ptr.vmem [resolvable:$true] %s2411
          %2414 = dma.vmem_to_hbm [thread:$0]  %s2412, 128, %s2409, %s2398
        $region192: #{decoder_layer.1} parent=139 // pred_fallthru
          _
      $region140: #{decoder_layer.1} parent=5 // pred_fallthru
        _
      %p2415 = scmp.le.s32.totalorder 2, %s77
      // Predicated region
      $region193: #{decoder_layer.1} parent=5 // pred_check
        %p2416 = pneg %p2415
      $region194: #{decoder_layer.1} parent=5 // pred_check_branch
        %2418 = sbr.rel (%p2416) target = $region196
      $region195: #{decoder_layer.1} parent=5 // pred_region
        %s2419 = ssub.s32 %s77, 2
        // Predicated region
        $region197: #{decoder_layer.1} parent=195 // pred_check
          %p2420 = pneg %p756
        $region198: #{decoder_layer.1} parent=195 // pred_check_branch
          %2422 = sbr.rel (%p2420) target = $region200
        $region199: #{decoder_layer.1} parent=195 // pred_region
          %s2423 = sand.u32 %s741, 1
          %s2424 = scalar_lea.sflag [#allocation4], %s2423
          %s2425 = sand.u32 %s741, 1
          %s2426 = smul.addr %s2425, 8
          %s2427 = scalar_lea.vmem [#allocation22], %s2426
          %2428 = dma.done %s2424, 128
        $region200: #{decoder_layer.1} parent=195 // pred_fallthru
          _
      $region196: #{decoder_layer.1} parent=5 // pred_fallthru
        _
    $region6: #{decoder_layer.1} parent=1 // loop_footer
      %s81 = sadd.s32 1, %s77
    $region7: #{decoder_layer.1} parent=1 // loop_footer_branch
      %76 = sbr.rel target = $region3
    $region8: #{decoder_layer.1} parent=1 // loop_exit
      _
    %2429 = vsyncpa [#allocation3], 1
    %s2430 = scalar_lea.sflag [#allocation3], 1
    %2431 = vsyncpa %s2430, 1
    %2432 = vsyncpa [#allocation6], 1
    %2433 = vsyncpa [#allocation9], 1
    %2434 = vsyncpa [#allocation12], 1
    %2435 = vsyncpa [#allocation15], 1
    %2436 = vsyncpa [#allocation18], 1
    %2437 = vsyncpa [#allocation21], 1
    %2438 = vsyncpa [#allocation4], 1
    %s2439 = scalar_lea.sflag [#allocation4], 1
    %2440 = vsyncpa %s2439, 1

</llo_original>
